<compile_context>
chip_gen: v5e
topology: v5e:2x2
jax: 0.10.0
libtpu: 0.0.40
codegen_flags: <defaults>
</compile_context>

<pallas_src>
import jax
import jax.numpy as jnp
from jax.experimental import pallas as pl
from jax.experimental.pallas import tpu as pltpu


def spoofnet_head_kernel(x_ref, w_ref, b_ref, fcw_ref, fcb_ref, out_ref, acc_ref):
    """Bt batch elements per grid step.

    x_ref  : (Bt, H, W, Cin)        unpadded NHWC feature-map tile (bf16)
    w_ref  : (Cin, 9*Cout)          conv weight, tap-major columns (bf16)
    b_ref  : (1, Cout)              conv bias (f32)
    fcw_ref: (1, Cout)              fc weight row (f32)
    fcb_ref: (1, 1)                 fc bias (f32)
    out_ref: (Bt, 1, 1)             sigmoid(logit) per batch element (f32)
    acc_ref: (Bt, H+2, W+2, Cout)   f32 VMEM scratch: zero-padded conv accumulator
    """
    bt, H, W, cin = x_ref.shape
    cout = b_ref.shape[1]

    # Single fused MXU matmul: all 9 taps at once, bf16 in, f32 accumulate.
    x_flat = x_ref[...].reshape(bt * H * W, cin)
    y = jnp.dot(x_flat, w_ref[...], preferred_element_type=jnp.float32)  # (M, 9*Cout)

    # Scatter-accumulate the 9 tap outputs into a zero-padded accumulator.
    # Tap (kh,kw) computed at input pixel (i,j) contributes to output pixel
    # (i-kh+1, j-kw+1); with the +1 pad offset that is acc[i+2-kh, j+2-kw].
    acc_ref[...] = jnp.zeros_like(acc_ref)
    for kh in range(3):
        for kw in range(3):
            t = kh * 3 + kw
            yt = y[:, t * cout:(t + 1) * cout].reshape(bt, H, W, cout)
            acc_ref[:, 2 - kh:2 - kh + H, 2 - kw:2 - kw + W, :] += yt

    # Valid (padding=1 "same") conv output = interior of the padded accumulator.
    conv = acc_ref[:, 1:1 + H, 1:1 + W, :] + b_ref[...].reshape(1, 1, 1, cout)
    conv = jnp.maximum(conv, 0.0)            # ReLU; Dropout(0.2) is identity at inference.

    # Global average pool -> (Bt, Cout).
    s = jnp.sum(conv, axis=1)                # (Bt, W, Cout)
    s = jnp.sum(s, axis=1)                   # (Bt, Cout)
    pooled = s * (1.0 / (H * W))

    # Linear(32, 1): VPU multiply + lane reduce, batched over Bt.
    logit = jnp.sum(pooled * fcw_ref[...], axis=-1, keepdims=True) + fcb_ref[...]  # (Bt, 1)
    out_ref[...] = jax.nn.sigmoid(logit).reshape(bt, 1, 1)


def _pick_bt(batch, cap=8):
    """Largest divisor of `batch` that is <= cap (no ragged tail blocks)."""
    for bt in range(min(cap, batch), 0, -1):
        if batch % bt == 0:
            return bt
    return 1


@jax.jit
def spoofnet_head(feat_nhwc, conv_w, conv_b, fc_w, fc_b):
    """feat_nhwc: (B, H, W, 1280), bf16 (or f32). Returns (B, 1) f32 sigmoid probs."""
    B, H, W, cin = feat_nhwc.shape
    cout = conv_w.shape[0]
    bt = _pick_bt(B)

    # Repack torch conv weight (Cout, Cin, 3, 3) -> (Cin, 9*Cout), tap-major columns.
    w_pk = jnp.transpose(conv_w, (2, 3, 1, 0)).reshape(9, cin, cout)   # [t, i, o]
    w_pk = jnp.transpose(w_pk, (1, 0, 2)).reshape(cin, 9 * cout)       # [i, t*Cout + o]

    x = feat_nhwc.astype(jnp.bfloat16)      # no-op if the backbone already emits bf16
    w_pk = w_pk.astype(jnp.bfloat16)
    b2 = conv_b.reshape(1, cout).astype(jnp.float32)
    fcw = fc_w.reshape(1, cout).astype(jnp.float32)
    fcb = fc_b.reshape(1, 1).astype(jnp.float32)

    out = pl.pallas_call(
        spoofnet_head_kernel,
        out_shape=jax.ShapeDtypeStruct((B, 1, 1), jnp.float32),
        grid_spec=pltpu.PrefetchScalarGridSpec(
            num_scalar_prefetch=0,
            grid=(B // bt,),
            in_specs=[
                pl.BlockSpec((bt, H, W, cin), lambda i: (i, 0, 0, 0)),
                # Constant index maps -> parameters are DMA'd once, not per grid step.
                pl.BlockSpec((cin, 9 * cout), lambda i: (0, 0)),
                pl.BlockSpec((1, cout), lambda i: (0, 0)),
                pl.BlockSpec((1, cout), lambda i: (0, 0)),
                pl.BlockSpec((1, 1), lambda i: (0, 0)),
            ],
            out_specs=pl.BlockSpec((bt, 1, 1), lambda i: (i, 0, 0)),
            scratch_shapes=[pltpu.VMEM((bt, H + 2, W + 2, cout), jnp.float32)],
        ),
        compiler_params=pltpu.CompilerParams(
            dimension_semantics=("parallel",)),   # batch elements are independent (2 TCs on v7x)
    )(x, w_pk, b2, fcw, fcb)
    return out.reshape(B, 1)


def reference(feat_nhwc, conv_w, conv_b, fc_w, fc_b):
    """Plain-JAX f32 reference for the same head (for correctness check)."""
    y = jax.lax.conv_general_dilated(
        feat_nhwc,
        jnp.transpose(conv_w, (2, 3, 1, 0)),           # OIHW -> HWIO
        window_strides=(1, 1), padding="SAME",
        dimension_numbers=("NHWC", "HWIO", "NHWC"))
    y = jnp.maximum(y + conv_b, 0.0)
    p = jnp.mean(y, axis=(1, 2))                        # (B, 32)
    return jax.nn.sigmoid(p @ fc_w.T + fc_b)            # (B, 1)


if __name__ == "__main__":
    key = jax.random.PRNGKey(0)
    k_feat, k_w, k_b, k_fw, k_fb = jax.random.split(key, 5)

    # Small shapes consistent with the module: mobilenet_v2 features output is
    # (B, 1280, h, w); here B=2, h=w=8, expressed in NHWC for the kernel.
    B, H, W, CIN, COUT = 2, 8, 8, 1280, 32
    feat = jax.nn.relu(jax.random.normal(k_feat, (B, H, W, CIN), jnp.float32))
    feat_bf16 = feat.astype(jnp.bfloat16)   # the backbone would hand the head bf16 activations

    # Deterministic synthetic parameters (shapes from SpoofNet.__init__).
    conv_w = 0.02 * jax.random.normal(k_w, (COUT, CIN, 3, 3), jnp.float32)   # Conv2d(1280, 32, 3)
    conv_b = 0.01 * jax.random.normal(k_b, (COUT,), jnp.float32)
    fc_w = 0.1 * jax.random.normal(k_fw, (1, COUT), jnp.float32)             # Linear(32, 1)
    fc_b = 0.1 * jax.random.normal(k_fb, (1,), jnp.float32)

    out = jax.block_until_ready(spoofnet_head(feat_bf16, conv_w, conv_b, fc_w, fc_b))

    # Compare against an f32 reference on the same bf16-quantized activations; the
    # remaining tolerance covers bf16 weight/matmul rounding only.
    ref = jax.block_until_ready(
        reference(feat_bf16.astype(jnp.float32), conv_w, conv_b, fc_w, fc_b))

    assert out.shape == (B, 1), out.shape
    assert jnp.allclose(out, ref, atol=5e-3), (out, ref)

    print("KERNEL_OK")
</pallas_src>

<mosaic_0001>
module attributes {stable_mosaic.version = 11 : i64} {
  func.func @spoofnet_head_kernel(%arg0: i32, %arg1: memref<2x8x8x1280xbf16, #tpu.memory_space<vmem>>, %arg2: memref<1280x288xbf16, #tpu.memory_space<vmem>>, %arg3: memref<1x32xf32, #tpu.memory_space<vmem>>, %arg4: memref<1x32xf32, #tpu.memory_space<vmem>>, %arg5: memref<1x1xf32, #tpu.memory_space<vmem>>, %arg6: memref<2x1x1xf32, #tpu.memory_space<vmem>>, %arg7: memref<2x10x10x32xf32, #tpu.memory_space<vmem>>) attributes {dimension_semantics = [#tpu.dimension_semantics<parallel>], iteration_bounds = array<i64: 1>, scalar_prefetch = 0 : i64, scratch_operands = 1 : i64, tpu.core_type = #tpu.core_type<tc>, window_params = [{transform_indices = @transform_0, window_bounds = array<i64: 2, 8, 8, 1280>}, {pipeline_mode = #tpu.pipeline_mode<synchronous>, transform_indices = @transform_1, window_bounds = array<i64: 1280, 288>}, {pipeline_mode = #tpu.pipeline_mode<synchronous>, transform_indices = @transform_2, window_bounds = array<i64: 1, 32>}, {pipeline_mode = #tpu.pipeline_mode<synchronous>, transform_indices = @transform_3, window_bounds = array<i64: 1, 32>}, {pipeline_mode = #tpu.pipeline_mode<synchronous>, transform_indices = @transform_4, window_bounds = array<i64: 1, 1>}, {transform_indices = @transform_5, window_bounds = array<i64: 2, 1, 1>}]} {
    %c0 = arith.constant 0 : index
    %c0_0 = arith.constant 0 : index
    %c0_1 = arith.constant 0 : index
    %c0_2 = arith.constant 0 : index
    %0 = vector.load %arg1[%c0, %c0_0, %c0_1, %c0_2] : memref<2x8x8x1280xbf16, #tpu.memory_space<vmem>>, vector<2x8x8x1280xbf16>
    %1 = vector.shape_cast %0 : vector<2x8x8x1280xbf16> to vector<128x1280xbf16>
    %c0_3 = arith.constant 0 : index
    %c0_4 = arith.constant 0 : index
    %2 = vector.load %arg2[%c0_3, %c0_4] : memref<1280x288xbf16, #tpu.memory_space<vmem>>, vector<1280x288xbf16>
    %cst = arith.constant dense<0.000000e+00> : vector<128x288xf32>
    %3 = tpu.matmul %1, %2, %cst {dimension_numbers = #tpu.dot_dimension_numbers<[1], [0], [0], [1], [0, 0, 1, 1], [], []>} : vector<128x1280xbf16>, vector<1280x288xbf16>, vector<128x288xf32> -> vector<128x288xf32>
    %cst_5 = arith.constant 0.000000e+00 : f32
    %4 = vector.broadcast %cst_5 : f32 to vector<2x10x10x32xf32>
    %c0_6 = arith.constant 0 : index
    %c0_7 = arith.constant 0 : index
    %c0_8 = arith.constant 0 : index
    %c0_9 = arith.constant 0 : index
    %5 = vector.load %arg7[%c0_6, %c0_7, %c0_8, %c0_9] : memref<2x10x10x32xf32, #tpu.memory_space<vmem>>, vector<2x10x10x32xf32>
    tpu.vector_store %arg7[%c0_6, %c0_7, %c0_8, %c0_9], %4 {strides = array<i32>} : memref<2x10x10x32xf32, #tpu.memory_space<vmem>>, vector<2x10x10x32xf32>,
    %6 = vector.extract_strided_slice %3 {offsets = [0, 0], sizes = [128, 32], strides = [1, 1]} : vector<128x288xf32> to vector<128x32xf32>
    %7 = vector.shape_cast %6 : vector<128x32xf32> to vector<2x8x8x32xf32>
    %c0_10 = arith.constant 0 : index
    %c2 = arith.constant 2 : index
    %c2_11 = arith.constant 2 : index
    %c0_12 = arith.constant 0 : index
    %8 = vector.load %arg7[%c0_10, %c2, %c2_11, %c0_12] : memref<2x10x10x32xf32, #tpu.memory_space<vmem>>, vector<2x8x8x32xf32>
    %9 = arith.addf %8, %7 : vector<2x8x8x32xf32>
    %c0_13 = arith.constant 0 : index
    %c2_14 = arith.constant 2 : index
    %c2_15 = arith.constant 2 : index
    %c0_16 = arith.constant 0 : index
    %10 = vector.load %arg7[%c0_13, %c2_14, %c2_15, %c0_16] : memref<2x10x10x32xf32, #tpu.memory_space<vmem>>, vector<2x8x8x32xf32>
    tpu.vector_store %arg7[%c0_13, %c2_14, %c2_15, %c0_16], %9 {strides = array<i32>} : memref<2x10x10x32xf32, #tpu.memory_space<vmem>>, vector<2x8x8x32xf32>,
    %11 = vector.extract_strided_slice %3 {offsets = [0, 32], sizes = [128, 32], strides = [1, 1]} : vector<128x288xf32> to vector<128x32xf32>
    %12 = vector.shape_cast %11 : vector<128x32xf32> to vector<2x8x8x32xf32>
    %c0_17 = arith.constant 0 : index
    %c2_18 = arith.constant 2 : index
    %c1 = arith.constant 1 : index
    %c0_19 = arith.constant 0 : index
    %13 = vector.load %arg7[%c0_17, %c2_18, %c1, %c0_19] : memref<2x10x10x32xf32, #tpu.memory_space<vmem>>, vector<2x8x8x32xf32>
    %14 = arith.addf %13, %12 : vector<2x8x8x32xf32>
    %c0_20 = arith.constant 0 : index
    %c2_21 = arith.constant 2 : index
    %c1_22 = arith.constant 1 : index
    %c0_23 = arith.constant 0 : index
    %15 = vector.load %arg7[%c0_20, %c2_21, %c1_22, %c0_23] : memref<2x10x10x32xf32, #tpu.memory_space<vmem>>, vector<2x8x8x32xf32>
    tpu.vector_store %arg7[%c0_20, %c2_21, %c1_22, %c0_23], %14 {strides = array<i32>} : memref<2x10x10x32xf32, #tpu.memory_space<vmem>>, vector<2x8x8x32xf32>,
    %16 = vector.extract_strided_slice %3 {offsets = [0, 64], sizes = [128, 32], strides = [1, 1]} : vector<128x288xf32> to vector<128x32xf32>
    %17 = vector.shape_cast %16 : vector<128x32xf32> to vector<2x8x8x32xf32>
    %c0_24 = arith.constant 0 : index
    %c2_25 = arith.constant 2 : index
    %c0_26 = arith.constant 0 : index
    %c0_27 = arith.constant 0 : index
    %18 = vector.load %arg7[%c0_24, %c2_25, %c0_26, %c0_27] : memref<2x10x10x32xf32, #tpu.memory_space<vmem>>, vector<2x8x8x32xf32>
    %19 = arith.addf %18, %17 : vector<2x8x8x32xf32>
    %c0_28 = arith.constant 0 : index
    %c2_29 = arith.constant 2 : index
    %c0_30 = arith.constant 0 : index
    %c0_31 = arith.constant 0 : index
    %20 = vector.load %arg7[%c0_28, %c2_29, %c0_30, %c0_31] : memref<2x10x10x32xf32, #tpu.memory_space<vmem>>, vector<2x8x8x32xf32>
    tpu.vector_store %arg7[%c0_28, %c2_29, %c0_30, %c0_31], %19 {strides = array<i32>} : memref<2x10x10x32xf32, #tpu.memory_space<vmem>>, vector<2x8x8x32xf32>,
    %21 = vector.extract_strided_slice %3 {offsets = [0, 96], sizes = [128, 32], strides = [1, 1]} : vector<128x288xf32> to vector<128x32xf32>
    %22 = vector.shape_cast %21 : vector<128x32xf32> to vector<2x8x8x32xf32>
    %c0_32 = arith.constant 0 : index
    %c1_33 = arith.constant 1 : index
    %c2_34 = arith.constant 2 : index
    %c0_35 = arith.constant 0 : index
    %23 = vector.load %arg7[%c0_32, %c1_33, %c2_34, %c0_35] : memref<2x10x10x32xf32, #tpu.memory_space<vmem>>, vector<2x8x8x32xf32>
    %24 = arith.addf %23, %22 : vector<2x8x8x32xf32>
    %c0_36 = arith.constant 0 : index
    %c1_37 = arith.constant 1 : index
    %c2_38 = arith.constant 2 : index
    %c0_39 = arith.constant 0 : index
    %25 = vector.load %arg7[%c0_36, %c1_37, %c2_38, %c0_39] : memref<2x10x10x32xf32, #tpu.memory_space<vmem>>, vector<2x8x8x32xf32>
    tpu.vector_store %arg7[%c0_36, %c1_37, %c2_38, %c0_39], %24 {strides = array<i32>} : memref<2x10x10x32xf32, #tpu.memory_space<vmem>>, vector<2x8x8x32xf32>,
    %26 = vector.extract_strided_slice %3 {offsets = [0, 128], sizes = [128, 32], strides = [1, 1]} : vector<128x288xf32> to vector<128x32xf32>
    %27 = vector.shape_cast %26 : vector<128x32xf32> to vector<2x8x8x32xf32>
    %c0_40 = arith.constant 0 : index
    %c1_41 = arith.constant 1 : index
    %c1_42 = arith.constant 1 : index
    %c0_43 = arith.constant 0 : index
    %28 = vector.load %arg7[%c0_40, %c1_41, %c1_42, %c0_43] : memref<2x10x10x32xf32, #tpu.memory_space<vmem>>, vector<2x8x8x32xf32>
    %29 = arith.addf %28, %27 : vector<2x8x8x32xf32>
    %c0_44 = arith.constant 0 : index
    %c1_45 = arith.constant 1 : index
    %c1_46 = arith.constant 1 : index
    %c0_47 = arith.constant 0 : index
    %30 = vector.load %arg7[%c0_44, %c1_45, %c1_46, %c0_47] : memref<2x10x10x32xf32, #tpu.memory_space<vmem>>, vector<2x8x8x32xf32>
    tpu.vector_store %arg7[%c0_44, %c1_45, %c1_46, %c0_47], %29 {strides = array<i32>} : memref<2x10x10x32xf32, #tpu.memory_space<vmem>>, vector<2x8x8x32xf32>,
    %31 = vector.extract_strided_slice %3 {offsets = [0, 160], sizes = [128, 32], strides = [1, 1]} : vector<128x288xf32> to vector<128x32xf32>
    %32 = vector.shape_cast %31 : vector<128x32xf32> to vector<2x8x8x32xf32>
    %c0_48 = arith.constant 0 : index
    %c1_49 = arith.constant 1 : index
    %c0_50 = arith.constant 0 : index
    %c0_51 = arith.constant 0 : index
    %33 = vector.load %arg7[%c0_48, %c1_49, %c0_50, %c0_51] : memref<2x10x10x32xf32, #tpu.memory_space<vmem>>, vector<2x8x8x32xf32>
    %34 = arith.addf %33, %32 : vector<2x8x8x32xf32>
    %c0_52 = arith.constant 0 : index
    %c1_53 = arith.constant 1 : index
    %c0_54 = arith.constant 0 : index
    %c0_55 = arith.constant 0 : index
    %35 = vector.load %arg7[%c0_52, %c1_53, %c0_54, %c0_55] : memref<2x10x10x32xf32, #tpu.memory_space<vmem>>, vector<2x8x8x32xf32>
    tpu.vector_store %arg7[%c0_52, %c1_53, %c0_54, %c0_55], %34 {strides = array<i32>} : memref<2x10x10x32xf32, #tpu.memory_space<vmem>>, vector<2x8x8x32xf32>,
    %36 = vector.extract_strided_slice %3 {offsets = [0, 192], sizes = [128, 32], strides = [1, 1]} : vector<128x288xf32> to vector<128x32xf32>
    %37 = vector.shape_cast %36 : vector<128x32xf32> to vector<2x8x8x32xf32>
    %c0_56 = arith.constant 0 : index
    %c0_57 = arith.constant 0 : index
    %c2_58 = arith.constant 2 : index
    %c0_59 = arith.constant 0 : index
    %38 = vector.load %arg7[%c0_56, %c0_57, %c2_58, %c0_59] : memref<2x10x10x32xf32, #tpu.memory_space<vmem>>, vector<2x8x8x32xf32>
    %39 = arith.addf %38, %37 : vector<2x8x8x32xf32>
    %c0_60 = arith.constant 0 : index
    %c0_61 = arith.constant 0 : index
    %c2_62 = arith.constant 2 : index
    %c0_63 = arith.constant 0 : index
    %40 = vector.load %arg7[%c0_60, %c0_61, %c2_62, %c0_63] : memref<2x10x10x32xf32, #tpu.memory_space<vmem>>, vector<2x8x8x32xf32>
    tpu.vector_store %arg7[%c0_60, %c0_61, %c2_62, %c0_63], %39 {strides = array<i32>} : memref<2x10x10x32xf32, #tpu.memory_space<vmem>>, vector<2x8x8x32xf32>,
    %41 = vector.extract_strided_slice %3 {offsets = [0, 224], sizes = [128, 32], strides = [1, 1]} : vector<128x288xf32> to vector<128x32xf32>
    %42 = vector.shape_cast %41 : vector<128x32xf32> to vector<2x8x8x32xf32>
    %c0_64 = arith.constant 0 : index
    %c0_65 = arith.constant 0 : index
    %c1_66 = arith.constant 1 : index
    %c0_67 = arith.constant 0 : index
    %43 = vector.load %arg7[%c0_64, %c0_65, %c1_66, %c0_67] : memref<2x10x10x32xf32, #tpu.memory_space<vmem>>, vector<2x8x8x32xf32>
    %44 = arith.addf %43, %42 : vector<2x8x8x32xf32>
    %c0_68 = arith.constant 0 : index
    %c0_69 = arith.constant 0 : index
    %c1_70 = arith.constant 1 : index
    %c0_71 = arith.constant 0 : index
    %45 = vector.load %arg7[%c0_68, %c0_69, %c1_70, %c0_71] : memref<2x10x10x32xf32, #tpu.memory_space<vmem>>, vector<2x8x8x32xf32>
    tpu.vector_store %arg7[%c0_68, %c0_69, %c1_70, %c0_71], %44 {strides = array<i32>} : memref<2x10x10x32xf32, #tpu.memory_space<vmem>>, vector<2x8x8x32xf32>,
    %46 = vector.extract_strided_slice %3 {offsets = [0, 256], sizes = [128, 32], strides = [1, 1]} : vector<128x288xf32> to vector<128x32xf32>
    %47 = vector.shape_cast %46 : vector<128x32xf32> to vector<2x8x8x32xf32>
    %c0_72 = arith.constant 0 : index
    %c0_73 = arith.constant 0 : index
    %c0_74 = arith.constant 0 : index
    %c0_75 = arith.constant 0 : index
    %48 = vector.load %arg7[%c0_72, %c0_73, %c0_74, %c0_75] : memref<2x10x10x32xf32, #tpu.memory_space<vmem>>, vector<2x8x8x32xf32>
    %49 = arith.addf %48, %47 : vector<2x8x8x32xf32>
    %c0_76 = arith.constant 0 : index
    %c0_77 = arith.constant 0 : index
    %c0_78 = arith.constant 0 : index
    %c0_79 = arith.constant 0 : index
    %50 = vector.load %arg7[%c0_76, %c0_77, %c0_78, %c0_79] : memref<2x10x10x32xf32, #tpu.memory_space<vmem>>, vector<2x8x8x32xf32>
    tpu.vector_store %arg7[%c0_76, %c0_77, %c0_78, %c0_79], %49 {strides = array<i32>} : memref<2x10x10x32xf32, #tpu.memory_space<vmem>>, vector<2x8x8x32xf32>,
    %c0_80 = arith.constant 0 : index
    %c1_81 = arith.constant 1 : index
    %c1_82 = arith.constant 1 : index
    %c0_83 = arith.constant 0 : index
    %51 = vector.load %arg7[%c0_80, %c1_81, %c1_82, %c0_83] : memref<2x10x10x32xf32, #tpu.memory_space<vmem>>, vector<2x8x8x32xf32>
    %c0_84 = arith.constant 0 : index
    %c0_85 = arith.constant 0 : index
    %52 = vector.load %arg3[%c0_84, %c0_85] : memref<1x32xf32, #tpu.memory_space<vmem>>, vector<1x32xf32>
    %53 = vector.shape_cast %52 : vector<1x32xf32> to vector<1x1x1x32xf32>
    %54 = vector.broadcast %53 : vector<1x1x1x32xf32> to vector<2x8x8x32xf32>
    %55 = arith.addf %51, %54 : vector<2x8x8x32xf32>
    %cst_86 = arith.constant 0.000000e+00 : f32
    %56 = vector.broadcast %cst_86 : f32 to vector<2x8x8x32xf32>
    %57 = arith.maximumf %55, %56 : vector<2x8x8x32xf32>
    %cst_87 = arith.constant dense<0.000000e+00> : vector<2x8x32xf32>
    %58 = vector.multi_reduction <add>, %57, %cst_87 [1] : vector<2x8x8x32xf32> to vector<2x8x32xf32>
    %cst_88 = arith.constant dense<0.000000e+00> : vector<2x32xf32>
    %59 = vector.multi_reduction <add>, %58, %cst_88 [1] : vector<2x8x32xf32> to vector<2x32xf32>
    %cst_89 = arith.constant 1.562500e-02 : f32
    %60 = vector.broadcast %cst_89 : f32 to vector<2x32xf32>
    %61 = arith.mulf %59, %60 : vector<2x32xf32>
    %c0_90 = arith.constant 0 : index
    %c0_91 = arith.constant 0 : index
    %62 = vector.load %arg4[%c0_90, %c0_91] : memref<1x32xf32, #tpu.memory_space<vmem>>, vector<1x32xf32>
    %63 = vector.broadcast %62 : vector<1x32xf32> to vector<2x32xf32>
    %64 = arith.mulf %61, %63 : vector<2x32xf32>
    %cst_92 = arith.constant dense<0.000000e+00> : vector<2xf32>
    %65 = vector.multi_reduction <add>, %64, %cst_92 [1] : vector<2x32xf32> to vector<2xf32>
    %66 = vector.shape_cast %65 : vector<2xf32> to vector<2x1xf32>
    %c0_93 = arith.constant 0 : index
    %c0_94 = arith.constant 0 : index
    %67 = vector.load %arg5[%c0_93, %c0_94] : memref<1x1xf32, #tpu.memory_space<vmem>>, vector<1x1xf32>
    %68 = vector.broadcast %67 : vector<1x1xf32> to vector<2x1xf32>
    %69 = arith.addf %66, %68 : vector<2x1xf32>
    %70 = arith.negf %69 : vector<2x1xf32>
    %71 = math.exp %70 : vector<2x1xf32>
    %cst_95 = arith.constant 1.000000e+00 : f32
    %72 = vector.broadcast %cst_95 : f32 to vector<2x1xf32>
    %73 = arith.addf %72, %71 : vector<2x1xf32>
    %74 = arith.divf %72, %73 : vector<2x1xf32>
    %75 = vector.shape_cast %74 : vector<2x1xf32> to vector<2x1x1xf32>
    %c0_96 = arith.constant 0 : index
    %c0_97 = arith.constant 0 : index
    %c0_98 = arith.constant 0 : index
    %76 = vector.load %arg6[%c0_96, %c0_97, %c0_98] : memref<2x1x1xf32, #tpu.memory_space<vmem>>, vector<2x1x1xf32>
    tpu.vector_store %arg6[%c0_96, %c0_97, %c0_98], %75 {strides = array<i32>} : memref<2x1x1xf32, #tpu.memory_space<vmem>>, vector<2x1x1xf32>,
    return
  }
  func.func @transform_0(%arg0: i32) -> (i32, i32, i32, i32) {
    %c0_i32 = arith.constant 0 : i32
    %c0_i32_0 = arith.constant 0 : i32
    %c0_i32_1 = arith.constant 0 : i32
    %c0_i32_2 = arith.constant 0 : i32
    return %arg0, %c0_i32, %c0_i32_0, %c0_i32_1 : i32, i32, i32, i32
  }
  func.func @transform_1(%arg0: i32) -> (i32, i32) {
    %c0_i32 = arith.constant 0 : i32
    %c0_i32_0 = arith.constant 0 : i32
    %c0_i32_1 = arith.constant 0 : i32
    return %c0_i32, %c0_i32_0 : i32, i32
  }
  func.func @transform_2(%arg0: i32) -> (i32, i32) {
    %c0_i32 = arith.constant 0 : i32
    %c0_i32_0 = arith.constant 0 : i32
    %c0_i32_1 = arith.constant 0 : i32
    return %c0_i32, %c0_i32_0 : i32, i32
  }
  func.func @transform_3(%arg0: i32) -> (i32, i32) {
    %c0_i32 = arith.constant 0 : i32
    %c0_i32_0 = arith.constant 0 : i32
    %c0_i32_1 = arith.constant 0 : i32
    return %c0_i32, %c0_i32_0 : i32, i32
  }
  func.func @transform_4(%arg0: i32) -> (i32, i32) {
    %c0_i32 = arith.constant 0 : i32
    %c0_i32_0 = arith.constant 0 : i32
    %c0_i32_1 = arith.constant 0 : i32
    return %c0_i32, %c0_i32_0 : i32, i32
  }
  func.func @transform_5(%arg0: i32) -> (i32, i32, i32) {
    %c0_i32 = arith.constant 0 : i32
    %c0_i32_0 = arith.constant 0 : i32
    %c0_i32_1 = arith.constant 0 : i32
    return %arg0, %c0_i32, %c0_i32_0 : i32, i32, i32
  }
}

</mosaic_0001>

<llo_original>
// kernel: spoofnet_head.1
$region0: #{spoofnet_head.1}
  #allocation0 [shape = 'u32[]', space=smem, size = 0x4, offset = 0x4, fixed_abs, tag = 'smem constant byte address 0x4 - core index']
  #allocation1 [shape = 'u32[72,128]{1,0:T(1,128)}', space=vmem, size = 0x9000, scoped, tag = 'internal scratch']
  #allocation2 [shape = 'f32[2,10,10,32]{3,2,1,0:T(8,128)}', space=vmem, size = 0x28000, scoped, tag = 'scratch operand']
  #allocation3 [shape = 'f32[1,1]{1,0:T(1,128)S(1)}', space=vmem, size = 0x200, scoped, tag = 'scoped memory for spoofnet_head.1']
  %s0 = inlined_call_operand.vmem [shape: bf16[2,8,8,1280], index: 0, kind: input, shape index: {}]
  %s1 = inlined_call_operand.vmem [shape: bf16[1280,288], index: 1, kind: input, shape index: {}]
  %s2 = inlined_call_operand.vmem [shape: f32[1,32], index: 2, kind: input, shape index: {}]
  %s3 = inlined_call_operand.vmem [shape: f32[1,32], index: 3, kind: input, shape index: {}]
  %s4 = inlined_call_operand.<no memory space> [shape: f32[1,1], index: 4, kind: input, shape index: {}]
  %s5 = inlined_call_operand.vmem [shape: f32[2,1,1], index: 5, kind: output, shape index: {}]
  %s6 = sld [smem:[#allocation0]]
  $region30: #{spoofnet_head.1} parent=0
    _
  %s8 = ssub.s32 1, %s6
  %s9 = scalar_select 0, %s8, %s6
  %v10 = vstv %s4
  %11 = vst [vmem:[#allocation3] sm:$0x1] %v10
  // Predicated region
  $region2: #{spoofnet_head.1} parent=0 // pred_check
    _
  $region3: #{spoofnet_head.1} parent=0 // pred_check_branch
    %13 = sbr.rel (0) target = $region5
  $region4: #{spoofnet_head.1} parent=0 // pred_region
    _
  $region5: #{spoofnet_head.1} parent=0 // pred_fallthru
    _
  // Predicated region
  $region6: #{spoofnet_head.1} parent=0 // pred_check
    _
  $region7: #{spoofnet_head.1} parent=0 // pred_check_branch
    %15 = sbr.rel (0) target = $region9
  $region8: #{spoofnet_head.1} parent=0 // pred_region
    _
  $region9: #{spoofnet_head.1} parent=0 // pred_fallthru
    _
  // Predicated region
  $region10: #{spoofnet_head.1} parent=0 // pred_check
    _
  $region11: #{spoofnet_head.1} parent=0 // pred_check_branch
    %17 = sbr.rel (0) target = $region13
  $region12: #{spoofnet_head.1} parent=0 // pred_region
    _
  $region13: #{spoofnet_head.1} parent=0 // pred_fallthru
    _
  // Predicated region
  $region14: #{spoofnet_head.1} parent=0 // pred_check
    _
  $region15: #{spoofnet_head.1} parent=0 // pred_check_branch
    %19 = sbr.rel (0) target = $region17
  $region16: #{spoofnet_head.1} parent=0 // pred_region
    _
  $region17: #{spoofnet_head.1} parent=0 // pred_fallthru
    _
  // Predicated region
  $region18: #{spoofnet_head.1} parent=0 // pred_check
    _
  $region19: #{spoofnet_head.1} parent=0 // pred_check_branch
    %21 = sbr.rel (0) target = $region21
  $region20: #{spoofnet_head.1} parent=0 // pred_region
    _
  $region21: #{spoofnet_head.1} parent=0 // pred_fallthru
    _
  %v22 = vld [vmem:[%s0] sm:$0xff]
  %v23 = vld [vmem:[%s0 + $0x8] sm:$0xff]
  %v24 = vld [vmem:[%s0 + $0x10] sm:$0xff]
  %v25 = vld [vmem:[%s0 + $0x18] sm:$0xff]
  %v26 = vld [vmem:[%s0 + $0x20] sm:$0xff]
  %v27 = vld [vmem:[%s0 + $0x28] sm:$0xff]
  %v28 = vld [vmem:[%s0 + $0x30] sm:$0xff]
  %v29 = vld [vmem:[%s0 + $0x38] sm:$0xff]
  %v30 = vld [vmem:[%s0 + $0x40] sm:$0xff]
  %v31 = vld [vmem:[%s0 + $0x48] sm:$0xff]
  %v32 = vld [vmem:[%s0 + $0x50] sm:$0xff]
  %v33 = vld [vmem:[%s0 + $0x58] sm:$0xff]
  %v34 = vld [vmem:[%s0 + $0x60] sm:$0xff]
  %v35 = vld [vmem:[%s0 + $0x68] sm:$0xff]
  %v36 = vld [vmem:[%s0 + $0x70] sm:$0xff]
  %v37 = vld [vmem:[%s0 + $0x78] sm:$0xff]
  %v38 = vld [vmem:[%s0 + $0x80] sm:$0xff]
  %v39 = vld [vmem:[%s0 + $0x88] sm:$0xff]
  %v40 = vld [vmem:[%s0 + $0x90] sm:$0xff]
  %v41 = vld [vmem:[%s0 + $0x98] sm:$0xff]
  %v42 = vld [vmem:[%s0 + $0xa0] sm:$0xff]
  %v43 = vld [vmem:[%s0 + $0xa8] sm:$0xff]
  %v44 = vld [vmem:[%s0 + $0xb0] sm:$0xff]
  %v45 = vld [vmem:[%s0 + $0xb8] sm:$0xff]
  %v46 = vld [vmem:[%s0 + $0xc0] sm:$0xff]
  %v47 = vld [vmem:[%s0 + $0xc8] sm:$0xff]
  %v48 = vld [vmem:[%s0 + $0xd0] sm:$0xff]
  %v49 = vld [vmem:[%s0 + $0xd8] sm:$0xff]
  %v50 = vld [vmem:[%s0 + $0xe0] sm:$0xff]
  %v51 = vld [vmem:[%s0 + $0xe8] sm:$0xff]
  %v52 = vld [vmem:[%s0 + $0xf0] sm:$0xff]
  %v53 = vld [vmem:[%s0 + $0xf8] sm:$0xff]
  %v54 = vld [vmem:[%s0 + $0x100] sm:$0xff]
  %v55 = vld [vmem:[%s0 + $0x108] sm:$0xff]
  %v56 = vld [vmem:[%s0 + $0x110] sm:$0xff]
  %v57 = vld [vmem:[%s0 + $0x118] sm:$0xff]
  %v58 = vld [vmem:[%s0 + $0x120] sm:$0xff]
  %v59 = vld [vmem:[%s0 + $0x128] sm:$0xff]
  %v60 = vld [vmem:[%s0 + $0x130] sm:$0xff]
  %v61 = vld [vmem:[%s0 + $0x138] sm:$0xff]
  %v62 = vld [vmem:[%s0 + $0x140] sm:$0xff]
  %v63 = vld [vmem:[%s0 + $0x148] sm:$0xff]
  %v64 = vld [vmem:[%s0 + $0x150] sm:$0xff]
  %v65 = vld [vmem:[%s0 + $0x158] sm:$0xff]
  %v66 = vld [vmem:[%s0 + $0x160] sm:$0xff]
  %v67 = vld [vmem:[%s0 + $0x168] sm:$0xff]
  %v68 = vld [vmem:[%s0 + $0x170] sm:$0xff]
  %v69 = vld [vmem:[%s0 + $0x178] sm:$0xff]
  %v70 = vld [vmem:[%s0 + $0x180] sm:$0xff]
  %v71 = vld [vmem:[%s0 + $0x188] sm:$0xff]
  %v72 = vld [vmem:[%s0 + $0x190] sm:$0xff]
  %v73 = vld [vmem:[%s0 + $0x198] sm:$0xff]
  %v74 = vld [vmem:[%s0 + $0x1a0] sm:$0xff]
  %v75 = vld [vmem:[%s0 + $0x1a8] sm:$0xff]
  %v76 = vld [vmem:[%s0 + $0x1b0] sm:$0xff]
  %v77 = vld [vmem:[%s0 + $0x1b8] sm:$0xff]
  %v78 = vld [vmem:[%s0 + $0x1c0] sm:$0xff]
  %v79 = vld [vmem:[%s0 + $0x1c8] sm:$0xff]
  %v80 = vld [vmem:[%s0 + $0x1d0] sm:$0xff]
  %v81 = vld [vmem:[%s0 + $0x1d8] sm:$0xff]
  %v82 = vld [vmem:[%s0 + $0x1e0] sm:$0xff]
  %v83 = vld [vmem:[%s0 + $0x1e8] sm:$0xff]
  %v84 = vld [vmem:[%s0 + $0x1f0] sm:$0xff]
  %v85 = vld [vmem:[%s0 + $0x1f8] sm:$0xff]
  %v86 = vld [vmem:[%s0 + $0x200] sm:$0xff]
  %v87 = vld [vmem:[%s0 + $0x208] sm:$0xff]
  %v88 = vld [vmem:[%s0 + $0x210] sm:$0xff]
  %v89 = vld [vmem:[%s0 + $0x218] sm:$0xff]
  %v90 = vld [vmem:[%s0 + $0x220] sm:$0xff]
  %v91 = vld [vmem:[%s0 + $0x228] sm:$0xff]
  %v92 = vld [vmem:[%s0 + $0x230] sm:$0xff]
  %v93 = vld [vmem:[%s0 + $0x238] sm:$0xff]
  %v94 = vld [vmem:[%s0 + $0x240] sm:$0xff]
  %v95 = vld [vmem:[%s0 + $0x248] sm:$0xff]
  %v96 = vld [vmem:[%s0 + $0x250] sm:$0xff]
  %v97 = vld [vmem:[%s0 + $0x258] sm:$0xff]
  %v98 = vld [vmem:[%s0 + $0x260] sm:$0xff]
  %v99 = vld [vmem:[%s0 + $0x268] sm:$0xff]
  %v100 = vld [vmem:[%s0 + $0x270] sm:$0xff]
  %v101 = vld [vmem:[%s0 + $0x278] sm:$0xff]
  %v102 = vld [vmem:[%s1] sm:$0xff]
  %v103 = vld [vmem:[%s1 + $0x8] sm:$0xf]
  %v104 = vld [vmem:[%s1 + $0xc] sm:$0xff]
  %v105 = vld [vmem:[%s1 + $0x14] sm:$0xf]
  %v106 = vld [vmem:[%s1 + $0x18] sm:$0xff]
  %v107 = vld [vmem:[%s1 + $0x20] sm:$0xf]
  %v108 = vld [vmem:[%s1 + $0x24] sm:$0xff]
  %v109 = vld [vmem:[%s1 + $0x2c] sm:$0xf]
  %v110 = vld [vmem:[%s1 + $0x30] sm:$0xff]
  %v111 = vld [vmem:[%s1 + $0x38] sm:$0xf]
  %v112 = vld [vmem:[%s1 + $0x3c] sm:$0xff]
  %v113 = vld [vmem:[%s1 + $0x44] sm:$0xf]
  %v114 = vld [vmem:[%s1 + $0x48] sm:$0xff]
  %v115 = vld [vmem:[%s1 + $0x50] sm:$0xf]
  %v116 = vld [vmem:[%s1 + $0x54] sm:$0xff]
  %v117 = vld [vmem:[%s1 + $0x5c] sm:$0xf]
  %v118 = vld [vmem:[%s1 + $0x60] sm:$0xff]
  %v119 = vld [vmem:[%s1 + $0x68] sm:$0xf]
  %v120 = vld [vmem:[%s1 + $0x6c] sm:$0xff]
  %v121 = vld [vmem:[%s1 + $0x74] sm:$0xf]
  %v122 = vld [vmem:[%s1 + $0x78] sm:$0xff]
  %v123 = vld [vmem:[%s1 + $0x80] sm:$0xf]
  %v124 = vld [vmem:[%s1 + $0x84] sm:$0xff]
  %v125 = vld [vmem:[%s1 + $0x8c] sm:$0xf]
  %v126 = vld [vmem:[%s1 + $0x90] sm:$0xff]
  %v127 = vld [vmem:[%s1 + $0x98] sm:$0xf]
  %v128 = vld [vmem:[%s1 + $0x9c] sm:$0xff]
  %v129 = vld [vmem:[%s1 + $0xa4] sm:$0xf]
  %v130 = vld [vmem:[%s1 + $0xa8] sm:$0xff]
  %v131 = vld [vmem:[%s1 + $0xb0] sm:$0xf]
  %v132 = vld [vmem:[%s1 + $0xb4] sm:$0xff]
  %v133 = vld [vmem:[%s1 + $0xbc] sm:$0xf]
  %v134 = vld [vmem:[%s1 + $0xc0] sm:$0xff]
  %v135 = vld [vmem:[%s1 + $0xc8] sm:$0xf]
  %v136 = vld [vmem:[%s1 + $0xcc] sm:$0xff]
  %v137 = vld [vmem:[%s1 + $0xd4] sm:$0xf]
  %v138 = vld [vmem:[%s1 + $0xd8] sm:$0xff]
  %v139 = vld [vmem:[%s1 + $0xe0] sm:$0xf]
  %v140 = vld [vmem:[%s1 + $0xe4] sm:$0xff]
  %v141 = vld [vmem:[%s1 + $0xec] sm:$0xf]
  %v142 = vld [vmem:[%s1 + $0xf0] sm:$0xff]
  %v143 = vld [vmem:[%s1 + $0xf8] sm:$0xf]
  %v144 = vld [vmem:[%s1 + $0xfc] sm:$0xff]
  %v145 = vld [vmem:[%s1 + $0x104] sm:$0xf]
  %v146 = vld [vmem:[%s1 + $0x108] sm:$0xff]
  %v147 = vld [vmem:[%s1 + $0x110] sm:$0xf]
  %v148 = vld [vmem:[%s1 + $0x114] sm:$0xff]
  %v149 = vld [vmem:[%s1 + $0x11c] sm:$0xf]
  %v150 = vld [vmem:[%s1 + $0x120] sm:$0xff]
  %v151 = vld [vmem:[%s1 + $0x128] sm:$0xf]
  %v152 = vld [vmem:[%s1 + $0x12c] sm:$0xff]
  %v153 = vld [vmem:[%s1 + $0x134] sm:$0xf]
  %v154 = vld [vmem:[%s1 + $0x138] sm:$0xff]
  %v155 = vld [vmem:[%s1 + $0x140] sm:$0xf]
  %v156 = vld [vmem:[%s1 + $0x144] sm:$0xff]
  %v157 = vld [vmem:[%s1 + $0x14c] sm:$0xf]
  %v158 = vld [vmem:[%s1 + $0x150] sm:$0xff]
  %v159 = vld [vmem:[%s1 + $0x158] sm:$0xf]
  %v160 = vld [vmem:[%s1 + $0x15c] sm:$0xff]
  %v161 = vld [vmem:[%s1 + $0x164] sm:$0xf]
  %v162 = vld [vmem:[%s1 + $0x168] sm:$0xff]
  %v163 = vld [vmem:[%s1 + $0x170] sm:$0xf]
  %v164 = vld [vmem:[%s1 + $0x174] sm:$0xff]
  %v165 = vld [vmem:[%s1 + $0x17c] sm:$0xf]
  %v166 = vld [vmem:[%s1 + $0x180] sm:$0xff]
  %v167 = vld [vmem:[%s1 + $0x188] sm:$0xf]
  %v168 = vld [vmem:[%s1 + $0x18c] sm:$0xff]
  %v169 = vld [vmem:[%s1 + $0x194] sm:$0xf]
  %v170 = vld [vmem:[%s1 + $0x198] sm:$0xff]
  %v171 = vld [vmem:[%s1 + $0x1a0] sm:$0xf]
  %v172 = vld [vmem:[%s1 + $0x1a4] sm:$0xff]
  %v173 = vld [vmem:[%s1 + $0x1ac] sm:$0xf]
  %v174 = vld [vmem:[%s1 + $0x1b0] sm:$0xff]
  %v175 = vld [vmem:[%s1 + $0x1b8] sm:$0xf]
  %v176 = vld [vmem:[%s1 + $0x1bc] sm:$0xff]
  %v177 = vld [vmem:[%s1 + $0x1c4] sm:$0xf]
  %v178 = vld [vmem:[%s1 + $0x1c8] sm:$0xff]
  %v179 = vld [vmem:[%s1 + $0x1d0] sm:$0xf]
  %v180 = vld [vmem:[%s1 + $0x1d4] sm:$0xff]
  %v181 = vld [vmem:[%s1 + $0x1dc] sm:$0xf]
  %v182 = vld [vmem:[%s1 + $0x1e0] sm:$0xff]
  %v183 = vld [vmem:[%s1 + $0x1e8] sm:$0xf]
  %v184 = vld [vmem:[%s1 + $0x1ec] sm:$0xff]
  %v185 = vld [vmem:[%s1 + $0x1f4] sm:$0xf]
  %v186 = vld [vmem:[%s1 + $0x1f8] sm:$0xff]
  %v187 = vld [vmem:[%s1 + $0x200] sm:$0xf]
  %v188 = vld [vmem:[%s1 + $0x204] sm:$0xff]
  %v189 = vld [vmem:[%s1 + $0x20c] sm:$0xf]
  %v190 = vld [vmem:[%s1 + $0x210] sm:$0xff]
  %v191 = vld [vmem:[%s1 + $0x218] sm:$0xf]
  %v192 = vld [vmem:[%s1 + $0x21c] sm:$0xff]
  %v193 = vld [vmem:[%s1 + $0x224] sm:$0xf]
  %v194 = vld [vmem:[%s1 + $0x228] sm:$0xff]
  %v195 = vld [vmem:[%s1 + $0x230] sm:$0xf]
  %v196 = vld [vmem:[%s1 + $0x234] sm:$0xff]
  %v197 = vld [vmem:[%s1 + $0x23c] sm:$0xf]
  %v198 = vld [vmem:[%s1 + $0x240] sm:$0xff]
  %v199 = vld [vmem:[%s1 + $0x248] sm:$0xf]
  %v200 = vld [vmem:[%s1 + $0x24c] sm:$0xff]
  %v201 = vld [vmem:[%s1 + $0x254] sm:$0xf]
  %v202 = vld [vmem:[%s1 + $0x258] sm:$0xff]
  %v203 = vld [vmem:[%s1 + $0x260] sm:$0xf]
  %v204 = vld [vmem:[%s1 + $0x264] sm:$0xff]
  %v205 = vld [vmem:[%s1 + $0x26c] sm:$0xf]
  %v206 = vld [vmem:[%s1 + $0x270] sm:$0xff]
  %v207 = vld [vmem:[%s1 + $0x278] sm:$0xf]
  %v208 = vld [vmem:[%s1 + $0x27c] sm:$0xff]
  %v209 = vld [vmem:[%s1 + $0x284] sm:$0xf]
  %v210 = vld [vmem:[%s1 + $0x288] sm:$0xff]
  %v211 = vld [vmem:[%s1 + $0x290] sm:$0xf]
  %v212 = vld [vmem:[%s1 + $0x294] sm:$0xff]
  %v213 = vld [vmem:[%s1 + $0x29c] sm:$0xf]
  %v214 = vld [vmem:[%s1 + $0x2a0] sm:$0xff]
  %v215 = vld [vmem:[%s1 + $0x2a8] sm:$0xf]
  %v216 = vld [vmem:[%s1 + $0x2ac] sm:$0xff]
  %v217 = vld [vmem:[%s1 + $0x2b4] sm:$0xf]
  %v218 = vld [vmem:[%s1 + $0x2b8] sm:$0xff]
  %v219 = vld [vmem:[%s1 + $0x2c0] sm:$0xf]
  %v220 = vld [vmem:[%s1 + $0x2c4] sm:$0xff]
  %v221 = vld [vmem:[%s1 + $0x2cc] sm:$0xf]
  %v222 = vld [vmem:[%s1 + $0x2d0] sm:$0xff]
  %v223 = vld [vmem:[%s1 + $0x2d8] sm:$0xf]
  %v224 = vld [vmem:[%s1 + $0x2dc] sm:$0xff]
  %v225 = vld [vmem:[%s1 + $0x2e4] sm:$0xf]
  %v226 = vld [vmem:[%s1 + $0x2e8] sm:$0xff]
  %v227 = vld [vmem:[%s1 + $0x2f0] sm:$0xf]
  %v228 = vld [vmem:[%s1 + $0x2f4] sm:$0xff]
  %v229 = vld [vmem:[%s1 + $0x2fc] sm:$0xf]
  %v230 = vld [vmem:[%s1 + $0x300] sm:$0xff]
  %v231 = vld [vmem:[%s1 + $0x308] sm:$0xf]
  %v232 = vld [vmem:[%s1 + $0x30c] sm:$0xff]
  %v233 = vld [vmem:[%s1 + $0x314] sm:$0xf]
  %v234 = vld [vmem:[%s1 + $0x318] sm:$0xff]
  %v235 = vld [vmem:[%s1 + $0x320] sm:$0xf]
  %v236 = vld [vmem:[%s1 + $0x324] sm:$0xff]
  %v237 = vld [vmem:[%s1 + $0x32c] sm:$0xf]
  %v238 = vld [vmem:[%s1 + $0x330] sm:$0xff]
  %v239 = vld [vmem:[%s1 + $0x338] sm:$0xf]
  %v240 = vld [vmem:[%s1 + $0x33c] sm:$0xff]
  %v241 = vld [vmem:[%s1 + $0x344] sm:$0xf]
  %v242 = vld [vmem:[%s1 + $0x348] sm:$0xff]
  %v243 = vld [vmem:[%s1 + $0x350] sm:$0xf]
  %v244 = vld [vmem:[%s1 + $0x354] sm:$0xff]
  %v245 = vld [vmem:[%s1 + $0x35c] sm:$0xf]
  %v246 = vld [vmem:[%s1 + $0x360] sm:$0xff]
  %v247 = vld [vmem:[%s1 + $0x368] sm:$0xf]
  %v248 = vld [vmem:[%s1 + $0x36c] sm:$0xff]
  %v249 = vld [vmem:[%s1 + $0x374] sm:$0xf]
  %v250 = vld [vmem:[%s1 + $0x378] sm:$0xff]
  %v251 = vld [vmem:[%s1 + $0x380] sm:$0xf]
  %v252 = vld [vmem:[%s1 + $0x384] sm:$0xff]
  %v253 = vld [vmem:[%s1 + $0x38c] sm:$0xf]
  %v254 = vld [vmem:[%s1 + $0x390] sm:$0xff]
  %v255 = vld [vmem:[%s1 + $0x398] sm:$0xf]
  %v256 = vld [vmem:[%s1 + $0x39c] sm:$0xff]
  %v257 = vld [vmem:[%s1 + $0x3a4] sm:$0xf]
  %v258 = vld [vmem:[%s1 + $0x3a8] sm:$0xff]
  %v259 = vld [vmem:[%s1 + $0x3b0] sm:$0xf]
  %v260 = vld [vmem:[%s1 + $0x3b4] sm:$0xff]
  %v261 = vld [vmem:[%s1 + $0x3bc] sm:$0xf]
  %v262 = vld [vmem:[%s1 + $0x3c0] sm:$0xff]
  %v263 = vld [vmem:[%s1 + $0x3c8] sm:$0xf]
  %v264 = vld [vmem:[%s1 + $0x3cc] sm:$0xff]
  %v265 = vld [vmem:[%s1 + $0x3d4] sm:$0xf]
  %v266 = vld [vmem:[%s1 + $0x3d8] sm:$0xff]
  %v267 = vld [vmem:[%s1 + $0x3e0] sm:$0xf]
  %v268 = vld [vmem:[%s1 + $0x3e4] sm:$0xff]
  %v269 = vld [vmem:[%s1 + $0x3ec] sm:$0xf]
  %v270 = vld [vmem:[%s1 + $0x3f0] sm:$0xff]
  %v271 = vld [vmem:[%s1 + $0x3f8] sm:$0xf]
  %v272 = vld [vmem:[%s1 + $0x3fc] sm:$0xff]
  %v273 = vld [vmem:[%s1 + $0x404] sm:$0xf]
  %v274 = vld [vmem:[%s1 + $0x408] sm:$0xff]
  %v275 = vld [vmem:[%s1 + $0x410] sm:$0xf]
  %v276 = vld [vmem:[%s1 + $0x414] sm:$0xff]
  %v277 = vld [vmem:[%s1 + $0x41c] sm:$0xf]
  %v278 = vld [vmem:[%s1 + $0x420] sm:$0xff]
  %v279 = vld [vmem:[%s1 + $0x428] sm:$0xf]
  %v280 = vld [vmem:[%s1 + $0x42c] sm:$0xff]
  %v281 = vld [vmem:[%s1 + $0x434] sm:$0xf]
  %v282 = vld [vmem:[%s1 + $0x438] sm:$0xff]
  %v283 = vld [vmem:[%s1 + $0x440] sm:$0xf]
  %v284 = vld [vmem:[%s1 + $0x444] sm:$0xff]
  %v285 = vld [vmem:[%s1 + $0x44c] sm:$0xf]
  %v286 = vld [vmem:[%s1 + $0x450] sm:$0xff]
  %v287 = vld [vmem:[%s1 + $0x458] sm:$0xf]
  %v288 = vld [vmem:[%s1 + $0x45c] sm:$0xff]
  %v289 = vld [vmem:[%s1 + $0x464] sm:$0xf]
  %v290 = vld [vmem:[%s1 + $0x468] sm:$0xff]
  %v291 = vld [vmem:[%s1 + $0x470] sm:$0xf]
  %v292 = vld [vmem:[%s1 + $0x474] sm:$0xff]
  %v293 = vld [vmem:[%s1 + $0x47c] sm:$0xf]
  %v294 = vld [vmem:[%s1 + $0x480] sm:$0xff]
  %v295 = vld [vmem:[%s1 + $0x488] sm:$0xf]
  %v296 = vld [vmem:[%s1 + $0x48c] sm:$0xff]
  %v297 = vld [vmem:[%s1 + $0x494] sm:$0xf]
  %v298 = vld [vmem:[%s1 + $0x498] sm:$0xff]
  %v299 = vld [vmem:[%s1 + $0x4a0] sm:$0xf]
  %v300 = vld [vmem:[%s1 + $0x4a4] sm:$0xff]
  %v301 = vld [vmem:[%s1 + $0x4ac] sm:$0xf]
  %v302 = vld [vmem:[%s1 + $0x4b0] sm:$0xff]
  %v303 = vld [vmem:[%s1 + $0x4b8] sm:$0xf]
  %v304 = vld [vmem:[%s1 + $0x4bc] sm:$0xff]
  %v305 = vld [vmem:[%s1 + $0x4c4] sm:$0xf]
  %v306 = vld [vmem:[%s1 + $0x4c8] sm:$0xff]
  %v307 = vld [vmem:[%s1 + $0x4d0] sm:$0xf]
  %v308 = vld [vmem:[%s1 + $0x4d4] sm:$0xff]
  %v309 = vld [vmem:[%s1 + $0x4dc] sm:$0xf]
  %v310 = vld [vmem:[%s1 + $0x4e0] sm:$0xff]
  %v311 = vld [vmem:[%s1 + $0x4e8] sm:$0xf]
  %v312 = vld [vmem:[%s1 + $0x4ec] sm:$0xff]
  %v313 = vld [vmem:[%s1 + $0x4f4] sm:$0xf]
  %v314 = vld [vmem:[%s1 + $0x4f8] sm:$0xff]
  %v315 = vld [vmem:[%s1 + $0x500] sm:$0xf]
  %v316 = vld [vmem:[%s1 + $0x504] sm:$0xff]
  %v317 = vld [vmem:[%s1 + $0x50c] sm:$0xf]
  %v318 = vld [vmem:[%s1 + $0x510] sm:$0xff]
  %v319 = vld [vmem:[%s1 + $0x518] sm:$0xf]
  %v320 = vld [vmem:[%s1 + $0x51c] sm:$0xff]
  %v321 = vld [vmem:[%s1 + $0x524] sm:$0xf]
  %v322 = vld [vmem:[%s1 + $0x528] sm:$0xff]
  %v323 = vld [vmem:[%s1 + $0x530] sm:$0xf]
  %v324 = vld [vmem:[%s1 + $0x534] sm:$0xff]
  %v325 = vld [vmem:[%s1 + $0x53c] sm:$0xf]
  %v326 = vld [vmem:[%s1 + $0x540] sm:$0xff]
  %v327 = vld [vmem:[%s1 + $0x548] sm:$0xf]
  %v328 = vld [vmem:[%s1 + $0x54c] sm:$0xff]
  %v329 = vld [vmem:[%s1 + $0x554] sm:$0xf]
  %v330 = vld [vmem:[%s1 + $0x558] sm:$0xff]
  %v331 = vld [vmem:[%s1 + $0x560] sm:$0xf]
  %v332 = vld [vmem:[%s1 + $0x564] sm:$0xff]
  %v333 = vld [vmem:[%s1 + $0x56c] sm:$0xf]
  %v334 = vld [vmem:[%s1 + $0x570] sm:$0xff]
  %v335 = vld [vmem:[%s1 + $0x578] sm:$0xf]
  %v336 = vld [vmem:[%s1 + $0x57c] sm:$0xff]
  %v337 = vld [vmem:[%s1 + $0x584] sm:$0xf]
  %v338 = vld [vmem:[%s1 + $0x588] sm:$0xff]
  %v339 = vld [vmem:[%s1 + $0x590] sm:$0xf]
  %v340 = vld [vmem:[%s1 + $0x594] sm:$0xff]
  %v341 = vld [vmem:[%s1 + $0x59c] sm:$0xf]
  %v342 = vld [vmem:[%s1 + $0x5a0] sm:$0xff]
  %v343 = vld [vmem:[%s1 + $0x5a8] sm:$0xf]
  %v344 = vld [vmem:[%s1 + $0x5ac] sm:$0xff]
  %v345 = vld [vmem:[%s1 + $0x5b4] sm:$0xf]
  %v346 = vld [vmem:[%s1 + $0x5b8] sm:$0xff]
  %v347 = vld [vmem:[%s1 + $0x5c0] sm:$0xf]
  %v348 = vld [vmem:[%s1 + $0x5c4] sm:$0xff]
  %v349 = vld [vmem:[%s1 + $0x5cc] sm:$0xf]
  %v350 = vld [vmem:[%s1 + $0x5d0] sm:$0xff]
  %v351 = vld [vmem:[%s1 + $0x5d8] sm:$0xf]
  %v352 = vld [vmem:[%s1 + $0x5dc] sm:$0xff]
  %v353 = vld [vmem:[%s1 + $0x5e4] sm:$0xf]
  %v354 = vld [vmem:[%s1 + $0x5e8] sm:$0xff]
  %v355 = vld [vmem:[%s1 + $0x5f0] sm:$0xf]
  %v356 = vld [vmem:[%s1 + $0x5f4] sm:$0xff]
  %v357 = vld [vmem:[%s1 + $0x5fc] sm:$0xf]
  %v358 = vld [vmem:[%s1 + $0x600] sm:$0xff]
  %v359 = vld [vmem:[%s1 + $0x608] sm:$0xf]
  %v360 = vld [vmem:[%s1 + $0x60c] sm:$0xff]
  %v361 = vld [vmem:[%s1 + $0x614] sm:$0xf]
  %v362 = vld [vmem:[%s1 + $0x618] sm:$0xff]
  %v363 = vld [vmem:[%s1 + $0x620] sm:$0xf]
  %v364 = vld [vmem:[%s1 + $0x624] sm:$0xff]
  %v365 = vld [vmem:[%s1 + $0x62c] sm:$0xf]
  %v366 = vld [vmem:[%s1 + $0x630] sm:$0xff]
  %v367 = vld [vmem:[%s1 + $0x638] sm:$0xf]
  %v368 = vld [vmem:[%s1 + $0x63c] sm:$0xff]
  %v369 = vld [vmem:[%s1 + $0x644] sm:$0xf]
  %v370 = vld [vmem:[%s1 + $0x648] sm:$0xff]
  %v371 = vld [vmem:[%s1 + $0x650] sm:$0xf]
  %v372 = vld [vmem:[%s1 + $0x654] sm:$0xff]
  %v373 = vld [vmem:[%s1 + $0x65c] sm:$0xf]
  %v374 = vld [vmem:[%s1 + $0x660] sm:$0xff]
  %v375 = vld [vmem:[%s1 + $0x668] sm:$0xf]
  %v376 = vld [vmem:[%s1 + $0x66c] sm:$0xff]
  %v377 = vld [vmem:[%s1 + $0x674] sm:$0xf]
  %v378 = vld [vmem:[%s1 + $0x678] sm:$0xff]
  %v379 = vld [vmem:[%s1 + $0x680] sm:$0xf]
  %v380 = vld [vmem:[%s1 + $0x684] sm:$0xff]
  %v381 = vld [vmem:[%s1 + $0x68c] sm:$0xf]
  %v382 = vld [vmem:[%s1 + $0x690] sm:$0xff]
  %v383 = vld [vmem:[%s1 + $0x698] sm:$0xf]
  %v384 = vld [vmem:[%s1 + $0x69c] sm:$0xff]
  %v385 = vld [vmem:[%s1 + $0x6a4] sm:$0xf]
  %v386 = vld [vmem:[%s1 + $0x6a8] sm:$0xff]
  %v387 = vld [vmem:[%s1 + $0x6b0] sm:$0xf]
  %v388 = vld [vmem:[%s1 + $0x6b4] sm:$0xff]
  %v389 = vld [vmem:[%s1 + $0x6bc] sm:$0xf]
  %v390 = vld [vmem:[%s1 + $0x6c0] sm:$0xff]
  %v391 = vld [vmem:[%s1 + $0x6c8] sm:$0xf]
  %v392 = vld [vmem:[%s1 + $0x6cc] sm:$0xff]
  %v393 = vld [vmem:[%s1 + $0x6d4] sm:$0xf]
  %v394 = vld [vmem:[%s1 + $0x6d8] sm:$0xff]
  %v395 = vld [vmem:[%s1 + $0x6e0] sm:$0xf]
  %v396 = vld [vmem:[%s1 + $0x6e4] sm:$0xff]
  %v397 = vld [vmem:[%s1 + $0x6ec] sm:$0xf]
  %v398 = vld [vmem:[%s1 + $0x6f0] sm:$0xff]
  %v399 = vld [vmem:[%s1 + $0x6f8] sm:$0xf]
  %v400 = vld [vmem:[%s1 + $0x6fc] sm:$0xff]
  %v401 = vld [vmem:[%s1 + $0x704] sm:$0xf]
  %v402 = vld [vmem:[%s1 + $0x708] sm:$0xff]
  %v403 = vld [vmem:[%s1 + $0x710] sm:$0xf]
  %v404 = vld [vmem:[%s1 + $0x714] sm:$0xff]
  %v405 = vld [vmem:[%s1 + $0x71c] sm:$0xf]
  %v406 = vld [vmem:[%s1 + $0x720] sm:$0xff]
  %v407 = vld [vmem:[%s1 + $0x728] sm:$0xf]
  %v408 = vld [vmem:[%s1 + $0x72c] sm:$0xff]
  %v409 = vld [vmem:[%s1 + $0x734] sm:$0xf]
  %v410 = vld [vmem:[%s1 + $0x738] sm:$0xff]
  %v411 = vld [vmem:[%s1 + $0x740] sm:$0xf]
  %v412 = vld [vmem:[%s1 + $0x744] sm:$0xff]
  %v413 = vld [vmem:[%s1 + $0x74c] sm:$0xf]
  %v414 = vld [vmem:[%s1 + $0x750] sm:$0xff]
  %v415 = vld [vmem:[%s1 + $0x758] sm:$0xf]
  %v416 = vld [vmem:[%s1 + $0x75c] sm:$0xff]
  %v417 = vld [vmem:[%s1 + $0x764] sm:$0xf]
  %v418 = vld [vmem:[%s1 + $0x768] sm:$0xff]
  %v419 = vld [vmem:[%s1 + $0x770] sm:$0xf]
  %v420 = vld [vmem:[%s1 + $0x774] sm:$0xff]
  %v421 = vld [vmem:[%s1 + $0x77c] sm:$0xf]
  %v502 = vunpack.c.l.b16 %v22
  %v503 = vunpack.c.h.b16 %v22
  %v504 = vunpack.c.l.b16 %v23
  %v505 = vunpack.c.h.b16 %v23
  %v506 = vunpack.c.l.b16 %v24
  %v507 = vunpack.c.h.b16 %v24
  %v508 = vunpack.c.l.b16 %v25
  %v509 = vunpack.c.h.b16 %v25
  %v510 = vunpack.c.l.b16 %v26
  %v511 = vunpack.c.h.b16 %v26
  %v512 = vunpack.c.l.b16 %v27
  %v513 = vunpack.c.h.b16 %v27
  %v514 = vunpack.c.l.b16 %v28
  %v515 = vunpack.c.h.b16 %v28
  %v516 = vunpack.c.l.b16 %v29
  %v517 = vunpack.c.h.b16 %v29
  %v518 = vunpack.c.l.b16 %v30
  %v519 = vunpack.c.h.b16 %v30
  %v520 = vunpack.c.l.b16 %v31
  %v521 = vunpack.c.h.b16 %v31
  %v522 = vunpack.c.l.b16 %v32
  %v523 = vunpack.c.h.b16 %v32
  %v524 = vunpack.c.l.b16 %v33
  %v525 = vunpack.c.h.b16 %v33
  %v526 = vunpack.c.l.b16 %v34
  %v527 = vunpack.c.h.b16 %v34
  %v528 = vunpack.c.l.b16 %v35
  %v529 = vunpack.c.h.b16 %v35
  %v530 = vunpack.c.l.b16 %v36
  %v531 = vunpack.c.h.b16 %v36
  %v532 = vunpack.c.l.b16 %v37
  %v533 = vunpack.c.h.b16 %v37
  %v534 = vunpack.c.l.b16 %v38
  %v535 = vunpack.c.h.b16 %v38
  %v536 = vunpack.c.l.b16 %v39
  %v537 = vunpack.c.h.b16 %v39
  %v538 = vunpack.c.l.b16 %v40
  %v539 = vunpack.c.h.b16 %v40
  %v540 = vunpack.c.l.b16 %v41
  %v541 = vunpack.c.h.b16 %v41
  %v542 = vunpack.c.l.b16 %v42
  %v543 = vunpack.c.h.b16 %v42
  %v544 = vunpack.c.l.b16 %v43
  %v545 = vunpack.c.h.b16 %v43
  %v546 = vunpack.c.l.b16 %v44
  %v547 = vunpack.c.h.b16 %v44
  %v548 = vunpack.c.l.b16 %v45
  %v549 = vunpack.c.h.b16 %v45
  %v550 = vunpack.c.l.b16 %v46
  %v551 = vunpack.c.h.b16 %v46
  %v552 = vunpack.c.l.b16 %v47
  %v553 = vunpack.c.h.b16 %v47
  %v554 = vunpack.c.l.b16 %v48
  %v555 = vunpack.c.h.b16 %v48
  %v556 = vunpack.c.l.b16 %v49
  %v557 = vunpack.c.h.b16 %v49
  %v558 = vunpack.c.l.b16 %v50
  %v559 = vunpack.c.h.b16 %v50
  %v560 = vunpack.c.l.b16 %v51
  %v561 = vunpack.c.h.b16 %v51
  %v562 = vunpack.c.l.b16 %v52
  %v563 = vunpack.c.h.b16 %v52
  %v564 = vunpack.c.l.b16 %v53
  %v565 = vunpack.c.h.b16 %v53
  %v566 = vunpack.c.l.b16 %v54
  %v567 = vunpack.c.h.b16 %v54
  %v568 = vunpack.c.l.b16 %v55
  %v569 = vunpack.c.h.b16 %v55
  %v570 = vunpack.c.l.b16 %v56
  %v571 = vunpack.c.h.b16 %v56
  %v572 = vunpack.c.l.b16 %v57
  %v573 = vunpack.c.h.b16 %v57
  %v574 = vunpack.c.l.b16 %v58
  %v575 = vunpack.c.h.b16 %v58
  %v576 = vunpack.c.l.b16 %v59
  %v577 = vunpack.c.h.b16 %v59
  %v578 = vunpack.c.l.b16 %v60
  %v579 = vunpack.c.h.b16 %v60
  %v580 = vunpack.c.l.b16 %v61
  %v581 = vunpack.c.h.b16 %v61
  %v582 = vunpack.c.l.b16 %v62
  %v583 = vunpack.c.h.b16 %v62
  %v584 = vunpack.c.l.b16 %v63
  %v585 = vunpack.c.h.b16 %v63
  %v586 = vunpack.c.l.b16 %v64
  %v587 = vunpack.c.h.b16 %v64
  %v588 = vunpack.c.l.b16 %v65
  %v589 = vunpack.c.h.b16 %v65
  %v590 = vunpack.c.l.b16 %v66
  %v591 = vunpack.c.h.b16 %v66
  %v592 = vunpack.c.l.b16 %v67
  %v593 = vunpack.c.h.b16 %v67
  %v594 = vunpack.c.l.b16 %v68
  %v595 = vunpack.c.h.b16 %v68
  %v596 = vunpack.c.l.b16 %v69
  %v597 = vunpack.c.h.b16 %v69
  %v598 = vunpack.c.l.b16 %v70
  %v599 = vunpack.c.h.b16 %v70
  %v600 = vunpack.c.l.b16 %v71
  %v601 = vunpack.c.h.b16 %v71
  %v602 = vunpack.c.l.b16 %v72
  %v603 = vunpack.c.h.b16 %v72
  %v604 = vunpack.c.l.b16 %v73
  %v605 = vunpack.c.h.b16 %v73
  %v606 = vunpack.c.l.b16 %v74
  %v607 = vunpack.c.h.b16 %v74
  %v608 = vunpack.c.l.b16 %v75
  %v609 = vunpack.c.h.b16 %v75
  %v610 = vunpack.c.l.b16 %v76
  %v611 = vunpack.c.h.b16 %v76
  %v612 = vunpack.c.l.b16 %v77
  %v613 = vunpack.c.h.b16 %v77
  %v614 = vunpack.c.l.b16 %v78
  %v615 = vunpack.c.h.b16 %v78
  %v616 = vunpack.c.l.b16 %v79
  %v617 = vunpack.c.h.b16 %v79
  %v618 = vunpack.c.l.b16 %v80
  %v619 = vunpack.c.h.b16 %v80
  %v620 = vunpack.c.l.b16 %v81
  %v621 = vunpack.c.h.b16 %v81
  %v622 = vunpack.c.l.b16 %v82
  %v623 = vunpack.c.h.b16 %v82
  %v624 = vunpack.c.l.b16 %v83
  %v625 = vunpack.c.h.b16 %v83
  %v626 = vunpack.c.l.b16 %v84
  %v627 = vunpack.c.h.b16 %v84
  %v628 = vunpack.c.l.b16 %v85
  %v629 = vunpack.c.h.b16 %v85
  %v630 = vunpack.c.l.b16 %v86
  %v631 = vunpack.c.h.b16 %v86
  %v632 = vunpack.c.l.b16 %v87
  %v633 = vunpack.c.h.b16 %v87
  %v634 = vunpack.c.l.b16 %v88
  %v635 = vunpack.c.h.b16 %v88
  %v636 = vunpack.c.l.b16 %v89
  %v637 = vunpack.c.h.b16 %v89
  %v638 = vunpack.c.l.b16 %v90
  %v639 = vunpack.c.h.b16 %v90
  %v640 = vunpack.c.l.b16 %v91
  %v641 = vunpack.c.h.b16 %v91
  %v642 = vunpack.c.l.b16 %v92
  %v643 = vunpack.c.h.b16 %v92
  %v644 = vunpack.c.l.b16 %v93
  %v645 = vunpack.c.h.b16 %v93
  %v646 = vunpack.c.l.b16 %v94
  %v647 = vunpack.c.h.b16 %v94
  %v648 = vunpack.c.l.b16 %v95
  %v649 = vunpack.c.h.b16 %v95
  %v650 = vunpack.c.l.b16 %v96
  %v651 = vunpack.c.h.b16 %v96
  %v652 = vunpack.c.l.b16 %v97
  %v653 = vunpack.c.h.b16 %v97
  %v654 = vunpack.c.l.b16 %v98
  %v655 = vunpack.c.h.b16 %v98
  %v656 = vunpack.c.l.b16 %v99
  %v657 = vunpack.c.h.b16 %v99
  %v658 = vunpack.c.l.b16 %v100
  %v659 = vunpack.c.h.b16 %v100
  %v660 = vunpack.c.l.b16 %v101
  %v661 = vunpack.c.h.b16 %v101
  %v662 = vpack.c.b16 %v512, %v502
  %v663 = vpack.c.b16 %v513, %v503
  %v664 = vpack.c.b16 %v514, %v504
  %v665 = vpack.c.b16 %v515, %v505
  %v666 = vpack.c.b16 %v516, %v506
  %v667 = vpack.c.b16 %v517, %v507
  %v668 = vpack.c.b16 %v518, %v508
  %v669 = vpack.c.b16 %v519, %v509
  %v670 = vpack.c.b16 %v520, %v510
  %v671 = vpack.c.b16 %v521, %v511
  %v672 = vpack.c.b16 %v532, %v522
  %v673 = vpack.c.b16 %v533, %v523
  %v674 = vpack.c.b16 %v534, %v524
  %v675 = vpack.c.b16 %v535, %v525
  %v676 = vpack.c.b16 %v536, %v526
  %v677 = vpack.c.b16 %v537, %v527
  %v678 = vpack.c.b16 %v538, %v528
  %v679 = vpack.c.b16 %v539, %v529
  %v680 = vpack.c.b16 %v540, %v530
  %v681 = vpack.c.b16 %v541, %v531
  %v682 = vpack.c.b16 %v552, %v542
  %v683 = vpack.c.b16 %v553, %v543
  %v684 = vpack.c.b16 %v554, %v544
  %v685 = vpack.c.b16 %v555, %v545
  %v686 = vpack.c.b16 %v556, %v546
  %v687 = vpack.c.b16 %v557, %v547
  %v688 = vpack.c.b16 %v558, %v548
  %v689 = vpack.c.b16 %v559, %v549
  %v690 = vpack.c.b16 %v560, %v550
  %v691 = vpack.c.b16 %v561, %v551
  %v692 = vpack.c.b16 %v572, %v562
  %v693 = vpack.c.b16 %v573, %v563
  %v694 = vpack.c.b16 %v574, %v564
  %v695 = vpack.c.b16 %v575, %v565
  %v696 = vpack.c.b16 %v576, %v566
  %v697 = vpack.c.b16 %v577, %v567
  %v698 = vpack.c.b16 %v578, %v568
  %v699 = vpack.c.b16 %v579, %v569
  %v700 = vpack.c.b16 %v580, %v570
  %v701 = vpack.c.b16 %v581, %v571
  %v702 = vpack.c.b16 %v592, %v582
  %v703 = vpack.c.b16 %v593, %v583
  %v704 = vpack.c.b16 %v594, %v584
  %v705 = vpack.c.b16 %v595, %v585
  %v706 = vpack.c.b16 %v596, %v586
  %v707 = vpack.c.b16 %v597, %v587
  %v708 = vpack.c.b16 %v598, %v588
  %v709 = vpack.c.b16 %v599, %v589
  %v710 = vpack.c.b16 %v600, %v590
  %v711 = vpack.c.b16 %v601, %v591
  %v712 = vpack.c.b16 %v612, %v602
  %v713 = vpack.c.b16 %v613, %v603
  %v714 = vpack.c.b16 %v614, %v604
  %v715 = vpack.c.b16 %v615, %v605
  %v716 = vpack.c.b16 %v616, %v606
  %v717 = vpack.c.b16 %v617, %v607
  %v718 = vpack.c.b16 %v618, %v608
  %v719 = vpack.c.b16 %v619, %v609
  %v720 = vpack.c.b16 %v620, %v610
  %v721 = vpack.c.b16 %v621, %v611
  %v722 = vpack.c.b16 %v632, %v622
  %v723 = vpack.c.b16 %v633, %v623
  %v724 = vpack.c.b16 %v634, %v624
  %v725 = vpack.c.b16 %v635, %v625
  %v726 = vpack.c.b16 %v636, %v626
  %v727 = vpack.c.b16 %v637, %v627
  %v728 = vpack.c.b16 %v638, %v628
  %v729 = vpack.c.b16 %v639, %v629
  %v730 = vpack.c.b16 %v640, %v630
  %v731 = vpack.c.b16 %v641, %v631
  %v732 = vpack.c.b16 %v652, %v642
  %v733 = vpack.c.b16 %v653, %v643
  %v734 = vpack.c.b16 %v654, %v644
  %v735 = vpack.c.b16 %v655, %v645
  %v736 = vpack.c.b16 %v656, %v646
  %v737 = vpack.c.b16 %v657, %v647
  %v738 = vpack.c.b16 %v658, %v648
  %v739 = vpack.c.b16 %v659, %v649
  %v740 = vpack.c.b16 %v660, %v650
  %v741 = vpack.c.b16 %v661, %v651
  %v1142 = vunpack.c.l.b16 %v102
  %v1143 = vunpack.c.h.b16 %v102
  %v1144 = vunpack.c.l.b16 %v103
  %v1145 = vunpack.c.l.b16 %v104
  %v1146 = vunpack.c.h.b16 %v104
  %v1147 = vunpack.c.l.b16 %v105
  %v1148 = vunpack.c.l.b16 %v106
  %v1149 = vunpack.c.h.b16 %v106
  %v1150 = vunpack.c.l.b16 %v107
  %v1151 = vunpack.c.l.b16 %v108
  %v1152 = vunpack.c.h.b16 %v108
  %v1153 = vunpack.c.l.b16 %v109
  %v1154 = vunpack.c.l.b16 %v110
  %v1155 = vunpack.c.h.b16 %v110
  %v1156 = vunpack.c.l.b16 %v111
  %v1157 = vunpack.c.l.b16 %v112
  %v1158 = vunpack.c.h.b16 %v112
  %v1159 = vunpack.c.l.b16 %v113
  %v1160 = vunpack.c.l.b16 %v114
  %v1161 = vunpack.c.h.b16 %v114
  %v1162 = vunpack.c.l.b16 %v115
  %v1163 = vunpack.c.l.b16 %v116
  %v1164 = vunpack.c.h.b16 %v116
  %v1165 = vunpack.c.l.b16 %v117
  %v1166 = vunpack.c.l.b16 %v118
  %v1167 = vunpack.c.h.b16 %v118
  %v1168 = vunpack.c.l.b16 %v119
  %v1169 = vunpack.c.l.b16 %v120
  %v1170 = vunpack.c.h.b16 %v120
  %v1171 = vunpack.c.l.b16 %v121
  %v1172 = vunpack.c.l.b16 %v122
  %v1173 = vunpack.c.h.b16 %v122
  %v1174 = vunpack.c.l.b16 %v123
  %v1175 = vunpack.c.l.b16 %v124
  %v1176 = vunpack.c.h.b16 %v124
  %v1177 = vunpack.c.l.b16 %v125
  %v1178 = vunpack.c.l.b16 %v126
  %v1179 = vunpack.c.h.b16 %v126
  %v1180 = vunpack.c.l.b16 %v127
  %v1181 = vunpack.c.l.b16 %v128
  %v1182 = vunpack.c.h.b16 %v128
  %v1183 = vunpack.c.l.b16 %v129
  %v1184 = vunpack.c.l.b16 %v130
  %v1185 = vunpack.c.h.b16 %v130
  %v1186 = vunpack.c.l.b16 %v131
  %v1187 = vunpack.c.l.b16 %v132
  %v1188 = vunpack.c.h.b16 %v132
  %v1189 = vunpack.c.l.b16 %v133
  %v1190 = vunpack.c.l.b16 %v134
  %v1191 = vunpack.c.h.b16 %v134
  %v1192 = vunpack.c.l.b16 %v135
  %v1193 = vunpack.c.l.b16 %v136
  %v1194 = vunpack.c.h.b16 %v136
  %v1195 = vunpack.c.l.b16 %v137
  %v1196 = vunpack.c.l.b16 %v138
  %v1197 = vunpack.c.h.b16 %v138
  %v1198 = vunpack.c.l.b16 %v139
  %v1199 = vunpack.c.l.b16 %v140
  %v1200 = vunpack.c.h.b16 %v140
  %v1201 = vunpack.c.l.b16 %v141
  %v1202 = vunpack.c.l.b16 %v142
  %v1203 = vunpack.c.h.b16 %v142
  %v1204 = vunpack.c.l.b16 %v143
  %v1205 = vunpack.c.l.b16 %v144
  %v1206 = vunpack.c.h.b16 %v144
  %v1207 = vunpack.c.l.b16 %v145
  %v1208 = vunpack.c.l.b16 %v146
  %v1209 = vunpack.c.h.b16 %v146
  %v1210 = vunpack.c.l.b16 %v147
  %v1211 = vunpack.c.l.b16 %v148
  %v1212 = vunpack.c.h.b16 %v148
  %v1213 = vunpack.c.l.b16 %v149
  %v1214 = vunpack.c.l.b16 %v150
  %v1215 = vunpack.c.h.b16 %v150
  %v1216 = vunpack.c.l.b16 %v151
  %v1217 = vunpack.c.l.b16 %v152
  %v1218 = vunpack.c.h.b16 %v152
  %v1219 = vunpack.c.l.b16 %v153
  %v1220 = vunpack.c.l.b16 %v154
  %v1221 = vunpack.c.h.b16 %v154
  %v1222 = vunpack.c.l.b16 %v155
  %v1223 = vunpack.c.l.b16 %v156
  %v1224 = vunpack.c.h.b16 %v156
  %v1225 = vunpack.c.l.b16 %v157
  %v1226 = vunpack.c.l.b16 %v158
  %v1227 = vunpack.c.h.b16 %v158
  %v1228 = vunpack.c.l.b16 %v159
  %v1229 = vunpack.c.l.b16 %v160
  %v1230 = vunpack.c.h.b16 %v160
  %v1231 = vunpack.c.l.b16 %v161
  %v1232 = vunpack.c.l.b16 %v162
  %v1233 = vunpack.c.h.b16 %v162
  %v1234 = vunpack.c.l.b16 %v163
  %v1235 = vunpack.c.l.b16 %v164
  %v1236 = vunpack.c.h.b16 %v164
  %v1237 = vunpack.c.l.b16 %v165
  %v1238 = vunpack.c.l.b16 %v166
  %v1239 = vunpack.c.h.b16 %v166
  %v1240 = vunpack.c.l.b16 %v167
  %v1241 = vunpack.c.l.b16 %v168
  %v1242 = vunpack.c.h.b16 %v168
  %v1243 = vunpack.c.l.b16 %v169
  %v1244 = vunpack.c.l.b16 %v170
  %v1245 = vunpack.c.h.b16 %v170
  %v1246 = vunpack.c.l.b16 %v171
  %v1247 = vunpack.c.l.b16 %v172
  %v1248 = vunpack.c.h.b16 %v172
  %v1249 = vunpack.c.l.b16 %v173
  %v1250 = vunpack.c.l.b16 %v174
  %v1251 = vunpack.c.h.b16 %v174
  %v1252 = vunpack.c.l.b16 %v175
  %v1253 = vunpack.c.l.b16 %v176
  %v1254 = vunpack.c.h.b16 %v176
  %v1255 = vunpack.c.l.b16 %v177
  %v1256 = vunpack.c.l.b16 %v178
  %v1257 = vunpack.c.h.b16 %v178
  %v1258 = vunpack.c.l.b16 %v179
  %v1259 = vunpack.c.l.b16 %v180
  %v1260 = vunpack.c.h.b16 %v180
  %v1261 = vunpack.c.l.b16 %v181
  %v1262 = vunpack.c.l.b16 %v182
  %v1263 = vunpack.c.h.b16 %v182
  %v1264 = vunpack.c.l.b16 %v183
  %v1265 = vunpack.c.l.b16 %v184
  %v1266 = vunpack.c.h.b16 %v184
  %v1267 = vunpack.c.l.b16 %v185
  %v1268 = vunpack.c.l.b16 %v186
  %v1269 = vunpack.c.h.b16 %v186
  %v1270 = vunpack.c.l.b16 %v187
  %v1271 = vunpack.c.l.b16 %v188
  %v1272 = vunpack.c.h.b16 %v188
  %v1273 = vunpack.c.l.b16 %v189
  %v1274 = vunpack.c.l.b16 %v190
  %v1275 = vunpack.c.h.b16 %v190
  %v1276 = vunpack.c.l.b16 %v191
  %v1277 = vunpack.c.l.b16 %v192
  %v1278 = vunpack.c.h.b16 %v192
  %v1279 = vunpack.c.l.b16 %v193
  %v1280 = vunpack.c.l.b16 %v194
  %v1281 = vunpack.c.h.b16 %v194
  %v1282 = vunpack.c.l.b16 %v195
  %v1283 = vunpack.c.l.b16 %v196
  %v1284 = vunpack.c.h.b16 %v196
  %v1285 = vunpack.c.l.b16 %v197
  %v1286 = vunpack.c.l.b16 %v198
  %v1287 = vunpack.c.h.b16 %v198
  %v1288 = vunpack.c.l.b16 %v199
  %v1289 = vunpack.c.l.b16 %v200
  %v1290 = vunpack.c.h.b16 %v200
  %v1291 = vunpack.c.l.b16 %v201
  %v1292 = vunpack.c.l.b16 %v202
  %v1293 = vunpack.c.h.b16 %v202
  %v1294 = vunpack.c.l.b16 %v203
  %v1295 = vunpack.c.l.b16 %v204
  %v1296 = vunpack.c.h.b16 %v204
  %v1297 = vunpack.c.l.b16 %v205
  %v1298 = vunpack.c.l.b16 %v206
  %v1299 = vunpack.c.h.b16 %v206
  %v1300 = vunpack.c.l.b16 %v207
  %v1301 = vunpack.c.l.b16 %v208
  %v1302 = vunpack.c.h.b16 %v208
  %v1303 = vunpack.c.l.b16 %v209
  %v1304 = vunpack.c.l.b16 %v210
  %v1305 = vunpack.c.h.b16 %v210
  %v1306 = vunpack.c.l.b16 %v211
  %v1307 = vunpack.c.l.b16 %v212
  %v1308 = vunpack.c.h.b16 %v212
  %v1309 = vunpack.c.l.b16 %v213
  %v1310 = vunpack.c.l.b16 %v214
  %v1311 = vunpack.c.h.b16 %v214
  %v1312 = vunpack.c.l.b16 %v215
  %v1313 = vunpack.c.l.b16 %v216
  %v1314 = vunpack.c.h.b16 %v216
  %v1315 = vunpack.c.l.b16 %v217
  %v1316 = vunpack.c.l.b16 %v218
  %v1317 = vunpack.c.h.b16 %v218
  %v1318 = vunpack.c.l.b16 %v219
  %v1319 = vunpack.c.l.b16 %v220
  %v1320 = vunpack.c.h.b16 %v220
  %v1321 = vunpack.c.l.b16 %v221
  %v1322 = vunpack.c.l.b16 %v222
  %v1323 = vunpack.c.h.b16 %v222
  %v1324 = vunpack.c.l.b16 %v223
  %v1325 = vunpack.c.l.b16 %v224
  %v1326 = vunpack.c.h.b16 %v224
  %v1327 = vunpack.c.l.b16 %v225
  %v1328 = vunpack.c.l.b16 %v226
  %v1329 = vunpack.c.h.b16 %v226
  %v1330 = vunpack.c.l.b16 %v227
  %v1331 = vunpack.c.l.b16 %v228
  %v1332 = vunpack.c.h.b16 %v228
  %v1333 = vunpack.c.l.b16 %v229
  %v1334 = vunpack.c.l.b16 %v230
  %v1335 = vunpack.c.h.b16 %v230
  %v1336 = vunpack.c.l.b16 %v231
  %v1337 = vunpack.c.l.b16 %v232
  %v1338 = vunpack.c.h.b16 %v232
  %v1339 = vunpack.c.l.b16 %v233
  %v1340 = vunpack.c.l.b16 %v234
  %v1341 = vunpack.c.h.b16 %v234
  %v1342 = vunpack.c.l.b16 %v235
  %v1343 = vunpack.c.l.b16 %v236
  %v1344 = vunpack.c.h.b16 %v236
  %v1345 = vunpack.c.l.b16 %v237
  %v1346 = vunpack.c.l.b16 %v238
  %v1347 = vunpack.c.h.b16 %v238
  %v1348 = vunpack.c.l.b16 %v239
  %v1349 = vunpack.c.l.b16 %v240
  %v1350 = vunpack.c.h.b16 %v240
  %v1351 = vunpack.c.l.b16 %v241
  %v1352 = vunpack.c.l.b16 %v242
  %v1353 = vunpack.c.h.b16 %v242
  %v1354 = vunpack.c.l.b16 %v243
  %v1355 = vunpack.c.l.b16 %v244
  %v1356 = vunpack.c.h.b16 %v244
  %v1357 = vunpack.c.l.b16 %v245
  %v1358 = vunpack.c.l.b16 %v246
  %v1359 = vunpack.c.h.b16 %v246
  %v1360 = vunpack.c.l.b16 %v247
  %v1361 = vunpack.c.l.b16 %v248
  %v1362 = vunpack.c.h.b16 %v248
  %v1363 = vunpack.c.l.b16 %v249
  %v1364 = vunpack.c.l.b16 %v250
  %v1365 = vunpack.c.h.b16 %v250
  %v1366 = vunpack.c.l.b16 %v251
  %v1367 = vunpack.c.l.b16 %v252
  %v1368 = vunpack.c.h.b16 %v252
  %v1369 = vunpack.c.l.b16 %v253
  %v1370 = vunpack.c.l.b16 %v254
  %v1371 = vunpack.c.h.b16 %v254
  %v1372 = vunpack.c.l.b16 %v255
  %v1373 = vunpack.c.l.b16 %v256
  %v1374 = vunpack.c.h.b16 %v256
  %v1375 = vunpack.c.l.b16 %v257
  %v1376 = vunpack.c.l.b16 %v258
  %v1377 = vunpack.c.h.b16 %v258
  %v1378 = vunpack.c.l.b16 %v259
  %v1379 = vunpack.c.l.b16 %v260
  %v1380 = vunpack.c.h.b16 %v260
  %v1381 = vunpack.c.l.b16 %v261
  %v1382 = vunpack.c.l.b16 %v262
  %v1383 = vunpack.c.h.b16 %v262
  %v1384 = vunpack.c.l.b16 %v263
  %v1385 = vunpack.c.l.b16 %v264
  %v1386 = vunpack.c.h.b16 %v264
  %v1387 = vunpack.c.l.b16 %v265
  %v1388 = vunpack.c.l.b16 %v266
  %v1389 = vunpack.c.h.b16 %v266
  %v1390 = vunpack.c.l.b16 %v267
  %v1391 = vunpack.c.l.b16 %v268
  %v1392 = vunpack.c.h.b16 %v268
  %v1393 = vunpack.c.l.b16 %v269
  %v1394 = vunpack.c.l.b16 %v270
  %v1395 = vunpack.c.h.b16 %v270
  %v1396 = vunpack.c.l.b16 %v271
  %v1397 = vunpack.c.l.b16 %v272
  %v1398 = vunpack.c.h.b16 %v272
  %v1399 = vunpack.c.l.b16 %v273
  %v1400 = vunpack.c.l.b16 %v274
  %v1401 = vunpack.c.h.b16 %v274
  %v1402 = vunpack.c.l.b16 %v275
  %v1403 = vunpack.c.l.b16 %v276
  %v1404 = vunpack.c.h.b16 %v276
  %v1405 = vunpack.c.l.b16 %v277
  %v1406 = vunpack.c.l.b16 %v278
  %v1407 = vunpack.c.h.b16 %v278
  %v1408 = vunpack.c.l.b16 %v279
  %v1409 = vunpack.c.l.b16 %v280
  %v1410 = vunpack.c.h.b16 %v280
  %v1411 = vunpack.c.l.b16 %v281
  %v1412 = vunpack.c.l.b16 %v282
  %v1413 = vunpack.c.h.b16 %v282
  %v1414 = vunpack.c.l.b16 %v283
  %v1415 = vunpack.c.l.b16 %v284
  %v1416 = vunpack.c.h.b16 %v284
  %v1417 = vunpack.c.l.b16 %v285
  %v1418 = vunpack.c.l.b16 %v286
  %v1419 = vunpack.c.h.b16 %v286
  %v1420 = vunpack.c.l.b16 %v287
  %v1421 = vunpack.c.l.b16 %v288
  %v1422 = vunpack.c.h.b16 %v288
  %v1423 = vunpack.c.l.b16 %v289
  %v1424 = vunpack.c.l.b16 %v290
  %v1425 = vunpack.c.h.b16 %v290
  %v1426 = vunpack.c.l.b16 %v291
  %v1427 = vunpack.c.l.b16 %v292
  %v1428 = vunpack.c.h.b16 %v292
  %v1429 = vunpack.c.l.b16 %v293
  %v1430 = vunpack.c.l.b16 %v294
  %v1431 = vunpack.c.h.b16 %v294
  %v1432 = vunpack.c.l.b16 %v295
  %v1433 = vunpack.c.l.b16 %v296
  %v1434 = vunpack.c.h.b16 %v296
  %v1435 = vunpack.c.l.b16 %v297
  %v1436 = vunpack.c.l.b16 %v298
  %v1437 = vunpack.c.h.b16 %v298
  %v1438 = vunpack.c.l.b16 %v299
  %v1439 = vunpack.c.l.b16 %v300
  %v1440 = vunpack.c.h.b16 %v300
  %v1441 = vunpack.c.l.b16 %v301
  %v1442 = vunpack.c.l.b16 %v302
  %v1443 = vunpack.c.h.b16 %v302
  %v1444 = vunpack.c.l.b16 %v303
  %v1445 = vunpack.c.l.b16 %v304
  %v1446 = vunpack.c.h.b16 %v304
  %v1447 = vunpack.c.l.b16 %v305
  %v1448 = vunpack.c.l.b16 %v306
  %v1449 = vunpack.c.h.b16 %v306
  %v1450 = vunpack.c.l.b16 %v307
  %v1451 = vunpack.c.l.b16 %v308
  %v1452 = vunpack.c.h.b16 %v308
  %v1453 = vunpack.c.l.b16 %v309
  %v1454 = vunpack.c.l.b16 %v310
  %v1455 = vunpack.c.h.b16 %v310
  %v1456 = vunpack.c.l.b16 %v311
  %v1457 = vunpack.c.l.b16 %v312
  %v1458 = vunpack.c.h.b16 %v312
  %v1459 = vunpack.c.l.b16 %v313
  %v1460 = vunpack.c.l.b16 %v314
  %v1461 = vunpack.c.h.b16 %v314
  %v1462 = vunpack.c.l.b16 %v315
  %v1463 = vunpack.c.l.b16 %v316
  %v1464 = vunpack.c.h.b16 %v316
  %v1465 = vunpack.c.l.b16 %v317
  %v1466 = vunpack.c.l.b16 %v318
  %v1467 = vunpack.c.h.b16 %v318
  %v1468 = vunpack.c.l.b16 %v319
  %v1469 = vunpack.c.l.b16 %v320
  %v1470 = vunpack.c.h.b16 %v320
  %v1471 = vunpack.c.l.b16 %v321
  %v1472 = vunpack.c.l.b16 %v322
  %v1473 = vunpack.c.h.b16 %v322
  %v1474 = vunpack.c.l.b16 %v323
  %v1475 = vunpack.c.l.b16 %v324
  %v1476 = vunpack.c.h.b16 %v324
  %v1477 = vunpack.c.l.b16 %v325
  %v1478 = vunpack.c.l.b16 %v326
  %v1479 = vunpack.c.h.b16 %v326
  %v1480 = vunpack.c.l.b16 %v327
  %v1481 = vunpack.c.l.b16 %v328
  %v1482 = vunpack.c.h.b16 %v328
  %v1483 = vunpack.c.l.b16 %v329
  %v1484 = vunpack.c.l.b16 %v330
  %v1485 = vunpack.c.h.b16 %v330
  %v1486 = vunpack.c.l.b16 %v331
  %v1487 = vunpack.c.l.b16 %v332
  %v1488 = vunpack.c.h.b16 %v332
  %v1489 = vunpack.c.l.b16 %v333
  %v1490 = vunpack.c.l.b16 %v334
  %v1491 = vunpack.c.h.b16 %v334
  %v1492 = vunpack.c.l.b16 %v335
  %v1493 = vunpack.c.l.b16 %v336
  %v1494 = vunpack.c.h.b16 %v336
  %v1495 = vunpack.c.l.b16 %v337
  %v1496 = vunpack.c.l.b16 %v338
  %v1497 = vunpack.c.h.b16 %v338
  %v1498 = vunpack.c.l.b16 %v339
  %v1499 = vunpack.c.l.b16 %v340
  %v1500 = vunpack.c.h.b16 %v340
  %v1501 = vunpack.c.l.b16 %v341
  %v1502 = vunpack.c.l.b16 %v342
  %v1503 = vunpack.c.h.b16 %v342
  %v1504 = vunpack.c.l.b16 %v343
  %v1505 = vunpack.c.l.b16 %v344
  %v1506 = vunpack.c.h.b16 %v344
  %v1507 = vunpack.c.l.b16 %v345
  %v1508 = vunpack.c.l.b16 %v346
  %v1509 = vunpack.c.h.b16 %v346
  %v1510 = vunpack.c.l.b16 %v347
  %v1511 = vunpack.c.l.b16 %v348
  %v1512 = vunpack.c.h.b16 %v348
  %v1513 = vunpack.c.l.b16 %v349
  %v1514 = vunpack.c.l.b16 %v350
  %v1515 = vunpack.c.h.b16 %v350
  %v1516 = vunpack.c.l.b16 %v351
  %v1517 = vunpack.c.l.b16 %v352
  %v1518 = vunpack.c.h.b16 %v352
  %v1519 = vunpack.c.l.b16 %v353
  %v1520 = vunpack.c.l.b16 %v354
  %v1521 = vunpack.c.h.b16 %v354
  %v1522 = vunpack.c.l.b16 %v355
  %v1523 = vunpack.c.l.b16 %v356
  %v1524 = vunpack.c.h.b16 %v356
  %v1525 = vunpack.c.l.b16 %v357
  %v1526 = vunpack.c.l.b16 %v358
  %v1527 = vunpack.c.h.b16 %v358
  %v1528 = vunpack.c.l.b16 %v359
  %v1529 = vunpack.c.l.b16 %v360
  %v1530 = vunpack.c.h.b16 %v360
  %v1531 = vunpack.c.l.b16 %v361
  %v1532 = vunpack.c.l.b16 %v362
  %v1533 = vunpack.c.h.b16 %v362
  %v1534 = vunpack.c.l.b16 %v363
  %v1535 = vunpack.c.l.b16 %v364
  %v1536 = vunpack.c.h.b16 %v364
  %v1537 = vunpack.c.l.b16 %v365
  %v1538 = vunpack.c.l.b16 %v366
  %v1539 = vunpack.c.h.b16 %v366
  %v1540 = vunpack.c.l.b16 %v367
  %v1541 = vunpack.c.l.b16 %v368
  %v1542 = vunpack.c.h.b16 %v368
  %v1543 = vunpack.c.l.b16 %v369
  %v1544 = vunpack.c.l.b16 %v370
  %v1545 = vunpack.c.h.b16 %v370
  %v1546 = vunpack.c.l.b16 %v371
  %v1547 = vunpack.c.l.b16 %v372
  %v1548 = vunpack.c.h.b16 %v372
  %v1549 = vunpack.c.l.b16 %v373
  %v1550 = vunpack.c.l.b16 %v374
  %v1551 = vunpack.c.h.b16 %v374
  %v1552 = vunpack.c.l.b16 %v375
  %v1553 = vunpack.c.l.b16 %v376
  %v1554 = vunpack.c.h.b16 %v376
  %v1555 = vunpack.c.l.b16 %v377
  %v1556 = vunpack.c.l.b16 %v378
  %v1557 = vunpack.c.h.b16 %v378
  %v1558 = vunpack.c.l.b16 %v379
  %v1559 = vunpack.c.l.b16 %v380
  %v1560 = vunpack.c.h.b16 %v380
  %v1561 = vunpack.c.l.b16 %v381
  %v1562 = vunpack.c.l.b16 %v382
  %v1563 = vunpack.c.h.b16 %v382
  %v1564 = vunpack.c.l.b16 %v383
  %v1565 = vunpack.c.l.b16 %v384
  %v1566 = vunpack.c.h.b16 %v384
  %v1567 = vunpack.c.l.b16 %v385
  %v1568 = vunpack.c.l.b16 %v386
  %v1569 = vunpack.c.h.b16 %v386
  %v1570 = vunpack.c.l.b16 %v387
  %v1571 = vunpack.c.l.b16 %v388
  %v1572 = vunpack.c.h.b16 %v388
  %v1573 = vunpack.c.l.b16 %v389
  %v1574 = vunpack.c.l.b16 %v390
  %v1575 = vunpack.c.h.b16 %v390
  %v1576 = vunpack.c.l.b16 %v391
  %v1577 = vunpack.c.l.b16 %v392
  %v1578 = vunpack.c.h.b16 %v392
  %v1579 = vunpack.c.l.b16 %v393
  %v1580 = vunpack.c.l.b16 %v394
  %v1581 = vunpack.c.h.b16 %v394
  %v1582 = vunpack.c.l.b16 %v395
  %v1583 = vunpack.c.l.b16 %v396
  %v1584 = vunpack.c.h.b16 %v396
  %v1585 = vunpack.c.l.b16 %v397
  %v1586 = vunpack.c.l.b16 %v398
  %v1587 = vunpack.c.h.b16 %v398
  %v1588 = vunpack.c.l.b16 %v399
  %v1589 = vunpack.c.l.b16 %v400
  %v1590 = vunpack.c.h.b16 %v400
  %v1591 = vunpack.c.l.b16 %v401
  %v1592 = vunpack.c.l.b16 %v402
  %v1593 = vunpack.c.h.b16 %v402
  %v1594 = vunpack.c.l.b16 %v403
  %v1595 = vunpack.c.l.b16 %v404
  %v1596 = vunpack.c.h.b16 %v404
  %v1597 = vunpack.c.l.b16 %v405
  %v1598 = vunpack.c.l.b16 %v406
  %v1599 = vunpack.c.h.b16 %v406
  %v1600 = vunpack.c.l.b16 %v407
  %v1601 = vunpack.c.l.b16 %v408
  %v1602 = vunpack.c.h.b16 %v408
  %v1603 = vunpack.c.l.b16 %v409
  %v1604 = vunpack.c.l.b16 %v410
  %v1605 = vunpack.c.h.b16 %v410
  %v1606 = vunpack.c.l.b16 %v411
  %v1607 = vunpack.c.l.b16 %v412
  %v1608 = vunpack.c.h.b16 %v412
  %v1609 = vunpack.c.l.b16 %v413
  %v1610 = vunpack.c.l.b16 %v414
  %v1611 = vunpack.c.h.b16 %v414
  %v1612 = vunpack.c.l.b16 %v415
  %v1613 = vunpack.c.l.b16 %v416
  %v1614 = vunpack.c.h.b16 %v416
  %v1615 = vunpack.c.l.b16 %v417
  %v1616 = vunpack.c.l.b16 %v418
  %v1617 = vunpack.c.h.b16 %v418
  %v1618 = vunpack.c.l.b16 %v419
  %v1619 = vunpack.c.l.b16 %v420
  %v1620 = vunpack.c.h.b16 %v420
  %v1621 = vunpack.c.l.b16 %v421
  %v1622 = vpack.c.b16 %v1145, %v1142
  %v1623 = vpack.c.b16 %v1146, %v1143
  %v1624 = vpack.c.b16 %v1147, %v1144
  %v1625 = vpack.c.b16 %v1151, %v1148
  %v1626 = vpack.c.b16 %v1152, %v1149
  %v1627 = vpack.c.b16 %v1153, %v1150
  %v1628 = vpack.c.b16 %v1157, %v1154
  %v1629 = vpack.c.b16 %v1158, %v1155
  %v1630 = vpack.c.b16 %v1159, %v1156
  %v1631 = vpack.c.b16 %v1163, %v1160
  %v1632 = vpack.c.b16 %v1164, %v1161
  %v1633 = vpack.c.b16 %v1165, %v1162
  %v1634 = vpack.c.b16 %v1169, %v1166
  %v1635 = vpack.c.b16 %v1170, %v1167
  %v1636 = vpack.c.b16 %v1171, %v1168
  %v1637 = vpack.c.b16 %v1175, %v1172
  %v1638 = vpack.c.b16 %v1176, %v1173
  %v1639 = vpack.c.b16 %v1177, %v1174
  %v1640 = vpack.c.b16 %v1181, %v1178
  %v1641 = vpack.c.b16 %v1182, %v1179
  %v1642 = vpack.c.b16 %v1183, %v1180
  %v1643 = vpack.c.b16 %v1187, %v1184
  %v1644 = vpack.c.b16 %v1188, %v1185
  %v1645 = vpack.c.b16 %v1189, %v1186
  %v1646 = vpack.c.b16 %v1193, %v1190
  %v1647 = vpack.c.b16 %v1194, %v1191
  %v1648 = vpack.c.b16 %v1195, %v1192
  %v1649 = vpack.c.b16 %v1199, %v1196
  %v1650 = vpack.c.b16 %v1200, %v1197
  %v1651 = vpack.c.b16 %v1201, %v1198
  %v1652 = vpack.c.b16 %v1205, %v1202
  %v1653 = vpack.c.b16 %v1206, %v1203
  %v1654 = vpack.c.b16 %v1207, %v1204
  %v1655 = vpack.c.b16 %v1211, %v1208
  %v1656 = vpack.c.b16 %v1212, %v1209
  %v1657 = vpack.c.b16 %v1213, %v1210
  %v1658 = vpack.c.b16 %v1217, %v1214
  %v1659 = vpack.c.b16 %v1218, %v1215
  %v1660 = vpack.c.b16 %v1219, %v1216
  %v1661 = vpack.c.b16 %v1223, %v1220
  %v1662 = vpack.c.b16 %v1224, %v1221
  %v1663 = vpack.c.b16 %v1225, %v1222
  %v1664 = vpack.c.b16 %v1229, %v1226
  %v1665 = vpack.c.b16 %v1230, %v1227
  %v1666 = vpack.c.b16 %v1231, %v1228
  %v1667 = vpack.c.b16 %v1235, %v1232
  %v1668 = vpack.c.b16 %v1236, %v1233
  %v1669 = vpack.c.b16 %v1237, %v1234
  %v1670 = vpack.c.b16 %v1241, %v1238
  %v1671 = vpack.c.b16 %v1242, %v1239
  %v1672 = vpack.c.b16 %v1243, %v1240
  %v1673 = vpack.c.b16 %v1247, %v1244
  %v1674 = vpack.c.b16 %v1248, %v1245
  %v1675 = vpack.c.b16 %v1249, %v1246
  %v1676 = vpack.c.b16 %v1253, %v1250
  %v1677 = vpack.c.b16 %v1254, %v1251
  %v1678 = vpack.c.b16 %v1255, %v1252
  %v1679 = vpack.c.b16 %v1259, %v1256
  %v1680 = vpack.c.b16 %v1260, %v1257
  %v1681 = vpack.c.b16 %v1261, %v1258
  %v1682 = vpack.c.b16 %v1265, %v1262
  %v1683 = vpack.c.b16 %v1266, %v1263
  %v1684 = vpack.c.b16 %v1267, %v1264
  %v1685 = vpack.c.b16 %v1271, %v1268
  %v1686 = vpack.c.b16 %v1272, %v1269
  %v1687 = vpack.c.b16 %v1273, %v1270
  %v1688 = vpack.c.b16 %v1277, %v1274
  %v1689 = vpack.c.b16 %v1278, %v1275
  %v1690 = vpack.c.b16 %v1279, %v1276
  %v1691 = vpack.c.b16 %v1283, %v1280
  %v1692 = vpack.c.b16 %v1284, %v1281
  %v1693 = vpack.c.b16 %v1285, %v1282
  %v1694 = vpack.c.b16 %v1289, %v1286
  %v1695 = vpack.c.b16 %v1290, %v1287
  %v1696 = vpack.c.b16 %v1291, %v1288
  %v1697 = vpack.c.b16 %v1295, %v1292
  %v1698 = vpack.c.b16 %v1296, %v1293
  %v1699 = vpack.c.b16 %v1297, %v1294
  %v1700 = vpack.c.b16 %v1301, %v1298
  %v1701 = vpack.c.b16 %v1302, %v1299
  %v1702 = vpack.c.b16 %v1303, %v1300
  %v1703 = vpack.c.b16 %v1307, %v1304
  %v1704 = vpack.c.b16 %v1308, %v1305
  %v1705 = vpack.c.b16 %v1309, %v1306
  %v1706 = vpack.c.b16 %v1313, %v1310
  %v1707 = vpack.c.b16 %v1314, %v1311
  %v1708 = vpack.c.b16 %v1315, %v1312
  %v1709 = vpack.c.b16 %v1319, %v1316
  %v1710 = vpack.c.b16 %v1320, %v1317
  %v1711 = vpack.c.b16 %v1321, %v1318
  %v1712 = vpack.c.b16 %v1325, %v1322
  %v1713 = vpack.c.b16 %v1326, %v1323
  %v1714 = vpack.c.b16 %v1327, %v1324
  %v1715 = vpack.c.b16 %v1331, %v1328
  %v1716 = vpack.c.b16 %v1332, %v1329
  %v1717 = vpack.c.b16 %v1333, %v1330
  %v1718 = vpack.c.b16 %v1337, %v1334
  %v1719 = vpack.c.b16 %v1338, %v1335
  %v1720 = vpack.c.b16 %v1339, %v1336
  %v1721 = vpack.c.b16 %v1343, %v1340
  %v1722 = vpack.c.b16 %v1344, %v1341
  %v1723 = vpack.c.b16 %v1345, %v1342
  %v1724 = vpack.c.b16 %v1349, %v1346
  %v1725 = vpack.c.b16 %v1350, %v1347
  %v1726 = vpack.c.b16 %v1351, %v1348
  %v1727 = vpack.c.b16 %v1355, %v1352
  %v1728 = vpack.c.b16 %v1356, %v1353
  %v1729 = vpack.c.b16 %v1357, %v1354
  %v1730 = vpack.c.b16 %v1361, %v1358
  %v1731 = vpack.c.b16 %v1362, %v1359
  %v1732 = vpack.c.b16 %v1363, %v1360
  %v1733 = vpack.c.b16 %v1367, %v1364
  %v1734 = vpack.c.b16 %v1368, %v1365
  %v1735 = vpack.c.b16 %v1369, %v1366
  %v1736 = vpack.c.b16 %v1373, %v1370
  %v1737 = vpack.c.b16 %v1374, %v1371
  %v1738 = vpack.c.b16 %v1375, %v1372
  %v1739 = vpack.c.b16 %v1379, %v1376
  %v1740 = vpack.c.b16 %v1380, %v1377
  %v1741 = vpack.c.b16 %v1381, %v1378
  %v1742 = vpack.c.b16 %v1385, %v1382
  %v1743 = vpack.c.b16 %v1386, %v1383
  %v1744 = vpack.c.b16 %v1387, %v1384
  %v1745 = vpack.c.b16 %v1391, %v1388
  %v1746 = vpack.c.b16 %v1392, %v1389
  %v1747 = vpack.c.b16 %v1393, %v1390
  %v1748 = vpack.c.b16 %v1397, %v1394
  %v1749 = vpack.c.b16 %v1398, %v1395
  %v1750 = vpack.c.b16 %v1399, %v1396
  %v1751 = vpack.c.b16 %v1403, %v1400
  %v1752 = vpack.c.b16 %v1404, %v1401
  %v1753 = vpack.c.b16 %v1405, %v1402
  %v1754 = vpack.c.b16 %v1409, %v1406
  %v1755 = vpack.c.b16 %v1410, %v1407
  %v1756 = vpack.c.b16 %v1411, %v1408
  %v1757 = vpack.c.b16 %v1415, %v1412
  %v1758 = vpack.c.b16 %v1416, %v1413
  %v1759 = vpack.c.b16 %v1417, %v1414
  %v1760 = vpack.c.b16 %v1421, %v1418
  %v1761 = vpack.c.b16 %v1422, %v1419
  %v1762 = vpack.c.b16 %v1423, %v1420
  %v1763 = vpack.c.b16 %v1427, %v1424
  %v1764 = vpack.c.b16 %v1428, %v1425
  %v1765 = vpack.c.b16 %v1429, %v1426
  %v1766 = vpack.c.b16 %v1433, %v1430
  %v1767 = vpack.c.b16 %v1434, %v1431
  %v1768 = vpack.c.b16 %v1435, %v1432
  %v1769 = vpack.c.b16 %v1439, %v1436
  %v1770 = vpack.c.b16 %v1440, %v1437
  %v1771 = vpack.c.b16 %v1441, %v1438
  %v1772 = vpack.c.b16 %v1445, %v1442
  %v1773 = vpack.c.b16 %v1446, %v1443
  %v1774 = vpack.c.b16 %v1447, %v1444
  %v1775 = vpack.c.b16 %v1451, %v1448
  %v1776 = vpack.c.b16 %v1452, %v1449
  %v1777 = vpack.c.b16 %v1453, %v1450
  %v1778 = vpack.c.b16 %v1457, %v1454
  %v1779 = vpack.c.b16 %v1458, %v1455
  %v1780 = vpack.c.b16 %v1459, %v1456
  %v1781 = vpack.c.b16 %v1463, %v1460
  %v1782 = vpack.c.b16 %v1464, %v1461
  %v1783 = vpack.c.b16 %v1465, %v1462
  %v1784 = vpack.c.b16 %v1469, %v1466
  %v1785 = vpack.c.b16 %v1470, %v1467
  %v1786 = vpack.c.b16 %v1471, %v1468
  %v1787 = vpack.c.b16 %v1475, %v1472
  %v1788 = vpack.c.b16 %v1476, %v1473
  %v1789 = vpack.c.b16 %v1477, %v1474
  %v1790 = vpack.c.b16 %v1481, %v1478
  %v1791 = vpack.c.b16 %v1482, %v1479
  %v1792 = vpack.c.b16 %v1483, %v1480
  %v1793 = vpack.c.b16 %v1487, %v1484
  %v1794 = vpack.c.b16 %v1488, %v1485
  %v1795 = vpack.c.b16 %v1489, %v1486
  %v1796 = vpack.c.b16 %v1493, %v1490
  %v1797 = vpack.c.b16 %v1494, %v1491
  %v1798 = vpack.c.b16 %v1495, %v1492
  %v1799 = vpack.c.b16 %v1499, %v1496
  %v1800 = vpack.c.b16 %v1500, %v1497
  %v1801 = vpack.c.b16 %v1501, %v1498
  %v1802 = vpack.c.b16 %v1505, %v1502
  %v1803 = vpack.c.b16 %v1506, %v1503
  %v1804 = vpack.c.b16 %v1507, %v1504
  %v1805 = vpack.c.b16 %v1511, %v1508
  %v1806 = vpack.c.b16 %v1512, %v1509
  %v1807 = vpack.c.b16 %v1513, %v1510
  %v1808 = vpack.c.b16 %v1517, %v1514
  %v1809 = vpack.c.b16 %v1518, %v1515
  %v1810 = vpack.c.b16 %v1519, %v1516
  %v1811 = vpack.c.b16 %v1523, %v1520
  %v1812 = vpack.c.b16 %v1524, %v1521
  %v1813 = vpack.c.b16 %v1525, %v1522
  %v1814 = vpack.c.b16 %v1529, %v1526
  %v1815 = vpack.c.b16 %v1530, %v1527
  %v1816 = vpack.c.b16 %v1531, %v1528
  %v1817 = vpack.c.b16 %v1535, %v1532
  %v1818 = vpack.c.b16 %v1536, %v1533
  %v1819 = vpack.c.b16 %v1537, %v1534
  %v1820 = vpack.c.b16 %v1541, %v1538
  %v1821 = vpack.c.b16 %v1542, %v1539
  %v1822 = vpack.c.b16 %v1543, %v1540
  %v1823 = vpack.c.b16 %v1547, %v1544
  %v1824 = vpack.c.b16 %v1548, %v1545
  %v1825 = vpack.c.b16 %v1549, %v1546
  %v1826 = vpack.c.b16 %v1553, %v1550
  %v1827 = vpack.c.b16 %v1554, %v1551
  %v1828 = vpack.c.b16 %v1555, %v1552
  %v1829 = vpack.c.b16 %v1559, %v1556
  %v1830 = vpack.c.b16 %v1560, %v1557
  %v1831 = vpack.c.b16 %v1561, %v1558
  %v1832 = vpack.c.b16 %v1565, %v1562
  %v1833 = vpack.c.b16 %v1566, %v1563
  %v1834 = vpack.c.b16 %v1567, %v1564
  %v1835 = vpack.c.b16 %v1571, %v1568
  %v1836 = vpack.c.b16 %v1572, %v1569
  %v1837 = vpack.c.b16 %v1573, %v1570
  %v1838 = vpack.c.b16 %v1577, %v1574
  %v1839 = vpack.c.b16 %v1578, %v1575
  %v1840 = vpack.c.b16 %v1579, %v1576
  %v1841 = vpack.c.b16 %v1583, %v1580
  %v1842 = vpack.c.b16 %v1584, %v1581
  %v1843 = vpack.c.b16 %v1585, %v1582
  %v1844 = vpack.c.b16 %v1589, %v1586
  %v1845 = vpack.c.b16 %v1590, %v1587
  %v1846 = vpack.c.b16 %v1591, %v1588
  %v1847 = vpack.c.b16 %v1595, %v1592
  %v1848 = vpack.c.b16 %v1596, %v1593
  %v1849 = vpack.c.b16 %v1597, %v1594
  %v1850 = vpack.c.b16 %v1601, %v1598
  %v1851 = vpack.c.b16 %v1602, %v1599
  %v1852 = vpack.c.b16 %v1603, %v1600
  %v1853 = vpack.c.b16 %v1607, %v1604
  %v1854 = vpack.c.b16 %v1608, %v1605
  %v1855 = vpack.c.b16 %v1609, %v1606
  %v1856 = vpack.c.b16 %v1613, %v1610
  %v1857 = vpack.c.b16 %v1614, %v1611
  %v1858 = vpack.c.b16 %v1615, %v1612
  %v1859 = vpack.c.b16 %v1619, %v1616
  %v1860 = vpack.c.b16 %v1620, %v1617
  %v1861 = vpack.c.b16 %v1621, %v1618
  %2102 = vmatpush.bf16.msra.mxu0 %v1643
  %2103 = vmatpush.bf16.msra.mxu0 %v1640
  %2104 = vmatpush.bf16.msra.mxu0 %v1637
  %2105 = vmatpush.bf16.msra.mxu0 %v1634
  %2106 = vmatpush.bf16.msra.mxu0 %v1631
  %2107 = vmatpush.bf16.msra.mxu0 %v1628
  %2108 = vmatpush.bf16.msra.mxu0 %v1625
  %2109 = vmatpush.bf16.msra.mxu0 %v1622
  %2110 = vmatmul.bf16.gmra.mxu0 %v662
  %v2111 = vpop.f32.mrf.mxu0
  %v2112 = vadd.f32 0.0, %v2111
  %v2113 = vpop.f32.mrf.mxu0
  %v2114 = vadd.f32 0.0, %v2113
  %2115 = vmatmul.bf16.gmra.mxu0 %v672
  %v2116 = vpop.f32.mrf.mxu0
  %v2117 = vadd.f32 0.0, %v2116
  %v2118 = vpop.f32.mrf.mxu0
  %v2119 = vadd.f32 0.0, %v2118
  %2120 = vmatmul.bf16.gmra.mxu0 %v682
  %v2121 = vpop.f32.mrf.mxu0
  %v2122 = vadd.f32 0.0, %v2121
  %v2123 = vpop.f32.mrf.mxu0
  %v2124 = vadd.f32 0.0, %v2123
  %2125 = vmatmul.bf16.gmra.mxu0 %v692
  %v2126 = vpop.f32.mrf.mxu0
  %v2127 = vadd.f32 0.0, %v2126
  %v2128 = vpop.f32.mrf.mxu0
  %v2129 = vadd.f32 0.0, %v2128
  %2130 = vmatmul.bf16.gmra.mxu0 %v702
  %v2131 = vpop.f32.mrf.mxu0
  %v2132 = vadd.f32 0.0, %v2131
  %v2133 = vpop.f32.mrf.mxu0
  %v2134 = vadd.f32 0.0, %v2133
  %2135 = vmatmul.bf16.gmra.mxu0 %v712
  %v2136 = vpop.f32.mrf.mxu0
  %v2137 = vadd.f32 0.0, %v2136
  %v2138 = vpop.f32.mrf.mxu0
  %v2139 = vadd.f32 0.0, %v2138
  %2140 = vmatmul.bf16.gmra.mxu0 %v722
  %v2141 = vpop.f32.mrf.mxu0
  %v2142 = vadd.f32 0.0, %v2141
  %v2143 = vpop.f32.mrf.mxu0
  %v2144 = vadd.f32 0.0, %v2143
  %2145 = vmatmul.bf16.gmra.mxu0 %v732
  %v2146 = vpop.f32.mrf.mxu0
  %v2147 = vadd.f32 0.0, %v2146
  %v2148 = vpop.f32.mrf.mxu0
  %v2149 = vadd.f32 0.0, %v2148
  %2150 = vdwg.mxu0
  %2151 = vmatpush.bf16.msra.mxu0 %v1667
  %2152 = vmatpush.bf16.msra.mxu0 %v1664
  %2153 = vmatpush.bf16.msra.mxu0 %v1661
  %2154 = vmatpush.bf16.msra.mxu0 %v1658
  %2155 = vmatpush.bf16.msra.mxu0 %v1655
  %2156 = vmatpush.bf16.msra.mxu0 %v1652
  %2157 = vmatpush.bf16.msra.mxu0 %v1649
  %2158 = vmatpush.bf16.msra.mxu0 %v1646
  %2159 = vmatmul.bf16.gmra.mxu0 %v663
  %v2160 = vpop.f32.mrf.mxu0
  %v2161 = vadd.f32 %v2112, %v2160
  %v2162 = vpop.f32.mrf.mxu0
  %v2163 = vadd.f32 %v2114, %v2162
  %2164 = vmatmul.bf16.gmra.mxu0 %v673
  %v2165 = vpop.f32.mrf.mxu0
  %v2166 = vadd.f32 %v2117, %v2165
  %v2167 = vpop.f32.mrf.mxu0
  %v2168 = vadd.f32 %v2119, %v2167
  %2169 = vmatmul.bf16.gmra.mxu0 %v683
  %v2170 = vpop.f32.mrf.mxu0
  %v2171 = vadd.f32 %v2122, %v2170
  %v2172 = vpop.f32.mrf.mxu0
  %v2173 = vadd.f32 %v2124, %v2172
  %2174 = vmatmul.bf16.gmra.mxu0 %v693
  %v2175 = vpop.f32.mrf.mxu0
  %v2176 = vadd.f32 %v2127, %v2175
  %v2177 = vpop.f32.mrf.mxu0
  %v2178 = vadd.f32 %v2129, %v2177
  %2179 = vmatmul.bf16.gmra.mxu0 %v703
  %v2180 = vpop.f32.mrf.mxu0
  %v2181 = vadd.f32 %v2132, %v2180
  %v2182 = vpop.f32.mrf.mxu0
  %v2183 = vadd.f32 %v2134, %v2182
  %2184 = vmatmul.bf16.gmra.mxu0 %v713
  %v2185 = vpop.f32.mrf.mxu0
  %v2186 = vadd.f32 %v2137, %v2185
  %v2187 = vpop.f32.mrf.mxu0
  %v2188 = vadd.f32 %v2139, %v2187
  %2189 = vmatmul.bf16.gmra.mxu0 %v723
  %v2190 = vpop.f32.mrf.mxu0
  %v2191 = vadd.f32 %v2142, %v2190
  %v2192 = vpop.f32.mrf.mxu0
  %v2193 = vadd.f32 %v2144, %v2192
  %2194 = vmatmul.bf16.gmra.mxu0 %v733
  %v2195 = vpop.f32.mrf.mxu0
  %v2196 = vadd.f32 %v2147, %v2195
  %v2197 = vpop.f32.mrf.mxu0
  %v2198 = vadd.f32 %v2149, %v2197
  %2199 = vdwg.mxu0
  %2200 = vmatpush.bf16.msra.mxu0 %v1691
  %2201 = vmatpush.bf16.msra.mxu0 %v1688
  %2202 = vmatpush.bf16.msra.mxu0 %v1685
  %2203 = vmatpush.bf16.msra.mxu0 %v1682
  %2204 = vmatpush.bf16.msra.mxu0 %v1679
  %2205 = vmatpush.bf16.msra.mxu0 %v1676
  %2206 = vmatpush.bf16.msra.mxu0 %v1673
  %2207 = vmatpush.bf16.msra.mxu0 %v1670
  %2208 = vmatmul.bf16.gmra.mxu0 %v664
  %v2209 = vpop.f32.mrf.mxu0
  %v2210 = vadd.f32 %v2161, %v2209
  %v2211 = vpop.f32.mrf.mxu0
  %v2212 = vadd.f32 %v2163, %v2211
  %2213 = vmatmul.bf16.gmra.mxu0 %v674
  %v2214 = vpop.f32.mrf.mxu0
  %v2215 = vadd.f32 %v2166, %v2214
  %v2216 = vpop.f32.mrf.mxu0
  %v2217 = vadd.f32 %v2168, %v2216
  %2218 = vmatmul.bf16.gmra.mxu0 %v684
  %v2219 = vpop.f32.mrf.mxu0
  %v2220 = vadd.f32 %v2171, %v2219
  %v2221 = vpop.f32.mrf.mxu0
  %v2222 = vadd.f32 %v2173, %v2221
  %2223 = vmatmul.bf16.gmra.mxu0 %v694
  %v2224 = vpop.f32.mrf.mxu0
  %v2225 = vadd.f32 %v2176, %v2224
  %v2226 = vpop.f32.mrf.mxu0
  %v2227 = vadd.f32 %v2178, %v2226
  %2228 = vmatmul.bf16.gmra.mxu0 %v704
  %v2229 = vpop.f32.mrf.mxu0
  %v2230 = vadd.f32 %v2181, %v2229
  %v2231 = vpop.f32.mrf.mxu0
  %v2232 = vadd.f32 %v2183, %v2231
  %2233 = vmatmul.bf16.gmra.mxu0 %v714
  %v2234 = vpop.f32.mrf.mxu0
  %v2235 = vadd.f32 %v2186, %v2234
  %v2236 = vpop.f32.mrf.mxu0
  %v2237 = vadd.f32 %v2188, %v2236
  %2238 = vmatmul.bf16.gmra.mxu0 %v724
  %v2239 = vpop.f32.mrf.mxu0
  %v2240 = vadd.f32 %v2191, %v2239
  %v2241 = vpop.f32.mrf.mxu0
  %v2242 = vadd.f32 %v2193, %v2241
  %2243 = vmatmul.bf16.gmra.mxu0 %v734
  %v2244 = vpop.f32.mrf.mxu0
  %v2245 = vadd.f32 %v2196, %v2244
  %v2246 = vpop.f32.mrf.mxu0
  %v2247 = vadd.f32 %v2198, %v2246
  %2248 = vdwg.mxu0
  %2249 = vmatpush.bf16.msra.mxu0 %v1715
  %2250 = vmatpush.bf16.msra.mxu0 %v1712
  %2251 = vmatpush.bf16.msra.mxu0 %v1709
  %2252 = vmatpush.bf16.msra.mxu0 %v1706
  %2253 = vmatpush.bf16.msra.mxu0 %v1703
  %2254 = vmatpush.bf16.msra.mxu0 %v1700
  %2255 = vmatpush.bf16.msra.mxu0 %v1697
  %2256 = vmatpush.bf16.msra.mxu0 %v1694
  %2257 = vmatmul.bf16.gmra.mxu0 %v665
  %v2258 = vpop.f32.mrf.mxu0
  %v2259 = vadd.f32 %v2210, %v2258
  %v2260 = vpop.f32.mrf.mxu0
  %v2261 = vadd.f32 %v2212, %v2260
  %2262 = vmatmul.bf16.gmra.mxu0 %v675
  %v2263 = vpop.f32.mrf.mxu0
  %v2264 = vadd.f32 %v2215, %v2263
  %v2265 = vpop.f32.mrf.mxu0
  %v2266 = vadd.f32 %v2217, %v2265
  %2267 = vmatmul.bf16.gmra.mxu0 %v685
  %v2268 = vpop.f32.mrf.mxu0
  %v2269 = vadd.f32 %v2220, %v2268
  %v2270 = vpop.f32.mrf.mxu0
  %v2271 = vadd.f32 %v2222, %v2270
  %2272 = vmatmul.bf16.gmra.mxu0 %v695
  %v2273 = vpop.f32.mrf.mxu0
  %v2274 = vadd.f32 %v2225, %v2273
  %v2275 = vpop.f32.mrf.mxu0
  %v2276 = vadd.f32 %v2227, %v2275
  %2277 = vmatmul.bf16.gmra.mxu0 %v705
  %v2278 = vpop.f32.mrf.mxu0
  %v2279 = vadd.f32 %v2230, %v2278
  %v2280 = vpop.f32.mrf.mxu0
  %v2281 = vadd.f32 %v2232, %v2280
  %2282 = vmatmul.bf16.gmra.mxu0 %v715
  %v2283 = vpop.f32.mrf.mxu0
  %v2284 = vadd.f32 %v2235, %v2283
  %v2285 = vpop.f32.mrf.mxu0
  %v2286 = vadd.f32 %v2237, %v2285
  %2287 = vmatmul.bf16.gmra.mxu0 %v725
  %v2288 = vpop.f32.mrf.mxu0
  %v2289 = vadd.f32 %v2240, %v2288
  %v2290 = vpop.f32.mrf.mxu0
  %v2291 = vadd.f32 %v2242, %v2290
  %2292 = vmatmul.bf16.gmra.mxu0 %v735
  %v2293 = vpop.f32.mrf.mxu0
  %v2294 = vadd.f32 %v2245, %v2293
  %v2295 = vpop.f32.mrf.mxu0
  %v2296 = vadd.f32 %v2247, %v2295
  %2297 = vdwg.mxu0
  %2298 = vmatpush.bf16.msra.mxu0 %v1739
  %2299 = vmatpush.bf16.msra.mxu0 %v1736
  %2300 = vmatpush.bf16.msra.mxu0 %v1733
  %2301 = vmatpush.bf16.msra.mxu0 %v1730
  %2302 = vmatpush.bf16.msra.mxu0 %v1727
  %2303 = vmatpush.bf16.msra.mxu0 %v1724
  %2304 = vmatpush.bf16.msra.mxu0 %v1721
  %2305 = vmatpush.bf16.msra.mxu0 %v1718
  %2306 = vmatmul.bf16.gmra.mxu0 %v666
  %v2307 = vpop.f32.mrf.mxu0
  %v2308 = vadd.f32 %v2259, %v2307
  %v2309 = vpop.f32.mrf.mxu0
  %v2310 = vadd.f32 %v2261, %v2309
  %2311 = vmatmul.bf16.gmra.mxu0 %v676
  %v2312 = vpop.f32.mrf.mxu0
  %v2313 = vadd.f32 %v2264, %v2312
  %v2314 = vpop.f32.mrf.mxu0
  %v2315 = vadd.f32 %v2266, %v2314
  %2316 = vmatmul.bf16.gmra.mxu0 %v686
  %v2317 = vpop.f32.mrf.mxu0
  %v2318 = vadd.f32 %v2269, %v2317
  %v2319 = vpop.f32.mrf.mxu0
  %v2320 = vadd.f32 %v2271, %v2319
  %2321 = vmatmul.bf16.gmra.mxu0 %v696
  %v2322 = vpop.f32.mrf.mxu0
  %v2323 = vadd.f32 %v2274, %v2322
  %v2324 = vpop.f32.mrf.mxu0
  %v2325 = vadd.f32 %v2276, %v2324
  %2326 = vmatmul.bf16.gmra.mxu0 %v706
  %v2327 = vpop.f32.mrf.mxu0
  %v2328 = vadd.f32 %v2279, %v2327
  %v2329 = vpop.f32.mrf.mxu0
  %v2330 = vadd.f32 %v2281, %v2329
  %2331 = vmatmul.bf16.gmra.mxu0 %v716
  %v2332 = vpop.f32.mrf.mxu0
  %v2333 = vadd.f32 %v2284, %v2332
  %v2334 = vpop.f32.mrf.mxu0
  %v2335 = vadd.f32 %v2286, %v2334
  %2336 = vmatmul.bf16.gmra.mxu0 %v726
  %v2337 = vpop.f32.mrf.mxu0
  %v2338 = vadd.f32 %v2289, %v2337
  %v2339 = vpop.f32.mrf.mxu0
  %v2340 = vadd.f32 %v2291, %v2339
  %2341 = vmatmul.bf16.gmra.mxu0 %v736
  %v2342 = vpop.f32.mrf.mxu0
  %v2343 = vadd.f32 %v2294, %v2342
  %v2344 = vpop.f32.mrf.mxu0
  %v2345 = vadd.f32 %v2296, %v2344
  %2346 = vdwg.mxu0
  %2347 = vmatpush.bf16.msra.mxu0 %v1763
  %2348 = vmatpush.bf16.msra.mxu0 %v1760
  %2349 = vmatpush.bf16.msra.mxu0 %v1757
  %2350 = vmatpush.bf16.msra.mxu0 %v1754
  %2351 = vmatpush.bf16.msra.mxu0 %v1751
  %2352 = vmatpush.bf16.msra.mxu0 %v1748
  %2353 = vmatpush.bf16.msra.mxu0 %v1745
  %2354 = vmatpush.bf16.msra.mxu0 %v1742
  %2355 = vmatmul.bf16.gmra.mxu0 %v667
  %v2356 = vpop.f32.mrf.mxu0
  %v2357 = vadd.f32 %v2308, %v2356
  %v2358 = vpop.f32.mrf.mxu0
  %v2359 = vadd.f32 %v2310, %v2358
  %2360 = vmatmul.bf16.gmra.mxu0 %v677
  %v2361 = vpop.f32.mrf.mxu0
  %v2362 = vadd.f32 %v2313, %v2361
  %v2363 = vpop.f32.mrf.mxu0
  %v2364 = vadd.f32 %v2315, %v2363
  %2365 = vmatmul.bf16.gmra.mxu0 %v687
  %v2366 = vpop.f32.mrf.mxu0
  %v2367 = vadd.f32 %v2318, %v2366
  %v2368 = vpop.f32.mrf.mxu0
  %v2369 = vadd.f32 %v2320, %v2368
  %2370 = vmatmul.bf16.gmra.mxu0 %v697
  %v2371 = vpop.f32.mrf.mxu0
  %v2372 = vadd.f32 %v2323, %v2371
  %v2373 = vpop.f32.mrf.mxu0
  %v2374 = vadd.f32 %v2325, %v2373
  %2375 = vmatmul.bf16.gmra.mxu0 %v707
  %v2376 = vpop.f32.mrf.mxu0
  %v2377 = vadd.f32 %v2328, %v2376
  %v2378 = vpop.f32.mrf.mxu0
  %v2379 = vadd.f32 %v2330, %v2378
  %2380 = vmatmul.bf16.gmra.mxu0 %v717
  %v2381 = vpop.f32.mrf.mxu0
  %v2382 = vadd.f32 %v2333, %v2381
  %v2383 = vpop.f32.mrf.mxu0
  %v2384 = vadd.f32 %v2335, %v2383
  %2385 = vmatmul.bf16.gmra.mxu0 %v727
  %v2386 = vpop.f32.mrf.mxu0
  %v2387 = vadd.f32 %v2338, %v2386
  %v2388 = vpop.f32.mrf.mxu0
  %v2389 = vadd.f32 %v2340, %v2388
  %2390 = vmatmul.bf16.gmra.mxu0 %v737
  %v2391 = vpop.f32.mrf.mxu0
  %v2392 = vadd.f32 %v2343, %v2391
  %v2393 = vpop.f32.mrf.mxu0
  %v2394 = vadd.f32 %v2345, %v2393
  %2395 = vdwg.mxu0
  %2396 = vmatpush.bf16.msra.mxu0 %v1787
  %2397 = vmatpush.bf16.msra.mxu0 %v1784
  %2398 = vmatpush.bf16.msra.mxu0 %v1781
  %2399 = vmatpush.bf16.msra.mxu0 %v1778
  %2400 = vmatpush.bf16.msra.mxu0 %v1775
  %2401 = vmatpush.bf16.msra.mxu0 %v1772
  %2402 = vmatpush.bf16.msra.mxu0 %v1769
  %2403 = vmatpush.bf16.msra.mxu0 %v1766
  %2404 = vmatmul.bf16.gmra.mxu0 %v668
  %v2405 = vpop.f32.mrf.mxu0
  %v2406 = vadd.f32 %v2357, %v2405
  %v2407 = vpop.f32.mrf.mxu0
  %v2408 = vadd.f32 %v2359, %v2407
  %2409 = vmatmul.bf16.gmra.mxu0 %v678
  %v2410 = vpop.f32.mrf.mxu0
  %v2411 = vadd.f32 %v2362, %v2410
  %v2412 = vpop.f32.mrf.mxu0
  %v2413 = vadd.f32 %v2364, %v2412
  %2414 = vmatmul.bf16.gmra.mxu0 %v688
  %v2415 = vpop.f32.mrf.mxu0
  %v2416 = vadd.f32 %v2367, %v2415
  %v2417 = vpop.f32.mrf.mxu0
  %v2418 = vadd.f32 %v2369, %v2417
  %2419 = vmatmul.bf16.gmra.mxu0 %v698
  %v2420 = vpop.f32.mrf.mxu0
  %v2421 = vadd.f32 %v2372, %v2420
  %v2422 = vpop.f32.mrf.mxu0
  %v2423 = vadd.f32 %v2374, %v2422
  %2424 = vmatmul.bf16.gmra.mxu0 %v708
  %v2425 = vpop.f32.mrf.mxu0
  %v2426 = vadd.f32 %v2377, %v2425
  %v2427 = vpop.f32.mrf.mxu0
  %v2428 = vadd.f32 %v2379, %v2427
  %2429 = vmatmul.bf16.gmra.mxu0 %v718
  %v2430 = vpop.f32.mrf.mxu0
  %v2431 = vadd.f32 %v2382, %v2430
  %v2432 = vpop.f32.mrf.mxu0
  %v2433 = vadd.f32 %v2384, %v2432
  %2434 = vmatmul.bf16.gmra.mxu0 %v728
  %v2435 = vpop.f32.mrf.mxu0
  %v2436 = vadd.f32 %v2387, %v2435
  %v2437 = vpop.f32.mrf.mxu0
  %v2438 = vadd.f32 %v2389, %v2437
  %2439 = vmatmul.bf16.gmra.mxu0 %v738
  %v2440 = vpop.f32.mrf.mxu0
  %v2441 = vadd.f32 %v2392, %v2440
  %v2442 = vpop.f32.mrf.mxu0
  %v2443 = vadd.f32 %v2394, %v2442
  %2444 = vdwg.mxu0
  %2445 = vmatpush.bf16.msra.mxu0 %v1811
  %2446 = vmatpush.bf16.msra.mxu0 %v1808
  %2447 = vmatpush.bf16.msra.mxu0 %v1805
  %2448 = vmatpush.bf16.msra.mxu0 %v1802
  %2449 = vmatpush.bf16.msra.mxu0 %v1799
  %2450 = vmatpush.bf16.msra.mxu0 %v1796
  %2451 = vmatpush.bf16.msra.mxu0 %v1793
  %2452 = vmatpush.bf16.msra.mxu0 %v1790
  %2453 = vmatmul.bf16.gmra.mxu0 %v669
  %v2454 = vpop.f32.mrf.mxu0
  %v2455 = vadd.f32 %v2406, %v2454
  %v2456 = vpop.f32.mrf.mxu0
  %v2457 = vadd.f32 %v2408, %v2456
  %2458 = vmatmul.bf16.gmra.mxu0 %v679
  %v2459 = vpop.f32.mrf.mxu0
  %v2460 = vadd.f32 %v2411, %v2459
  %v2461 = vpop.f32.mrf.mxu0
  %v2462 = vadd.f32 %v2413, %v2461
  %2463 = vmatmul.bf16.gmra.mxu0 %v689
  %v2464 = vpop.f32.mrf.mxu0
  %v2465 = vadd.f32 %v2416, %v2464
  %v2466 = vpop.f32.mrf.mxu0
  %v2467 = vadd.f32 %v2418, %v2466
  %2468 = vmatmul.bf16.gmra.mxu0 %v699
  %v2469 = vpop.f32.mrf.mxu0
  %v2470 = vadd.f32 %v2421, %v2469
  %v2471 = vpop.f32.mrf.mxu0
  %v2472 = vadd.f32 %v2423, %v2471
  %2473 = vmatmul.bf16.gmra.mxu0 %v709
  %v2474 = vpop.f32.mrf.mxu0
  %v2475 = vadd.f32 %v2426, %v2474
  %v2476 = vpop.f32.mrf.mxu0
  %v2477 = vadd.f32 %v2428, %v2476
  %2478 = vmatmul.bf16.gmra.mxu0 %v719
  %v2479 = vpop.f32.mrf.mxu0
  %v2480 = vadd.f32 %v2431, %v2479
  %v2481 = vpop.f32.mrf.mxu0
  %v2482 = vadd.f32 %v2433, %v2481
  %2483 = vmatmul.bf16.gmra.mxu0 %v729
  %v2484 = vpop.f32.mrf.mxu0
  %v2485 = vadd.f32 %v2436, %v2484
  %v2486 = vpop.f32.mrf.mxu0
  %v2487 = vadd.f32 %v2438, %v2486
  %2488 = vmatmul.bf16.gmra.mxu0 %v739
  %v2489 = vpop.f32.mrf.mxu0
  %v2490 = vadd.f32 %v2441, %v2489
  %v2491 = vpop.f32.mrf.mxu0
  %v2492 = vadd.f32 %v2443, %v2491
  %2493 = vdwg.mxu0
  %2494 = vmatpush.bf16.msra.mxu0 %v1835
  %2495 = vmatpush.bf16.msra.mxu0 %v1832
  %2496 = vmatpush.bf16.msra.mxu0 %v1829
  %2497 = vmatpush.bf16.msra.mxu0 %v1826
  %2498 = vmatpush.bf16.msra.mxu0 %v1823
  %2499 = vmatpush.bf16.msra.mxu0 %v1820
  %2500 = vmatpush.bf16.msra.mxu0 %v1817
  %2501 = vmatpush.bf16.msra.mxu0 %v1814
  %2502 = vmatmul.bf16.gmra.mxu0 %v670
  %v2503 = vpop.f32.mrf.mxu0
  %v2504 = vadd.f32 %v2455, %v2503
  %v2505 = vpop.f32.mrf.mxu0
  %v2506 = vadd.f32 %v2457, %v2505
  %2507 = vmatmul.bf16.gmra.mxu0 %v680
  %v2508 = vpop.f32.mrf.mxu0
  %v2509 = vadd.f32 %v2460, %v2508
  %v2510 = vpop.f32.mrf.mxu0
  %v2511 = vadd.f32 %v2462, %v2510
  %2512 = vmatmul.bf16.gmra.mxu0 %v690
  %v2513 = vpop.f32.mrf.mxu0
  %v2514 = vadd.f32 %v2465, %v2513
  %v2515 = vpop.f32.mrf.mxu0
  %v2516 = vadd.f32 %v2467, %v2515
  %2517 = vmatmul.bf16.gmra.mxu0 %v700
  %v2518 = vpop.f32.mrf.mxu0
  %v2519 = vadd.f32 %v2470, %v2518
  %v2520 = vpop.f32.mrf.mxu0
  %v2521 = vadd.f32 %v2472, %v2520
  %2522 = vmatmul.bf16.gmra.mxu0 %v710
  %v2523 = vpop.f32.mrf.mxu0
  %v2524 = vadd.f32 %v2475, %v2523
  %v2525 = vpop.f32.mrf.mxu0
  %v2526 = vadd.f32 %v2477, %v2525
  %2527 = vmatmul.bf16.gmra.mxu0 %v720
  %v2528 = vpop.f32.mrf.mxu0
  %v2529 = vadd.f32 %v2480, %v2528
  %v2530 = vpop.f32.mrf.mxu0
  %v2531 = vadd.f32 %v2482, %v2530
  %2532 = vmatmul.bf16.gmra.mxu0 %v730
  %v2533 = vpop.f32.mrf.mxu0
  %v2534 = vadd.f32 %v2485, %v2533
  %v2535 = vpop.f32.mrf.mxu0
  %v2536 = vadd.f32 %v2487, %v2535
  %2537 = vmatmul.bf16.gmra.mxu0 %v740
  %v2538 = vpop.f32.mrf.mxu0
  %v2539 = vadd.f32 %v2490, %v2538
  %v2540 = vpop.f32.mrf.mxu0
  %v2541 = vadd.f32 %v2492, %v2540
  %2542 = vdwg.mxu0
  %2543 = vmatpush.bf16.msra.mxu0 %v1859
  %2544 = vmatpush.bf16.msra.mxu0 %v1856
  %2545 = vmatpush.bf16.msra.mxu0 %v1853
  %2546 = vmatpush.bf16.msra.mxu0 %v1850
  %2547 = vmatpush.bf16.msra.mxu0 %v1847
  %2548 = vmatpush.bf16.msra.mxu0 %v1844
  %2549 = vmatpush.bf16.msra.mxu0 %v1841
  %2550 = vmatpush.bf16.msra.mxu0 %v1838
  %2551 = vmatmul.bf16.gmra.mxu0 %v671
  %v2552 = vpop.f32.mrf.mxu0
  %v2553 = vadd.f32 %v2504, %v2552
  %v2554 = vpop.f32.mrf.mxu0
  %v2555 = vadd.f32 %v2506, %v2554
  %2556 = vmatmul.bf16.gmra.mxu0 %v681
  %v2557 = vpop.f32.mrf.mxu0
  %v2558 = vadd.f32 %v2509, %v2557
  %v2559 = vpop.f32.mrf.mxu0
  %v2560 = vadd.f32 %v2511, %v2559
  %2561 = vmatmul.bf16.gmra.mxu0 %v691
  %v2562 = vpop.f32.mrf.mxu0
  %v2563 = vadd.f32 %v2514, %v2562
  %v2564 = vpop.f32.mrf.mxu0
  %v2565 = vadd.f32 %v2516, %v2564
  %2566 = vmatmul.bf16.gmra.mxu0 %v701
  %v2567 = vpop.f32.mrf.mxu0
  %v2568 = vadd.f32 %v2519, %v2567
  %v2569 = vpop.f32.mrf.mxu0
  %v2570 = vadd.f32 %v2521, %v2569
  %2571 = vmatmul.bf16.gmra.mxu0 %v711
  %v2572 = vpop.f32.mrf.mxu0
  %v2573 = vadd.f32 %v2524, %v2572
  %v2574 = vpop.f32.mrf.mxu0
  %v2575 = vadd.f32 %v2526, %v2574
  %2576 = vmatmul.bf16.gmra.mxu0 %v721
  %v2577 = vpop.f32.mrf.mxu0
  %v2578 = vadd.f32 %v2529, %v2577
  %v2579 = vpop.f32.mrf.mxu0
  %v2580 = vadd.f32 %v2531, %v2579
  %2581 = vmatmul.bf16.gmra.mxu0 %v731
  %v2582 = vpop.f32.mrf.mxu0
  %v2583 = vadd.f32 %v2534, %v2582
  %v2584 = vpop.f32.mrf.mxu0
  %v2585 = vadd.f32 %v2536, %v2584
  %2586 = vmatmul.bf16.gmra.mxu0 %v741
  %v2587 = vpop.f32.mrf.mxu0
  %v2588 = vadd.f32 %v2539, %v2587
  %v2589 = vpop.f32.mrf.mxu0
  %v2590 = vadd.f32 %v2541, %v2589
  %2591 = vdwg.mxu0
  %2592 = vmatpush.bf16.msra.mxu0 %v1644
  %2593 = vmatpush.bf16.msra.mxu0 %v1641
  %2594 = vmatpush.bf16.msra.mxu0 %v1638
  %2595 = vmatpush.bf16.msra.mxu0 %v1635
  %2596 = vmatpush.bf16.msra.mxu0 %v1632
  %2597 = vmatpush.bf16.msra.mxu0 %v1629
  %2598 = vmatpush.bf16.msra.mxu0 %v1626
  %2599 = vmatpush.bf16.msra.mxu0 %v1623
  %2600 = vmatmul.bf16.gmra.mxu0 %v662
  %v2601 = vpop.f32.mrf.mxu0
  %v2602 = vadd.f32 0.0, %v2601
  %v2603 = vpop.f32.mrf.mxu0
  %v2604 = vadd.f32 0.0, %v2603
  %2605 = vmatmul.bf16.gmra.mxu0 %v672
  %v2606 = vpop.f32.mrf.mxu0
  %v2607 = vadd.f32 0.0, %v2606
  %v2608 = vpop.f32.mrf.mxu0
  %v2609 = vadd.f32 0.0, %v2608
  %2610 = vmatmul.bf16.gmra.mxu0 %v682
  %v2611 = vpop.f32.mrf.mxu0
  %v2612 = vadd.f32 0.0, %v2611
  %v2613 = vpop.f32.mrf.mxu0
  %v2614 = vadd.f32 0.0, %v2613
  %2615 = vmatmul.bf16.gmra.mxu0 %v692
  %v2616 = vpop.f32.mrf.mxu0
  %v2617 = vadd.f32 0.0, %v2616
  %v2618 = vpop.f32.mrf.mxu0
  %v2619 = vadd.f32 0.0, %v2618
  %2620 = vmatmul.bf16.gmra.mxu0 %v702
  %v2621 = vpop.f32.mrf.mxu0
  %v2622 = vadd.f32 0.0, %v2621
  %v2623 = vpop.f32.mrf.mxu0
  %v2624 = vadd.f32 0.0, %v2623
  %2625 = vmatmul.bf16.gmra.mxu0 %v712
  %v2626 = vpop.f32.mrf.mxu0
  %v2627 = vadd.f32 0.0, %v2626
  %v2628 = vpop.f32.mrf.mxu0
  %v2629 = vadd.f32 0.0, %v2628
  %2630 = vmatmul.bf16.gmra.mxu0 %v722
  %v2631 = vpop.f32.mrf.mxu0
  %v2632 = vadd.f32 0.0, %v2631
  %v2633 = vpop.f32.mrf.mxu0
  %v2634 = vadd.f32 0.0, %v2633
  %2635 = vmatmul.bf16.gmra.mxu0 %v732
  %v2636 = vpop.f32.mrf.mxu0
  %v2637 = vadd.f32 0.0, %v2636
  %v2638 = vpop.f32.mrf.mxu0
  %v2639 = vadd.f32 0.0, %v2638
  %2640 = vdwg.mxu0
  %2641 = vmatpush.bf16.msra.mxu0 %v1668
  %2642 = vmatpush.bf16.msra.mxu0 %v1665
  %2643 = vmatpush.bf16.msra.mxu0 %v1662
  %2644 = vmatpush.bf16.msra.mxu0 %v1659
  %2645 = vmatpush.bf16.msra.mxu0 %v1656
  %2646 = vmatpush.bf16.msra.mxu0 %v1653
  %2647 = vmatpush.bf16.msra.mxu0 %v1650
  %2648 = vmatpush.bf16.msra.mxu0 %v1647
  %2649 = vmatmul.bf16.gmra.mxu0 %v663
  %v2650 = vpop.f32.mrf.mxu0
  %v2651 = vadd.f32 %v2602, %v2650
  %v2652 = vpop.f32.mrf.mxu0
  %v2653 = vadd.f32 %v2604, %v2652
  %2654 = vmatmul.bf16.gmra.mxu0 %v673
  %v2655 = vpop.f32.mrf.mxu0
  %v2656 = vadd.f32 %v2607, %v2655
  %v2657 = vpop.f32.mrf.mxu0
  %v2658 = vadd.f32 %v2609, %v2657
  %2659 = vmatmul.bf16.gmra.mxu0 %v683
  %v2660 = vpop.f32.mrf.mxu0
  %v2661 = vadd.f32 %v2612, %v2660
  %v2662 = vpop.f32.mrf.mxu0
  %v2663 = vadd.f32 %v2614, %v2662
  %2664 = vmatmul.bf16.gmra.mxu0 %v693
  %v2665 = vpop.f32.mrf.mxu0
  %v2666 = vadd.f32 %v2617, %v2665
  %v2667 = vpop.f32.mrf.mxu0
  %v2668 = vadd.f32 %v2619, %v2667
  %2669 = vmatmul.bf16.gmra.mxu0 %v703
  %v2670 = vpop.f32.mrf.mxu0
  %v2671 = vadd.f32 %v2622, %v2670
  %v2672 = vpop.f32.mrf.mxu0
  %v2673 = vadd.f32 %v2624, %v2672
  %2674 = vmatmul.bf16.gmra.mxu0 %v713
  %v2675 = vpop.f32.mrf.mxu0
  %v2676 = vadd.f32 %v2627, %v2675
  %v2677 = vpop.f32.mrf.mxu0
  %v2678 = vadd.f32 %v2629, %v2677
  %2679 = vmatmul.bf16.gmra.mxu0 %v723
  %v2680 = vpop.f32.mrf.mxu0
  %v2681 = vadd.f32 %v2632, %v2680
  %v2682 = vpop.f32.mrf.mxu0
  %v2683 = vadd.f32 %v2634, %v2682
  %2684 = vmatmul.bf16.gmra.mxu0 %v733
  %v2685 = vpop.f32.mrf.mxu0
  %v2686 = vadd.f32 %v2637, %v2685
  %v2687 = vpop.f32.mrf.mxu0
  %v2688 = vadd.f32 %v2639, %v2687
  %2689 = vdwg.mxu0
  %2690 = vmatpush.bf16.msra.mxu0 %v1692
  %2691 = vmatpush.bf16.msra.mxu0 %v1689
  %2692 = vmatpush.bf16.msra.mxu0 %v1686
  %2693 = vmatpush.bf16.msra.mxu0 %v1683
  %2694 = vmatpush.bf16.msra.mxu0 %v1680
  %2695 = vmatpush.bf16.msra.mxu0 %v1677
  %2696 = vmatpush.bf16.msra.mxu0 %v1674
  %2697 = vmatpush.bf16.msra.mxu0 %v1671
  %2698 = vmatmul.bf16.gmra.mxu0 %v664
  %v2699 = vpop.f32.mrf.mxu0
  %v2700 = vadd.f32 %v2651, %v2699
  %v2701 = vpop.f32.mrf.mxu0
  %v2702 = vadd.f32 %v2653, %v2701
  %2703 = vmatmul.bf16.gmra.mxu0 %v674
  %v2704 = vpop.f32.mrf.mxu0
  %v2705 = vadd.f32 %v2656, %v2704
  %v2706 = vpop.f32.mrf.mxu0
  %v2707 = vadd.f32 %v2658, %v2706
  %2708 = vmatmul.bf16.gmra.mxu0 %v684
  %v2709 = vpop.f32.mrf.mxu0
  %v2710 = vadd.f32 %v2661, %v2709
  %v2711 = vpop.f32.mrf.mxu0
  %v2712 = vadd.f32 %v2663, %v2711
  %2713 = vmatmul.bf16.gmra.mxu0 %v694
  %v2714 = vpop.f32.mrf.mxu0
  %v2715 = vadd.f32 %v2666, %v2714
  %v2716 = vpop.f32.mrf.mxu0
  %v2717 = vadd.f32 %v2668, %v2716
  %2718 = vmatmul.bf16.gmra.mxu0 %v704
  %v2719 = vpop.f32.mrf.mxu0
  %v2720 = vadd.f32 %v2671, %v2719
  %v2721 = vpop.f32.mrf.mxu0
  %v2722 = vadd.f32 %v2673, %v2721
  %2723 = vmatmul.bf16.gmra.mxu0 %v714
  %v2724 = vpop.f32.mrf.mxu0
  %v2725 = vadd.f32 %v2676, %v2724
  %v2726 = vpop.f32.mrf.mxu0
  %v2727 = vadd.f32 %v2678, %v2726
  %2728 = vmatmul.bf16.gmra.mxu0 %v724
  %v2729 = vpop.f32.mrf.mxu0
  %v2730 = vadd.f32 %v2681, %v2729
  %v2731 = vpop.f32.mrf.mxu0
  %v2732 = vadd.f32 %v2683, %v2731
  %2733 = vmatmul.bf16.gmra.mxu0 %v734
  %v2734 = vpop.f32.mrf.mxu0
  %v2735 = vadd.f32 %v2686, %v2734
  %v2736 = vpop.f32.mrf.mxu0
  %v2737 = vadd.f32 %v2688, %v2736
  %2738 = vdwg.mxu0
  %2739 = vmatpush.bf16.msra.mxu0 %v1716
  %2740 = vmatpush.bf16.msra.mxu0 %v1713
  %2741 = vmatpush.bf16.msra.mxu0 %v1710
  %2742 = vmatpush.bf16.msra.mxu0 %v1707
  %2743 = vmatpush.bf16.msra.mxu0 %v1704
  %2744 = vmatpush.bf16.msra.mxu0 %v1701
  %2745 = vmatpush.bf16.msra.mxu0 %v1698
  %2746 = vmatpush.bf16.msra.mxu0 %v1695
  %2747 = vmatmul.bf16.gmra.mxu0 %v665
  %v2748 = vpop.f32.mrf.mxu0
  %v2749 = vadd.f32 %v2700, %v2748
  %v2750 = vpop.f32.mrf.mxu0
  %v2751 = vadd.f32 %v2702, %v2750
  %2752 = vmatmul.bf16.gmra.mxu0 %v675
  %v2753 = vpop.f32.mrf.mxu0
  %v2754 = vadd.f32 %v2705, %v2753
  %v2755 = vpop.f32.mrf.mxu0
  %v2756 = vadd.f32 %v2707, %v2755
  %2757 = vmatmul.bf16.gmra.mxu0 %v685
  %v2758 = vpop.f32.mrf.mxu0
  %v2759 = vadd.f32 %v2710, %v2758
  %v2760 = vpop.f32.mrf.mxu0
  %v2761 = vadd.f32 %v2712, %v2760
  %2762 = vmatmul.bf16.gmra.mxu0 %v695
  %v2763 = vpop.f32.mrf.mxu0
  %v2764 = vadd.f32 %v2715, %v2763
  %v2765 = vpop.f32.mrf.mxu0
  %v2766 = vadd.f32 %v2717, %v2765
  %2767 = vmatmul.bf16.gmra.mxu0 %v705
  %v2768 = vpop.f32.mrf.mxu0
  %v2769 = vadd.f32 %v2720, %v2768
  %v2770 = vpop.f32.mrf.mxu0
  %v2771 = vadd.f32 %v2722, %v2770
  %2772 = vmatmul.bf16.gmra.mxu0 %v715
  %v2773 = vpop.f32.mrf.mxu0
  %v2774 = vadd.f32 %v2725, %v2773
  %v2775 = vpop.f32.mrf.mxu0
  %v2776 = vadd.f32 %v2727, %v2775
  %2777 = vmatmul.bf16.gmra.mxu0 %v725
  %v2778 = vpop.f32.mrf.mxu0
  %v2779 = vadd.f32 %v2730, %v2778
  %v2780 = vpop.f32.mrf.mxu0
  %v2781 = vadd.f32 %v2732, %v2780
  %2782 = vmatmul.bf16.gmra.mxu0 %v735
  %v2783 = vpop.f32.mrf.mxu0
  %v2784 = vadd.f32 %v2735, %v2783
  %v2785 = vpop.f32.mrf.mxu0
  %v2786 = vadd.f32 %v2737, %v2785
  %2787 = vdwg.mxu0
  %2788 = vmatpush.bf16.msra.mxu0 %v1740
  %2789 = vmatpush.bf16.msra.mxu0 %v1737
  %2790 = vmatpush.bf16.msra.mxu0 %v1734
  %2791 = vmatpush.bf16.msra.mxu0 %v1731
  %2792 = vmatpush.bf16.msra.mxu0 %v1728
  %2793 = vmatpush.bf16.msra.mxu0 %v1725
  %2794 = vmatpush.bf16.msra.mxu0 %v1722
  %2795 = vmatpush.bf16.msra.mxu0 %v1719
  %2796 = vmatmul.bf16.gmra.mxu0 %v666
  %v2797 = vpop.f32.mrf.mxu0
  %v2798 = vadd.f32 %v2749, %v2797
  %v2799 = vpop.f32.mrf.mxu0
  %v2800 = vadd.f32 %v2751, %v2799
  %2801 = vmatmul.bf16.gmra.mxu0 %v676
  %v2802 = vpop.f32.mrf.mxu0
  %v2803 = vadd.f32 %v2754, %v2802
  %v2804 = vpop.f32.mrf.mxu0
  %v2805 = vadd.f32 %v2756, %v2804
  %2806 = vmatmul.bf16.gmra.mxu0 %v686
  %v2807 = vpop.f32.mrf.mxu0
  %v2808 = vadd.f32 %v2759, %v2807
  %v2809 = vpop.f32.mrf.mxu0
  %v2810 = vadd.f32 %v2761, %v2809
  %2811 = vmatmul.bf16.gmra.mxu0 %v696
  %v2812 = vpop.f32.mrf.mxu0
  %v2813 = vadd.f32 %v2764, %v2812
  %v2814 = vpop.f32.mrf.mxu0
  %v2815 = vadd.f32 %v2766, %v2814
  %2816 = vmatmul.bf16.gmra.mxu0 %v706
  %v2817 = vpop.f32.mrf.mxu0
  %v2818 = vadd.f32 %v2769, %v2817
  %v2819 = vpop.f32.mrf.mxu0
  %v2820 = vadd.f32 %v2771, %v2819
  %2821 = vmatmul.bf16.gmra.mxu0 %v716
  %v2822 = vpop.f32.mrf.mxu0
  %v2823 = vadd.f32 %v2774, %v2822
  %v2824 = vpop.f32.mrf.mxu0
  %v2825 = vadd.f32 %v2776, %v2824
  %2826 = vmatmul.bf16.gmra.mxu0 %v726
  %v2827 = vpop.f32.mrf.mxu0
  %v2828 = vadd.f32 %v2779, %v2827
  %v2829 = vpop.f32.mrf.mxu0
  %v2830 = vadd.f32 %v2781, %v2829
  %2831 = vmatmul.bf16.gmra.mxu0 %v736
  %v2832 = vpop.f32.mrf.mxu0
  %v2833 = vadd.f32 %v2784, %v2832
  %v2834 = vpop.f32.mrf.mxu0
  %v2835 = vadd.f32 %v2786, %v2834
  %2836 = vdwg.mxu0
  %2837 = vmatpush.bf16.msra.mxu0 %v1764
  %2838 = vmatpush.bf16.msra.mxu0 %v1761
  %2839 = vmatpush.bf16.msra.mxu0 %v1758
  %2840 = vmatpush.bf16.msra.mxu0 %v1755
  %2841 = vmatpush.bf16.msra.mxu0 %v1752
  %2842 = vmatpush.bf16.msra.mxu0 %v1749
  %2843 = vmatpush.bf16.msra.mxu0 %v1746
  %2844 = vmatpush.bf16.msra.mxu0 %v1743
  %2845 = vmatmul.bf16.gmra.mxu0 %v667
  %v2846 = vpop.f32.mrf.mxu0
  %v2847 = vadd.f32 %v2798, %v2846
  %v2848 = vpop.f32.mrf.mxu0
  %v2849 = vadd.f32 %v2800, %v2848
  %2850 = vmatmul.bf16.gmra.mxu0 %v677
  %v2851 = vpop.f32.mrf.mxu0
  %v2852 = vadd.f32 %v2803, %v2851
  %v2853 = vpop.f32.mrf.mxu0
  %v2854 = vadd.f32 %v2805, %v2853
  %2855 = vmatmul.bf16.gmra.mxu0 %v687
  %v2856 = vpop.f32.mrf.mxu0
  %v2857 = vadd.f32 %v2808, %v2856
  %v2858 = vpop.f32.mrf.mxu0
  %v2859 = vadd.f32 %v2810, %v2858
  %2860 = vmatmul.bf16.gmra.mxu0 %v697
  %v2861 = vpop.f32.mrf.mxu0
  %v2862 = vadd.f32 %v2813, %v2861
  %v2863 = vpop.f32.mrf.mxu0
  %v2864 = vadd.f32 %v2815, %v2863
  %2865 = vmatmul.bf16.gmra.mxu0 %v707
  %v2866 = vpop.f32.mrf.mxu0
  %v2867 = vadd.f32 %v2818, %v2866
  %v2868 = vpop.f32.mrf.mxu0
  %v2869 = vadd.f32 %v2820, %v2868
  %2870 = vmatmul.bf16.gmra.mxu0 %v717
  %v2871 = vpop.f32.mrf.mxu0
  %v2872 = vadd.f32 %v2823, %v2871
  %v2873 = vpop.f32.mrf.mxu0
  %v2874 = vadd.f32 %v2825, %v2873
  %2875 = vmatmul.bf16.gmra.mxu0 %v727
  %v2876 = vpop.f32.mrf.mxu0
  %v2877 = vadd.f32 %v2828, %v2876
  %v2878 = vpop.f32.mrf.mxu0
  %v2879 = vadd.f32 %v2830, %v2878
  %2880 = vmatmul.bf16.gmra.mxu0 %v737
  %v2881 = vpop.f32.mrf.mxu0
  %v2882 = vadd.f32 %v2833, %v2881
  %v2883 = vpop.f32.mrf.mxu0
  %v2884 = vadd.f32 %v2835, %v2883
  %2885 = vdwg.mxu0
  %2886 = vmatpush.bf16.msra.mxu0 %v1788
  %2887 = vmatpush.bf16.msra.mxu0 %v1785
  %2888 = vmatpush.bf16.msra.mxu0 %v1782
  %2889 = vmatpush.bf16.msra.mxu0 %v1779
  %2890 = vmatpush.bf16.msra.mxu0 %v1776
  %2891 = vmatpush.bf16.msra.mxu0 %v1773
  %2892 = vmatpush.bf16.msra.mxu0 %v1770
  %2893 = vmatpush.bf16.msra.mxu0 %v1767
  %2894 = vmatmul.bf16.gmra.mxu0 %v668
  %v2895 = vpop.f32.mrf.mxu0
  %v2896 = vadd.f32 %v2847, %v2895
  %v2897 = vpop.f32.mrf.mxu0
  %v2898 = vadd.f32 %v2849, %v2897
  %2899 = vmatmul.bf16.gmra.mxu0 %v678
  %v2900 = vpop.f32.mrf.mxu0
  %v2901 = vadd.f32 %v2852, %v2900
  %v2902 = vpop.f32.mrf.mxu0
  %v2903 = vadd.f32 %v2854, %v2902
  %2904 = vmatmul.bf16.gmra.mxu0 %v688
  %v2905 = vpop.f32.mrf.mxu0
  %v2906 = vadd.f32 %v2857, %v2905
  %v2907 = vpop.f32.mrf.mxu0
  %v2908 = vadd.f32 %v2859, %v2907
  %2909 = vmatmul.bf16.gmra.mxu0 %v698
  %v2910 = vpop.f32.mrf.mxu0
  %v2911 = vadd.f32 %v2862, %v2910
  %v2912 = vpop.f32.mrf.mxu0
  %v2913 = vadd.f32 %v2864, %v2912
  %2914 = vmatmul.bf16.gmra.mxu0 %v708
  %v2915 = vpop.f32.mrf.mxu0
  %v2916 = vadd.f32 %v2867, %v2915
  %v2917 = vpop.f32.mrf.mxu0
  %v2918 = vadd.f32 %v2869, %v2917
  %2919 = vmatmul.bf16.gmra.mxu0 %v718
  %v2920 = vpop.f32.mrf.mxu0
  %v2921 = vadd.f32 %v2872, %v2920
  %v2922 = vpop.f32.mrf.mxu0
  %v2923 = vadd.f32 %v2874, %v2922
  %2924 = vmatmul.bf16.gmra.mxu0 %v728
  %v2925 = vpop.f32.mrf.mxu0
  %v2926 = vadd.f32 %v2877, %v2925
  %v2927 = vpop.f32.mrf.mxu0
  %v2928 = vadd.f32 %v2879, %v2927
  %2929 = vmatmul.bf16.gmra.mxu0 %v738
  %v2930 = vpop.f32.mrf.mxu0
  %v2931 = vadd.f32 %v2882, %v2930
  %v2932 = vpop.f32.mrf.mxu0
  %v2933 = vadd.f32 %v2884, %v2932
  %2934 = vdwg.mxu0
  %2935 = vmatpush.bf16.msra.mxu0 %v1812
  %2936 = vmatpush.bf16.msra.mxu0 %v1809
  %2937 = vmatpush.bf16.msra.mxu0 %v1806
  %2938 = vmatpush.bf16.msra.mxu0 %v1803
  %2939 = vmatpush.bf16.msra.mxu0 %v1800
  %2940 = vmatpush.bf16.msra.mxu0 %v1797
  %2941 = vmatpush.bf16.msra.mxu0 %v1794
  %2942 = vmatpush.bf16.msra.mxu0 %v1791
  %2943 = vmatmul.bf16.gmra.mxu0 %v669
  %v2944 = vpop.f32.mrf.mxu0
  %v2945 = vadd.f32 %v2896, %v2944
  %v2946 = vpop.f32.mrf.mxu0
  %v2947 = vadd.f32 %v2898, %v2946
  %2948 = vmatmul.bf16.gmra.mxu0 %v679
  %v2949 = vpop.f32.mrf.mxu0
  %v2950 = vadd.f32 %v2901, %v2949
  %v2951 = vpop.f32.mrf.mxu0
  %v2952 = vadd.f32 %v2903, %v2951
  %2953 = vmatmul.bf16.gmra.mxu0 %v689
  %v2954 = vpop.f32.mrf.mxu0
  %v2955 = vadd.f32 %v2906, %v2954
  %v2956 = vpop.f32.mrf.mxu0
  %v2957 = vadd.f32 %v2908, %v2956
  %2958 = vmatmul.bf16.gmra.mxu0 %v699
  %v2959 = vpop.f32.mrf.mxu0
  %v2960 = vadd.f32 %v2911, %v2959
  %v2961 = vpop.f32.mrf.mxu0
  %v2962 = vadd.f32 %v2913, %v2961
  %2963 = vmatmul.bf16.gmra.mxu0 %v709
  %v2964 = vpop.f32.mrf.mxu0
  %v2965 = vadd.f32 %v2916, %v2964
  %v2966 = vpop.f32.mrf.mxu0
  %v2967 = vadd.f32 %v2918, %v2966
  %2968 = vmatmul.bf16.gmra.mxu0 %v719
  %v2969 = vpop.f32.mrf.mxu0
  %v2970 = vadd.f32 %v2921, %v2969
  %v2971 = vpop.f32.mrf.mxu0
  %v2972 = vadd.f32 %v2923, %v2971
  %2973 = vmatmul.bf16.gmra.mxu0 %v729
  %v2974 = vpop.f32.mrf.mxu0
  %v2975 = vadd.f32 %v2926, %v2974
  %v2976 = vpop.f32.mrf.mxu0
  %v2977 = vadd.f32 %v2928, %v2976
  %2978 = vmatmul.bf16.gmra.mxu0 %v739
  %v2979 = vpop.f32.mrf.mxu0
  %v2980 = vadd.f32 %v2931, %v2979
  %v2981 = vpop.f32.mrf.mxu0
  %v2982 = vadd.f32 %v2933, %v2981
  %2983 = vdwg.mxu0
  %2984 = vmatpush.bf16.msra.mxu0 %v1836
  %2985 = vmatpush.bf16.msra.mxu0 %v1833
  %2986 = vmatpush.bf16.msra.mxu0 %v1830
  %2987 = vmatpush.bf16.msra.mxu0 %v1827
  %2988 = vmatpush.bf16.msra.mxu0 %v1824
  %2989 = vmatpush.bf16.msra.mxu0 %v1821
  %2990 = vmatpush.bf16.msra.mxu0 %v1818
  %2991 = vmatpush.bf16.msra.mxu0 %v1815
  %2992 = vmatmul.bf16.gmra.mxu0 %v670
  %v2993 = vpop.f32.mrf.mxu0
  %v2994 = vadd.f32 %v2945, %v2993
  %v2995 = vpop.f32.mrf.mxu0
  %v2996 = vadd.f32 %v2947, %v2995
  %2997 = vmatmul.bf16.gmra.mxu0 %v680
  %v2998 = vpop.f32.mrf.mxu0
  %v2999 = vadd.f32 %v2950, %v2998
  %v3000 = vpop.f32.mrf.mxu0
  %v3001 = vadd.f32 %v2952, %v3000
  %3002 = vmatmul.bf16.gmra.mxu0 %v690
  %v3003 = vpop.f32.mrf.mxu0
  %v3004 = vadd.f32 %v2955, %v3003
  %v3005 = vpop.f32.mrf.mxu0
  %v3006 = vadd.f32 %v2957, %v3005
  %3007 = vmatmul.bf16.gmra.mxu0 %v700
  %v3008 = vpop.f32.mrf.mxu0
  %v3009 = vadd.f32 %v2960, %v3008
  %v3010 = vpop.f32.mrf.mxu0
  %v3011 = vadd.f32 %v2962, %v3010
  %3012 = vmatmul.bf16.gmra.mxu0 %v710
  %v3013 = vpop.f32.mrf.mxu0
  %v3014 = vadd.f32 %v2965, %v3013
  %v3015 = vpop.f32.mrf.mxu0
  %v3016 = vadd.f32 %v2967, %v3015
  %3017 = vmatmul.bf16.gmra.mxu0 %v720
  %v3018 = vpop.f32.mrf.mxu0
  %v3019 = vadd.f32 %v2970, %v3018
  %v3020 = vpop.f32.mrf.mxu0
  %v3021 = vadd.f32 %v2972, %v3020
  %3022 = vmatmul.bf16.gmra.mxu0 %v730
  %v3023 = vpop.f32.mrf.mxu0
  %v3024 = vadd.f32 %v2975, %v3023
  %v3025 = vpop.f32.mrf.mxu0
  %v3026 = vadd.f32 %v2977, %v3025
  %3027 = vmatmul.bf16.gmra.mxu0 %v740
  %v3028 = vpop.f32.mrf.mxu0
  %v3029 = vadd.f32 %v2980, %v3028
  %v3030 = vpop.f32.mrf.mxu0
  %v3031 = vadd.f32 %v2982, %v3030
  %3032 = vdwg.mxu0
  %3033 = vmatpush.bf16.msra.mxu0 %v1860
  %3034 = vmatpush.bf16.msra.mxu0 %v1857
  %3035 = vmatpush.bf16.msra.mxu0 %v1854
  %3036 = vmatpush.bf16.msra.mxu0 %v1851
  %3037 = vmatpush.bf16.msra.mxu0 %v1848
  %3038 = vmatpush.bf16.msra.mxu0 %v1845
  %3039 = vmatpush.bf16.msra.mxu0 %v1842
  %3040 = vmatpush.bf16.msra.mxu0 %v1839
  %3041 = vmatmul.bf16.gmra.mxu0 %v671
  %v3042 = vpop.f32.mrf.mxu0
  %v3043 = vadd.f32 %v2994, %v3042
  %v3044 = vpop.f32.mrf.mxu0
  %v3045 = vadd.f32 %v2996, %v3044
  %3046 = vmatmul.bf16.gmra.mxu0 %v681
  %v3047 = vpop.f32.mrf.mxu0
  %v3048 = vadd.f32 %v2999, %v3047
  %v3049 = vpop.f32.mrf.mxu0
  %v3050 = vadd.f32 %v3001, %v3049
  %3051 = vmatmul.bf16.gmra.mxu0 %v691
  %v3052 = vpop.f32.mrf.mxu0
  %v3053 = vadd.f32 %v3004, %v3052
  %v3054 = vpop.f32.mrf.mxu0
  %v3055 = vadd.f32 %v3006, %v3054
  %3056 = vmatmul.bf16.gmra.mxu0 %v701
  %v3057 = vpop.f32.mrf.mxu0
  %v3058 = vadd.f32 %v3009, %v3057
  %v3059 = vpop.f32.mrf.mxu0
  %v3060 = vadd.f32 %v3011, %v3059
  %3061 = vmatmul.bf16.gmra.mxu0 %v711
  %v3062 = vpop.f32.mrf.mxu0
  %v3063 = vadd.f32 %v3014, %v3062
  %v3064 = vpop.f32.mrf.mxu0
  %v3065 = vadd.f32 %v3016, %v3064
  %3066 = vmatmul.bf16.gmra.mxu0 %v721
  %v3067 = vpop.f32.mrf.mxu0
  %v3068 = vadd.f32 %v3019, %v3067
  %v3069 = vpop.f32.mrf.mxu0
  %v3070 = vadd.f32 %v3021, %v3069
  %3071 = vmatmul.bf16.gmra.mxu0 %v731
  %v3072 = vpop.f32.mrf.mxu0
  %v3073 = vadd.f32 %v3024, %v3072
  %v3074 = vpop.f32.mrf.mxu0
  %v3075 = vadd.f32 %v3026, %v3074
  %3076 = vmatmul.bf16.gmra.mxu0 %v741
  %v3077 = vpop.f32.mrf.mxu0
  %v3078 = vadd.f32 %v3029, %v3077
  %v3079 = vpop.f32.mrf.mxu0
  %v3080 = vadd.f32 %v3031, %v3079
  %3081 = vdwg.mxu0
  %3082 = vmatpush.bf16.msra.mxu0 %v1645
  %3083 = vmatpush.bf16.msra.mxu0 %v1642
  %3084 = vmatpush.bf16.msra.mxu0 %v1639
  %3085 = vmatpush.bf16.msra.mxu0 %v1636
  %3086 = vmatpush.bf16.msra.mxu0 %v1633
  %3087 = vmatpush.bf16.msra.mxu0 %v1630
  %3088 = vmatpush.bf16.msra.mxu0 %v1627
  %3089 = vmatpush.bf16.msra.mxu0 %v1624
  %3090 = vmatmul.bf16.gmra.mxu0 %v662
  %v3091 = vpop.f32.mrf.mxu0
  %v3092 = vadd.f32 0.0, %v3091
  %v3093 = vpop.f32.mrf.mxu0
  %v3094 = vadd.f32 0.0, %v3093
  %3095 = vmatmul.bf16.gmra.mxu0 %v672
  %v3096 = vpop.f32.mrf.mxu0
  %v3097 = vadd.f32 0.0, %v3096
  %v3098 = vpop.f32.mrf.mxu0
  %v3099 = vadd.f32 0.0, %v3098
  %3100 = vmatmul.bf16.gmra.mxu0 %v682
  %v3101 = vpop.f32.mrf.mxu0
  %v3102 = vadd.f32 0.0, %v3101
  %v3103 = vpop.f32.mrf.mxu0
  %v3104 = vadd.f32 0.0, %v3103
  %3105 = vmatmul.bf16.gmra.mxu0 %v692
  %v3106 = vpop.f32.mrf.mxu0
  %v3107 = vadd.f32 0.0, %v3106
  %v3108 = vpop.f32.mrf.mxu0
  %v3109 = vadd.f32 0.0, %v3108
  %3110 = vmatmul.bf16.gmra.mxu0 %v702
  %v3111 = vpop.f32.mrf.mxu0
  %v3112 = vadd.f32 0.0, %v3111
  %v3113 = vpop.f32.mrf.mxu0
  %v3114 = vadd.f32 0.0, %v3113
  %3115 = vmatmul.bf16.gmra.mxu0 %v712
  %v3116 = vpop.f32.mrf.mxu0
  %v3117 = vadd.f32 0.0, %v3116
  %v3118 = vpop.f32.mrf.mxu0
  %v3119 = vadd.f32 0.0, %v3118
  %3120 = vmatmul.bf16.gmra.mxu0 %v722
  %v3121 = vpop.f32.mrf.mxu0
  %v3122 = vadd.f32 0.0, %v3121
  %v3123 = vpop.f32.mrf.mxu0
  %v3124 = vadd.f32 0.0, %v3123
  %3125 = vmatmul.bf16.gmra.mxu0 %v732
  %v3126 = vpop.f32.mrf.mxu0
  %v3127 = vadd.f32 0.0, %v3126
  %v3128 = vpop.f32.mrf.mxu0
  %v3129 = vadd.f32 0.0, %v3128
  %3130 = vdwg.mxu0
  %3131 = vmatpush.bf16.msra.mxu0 %v1669
  %3132 = vmatpush.bf16.msra.mxu0 %v1666
  %3133 = vmatpush.bf16.msra.mxu0 %v1663
  %3134 = vmatpush.bf16.msra.mxu0 %v1660
  %3135 = vmatpush.bf16.msra.mxu0 %v1657
  %3136 = vmatpush.bf16.msra.mxu0 %v1654
  %3137 = vmatpush.bf16.msra.mxu0 %v1651
  %3138 = vmatpush.bf16.msra.mxu0 %v1648
  %3139 = vmatmul.bf16.gmra.mxu0 %v663
  %v3140 = vpop.f32.mrf.mxu0
  %v3141 = vadd.f32 %v3092, %v3140
  %v3142 = vpop.f32.mrf.mxu0
  %v3143 = vadd.f32 %v3094, %v3142
  %3144 = vmatmul.bf16.gmra.mxu0 %v673
  %v3145 = vpop.f32.mrf.mxu0
  %v3146 = vadd.f32 %v3097, %v3145
  %v3147 = vpop.f32.mrf.mxu0
  %v3148 = vadd.f32 %v3099, %v3147
  %3149 = vmatmul.bf16.gmra.mxu0 %v683
  %v3150 = vpop.f32.mrf.mxu0
  %v3151 = vadd.f32 %v3102, %v3150
  %v3152 = vpop.f32.mrf.mxu0
  %v3153 = vadd.f32 %v3104, %v3152
  %3154 = vmatmul.bf16.gmra.mxu0 %v693
  %v3155 = vpop.f32.mrf.mxu0
  %v3156 = vadd.f32 %v3107, %v3155
  %v3157 = vpop.f32.mrf.mxu0
  %v3158 = vadd.f32 %v3109, %v3157
  %3159 = vmatmul.bf16.gmra.mxu0 %v703
  %v3160 = vpop.f32.mrf.mxu0
  %v3161 = vadd.f32 %v3112, %v3160
  %v3162 = vpop.f32.mrf.mxu0
  %v3163 = vadd.f32 %v3114, %v3162
  %3164 = vmatmul.bf16.gmra.mxu0 %v713
  %v3165 = vpop.f32.mrf.mxu0
  %v3166 = vadd.f32 %v3117, %v3165
  %v3167 = vpop.f32.mrf.mxu0
  %v3168 = vadd.f32 %v3119, %v3167
  %3169 = vmatmul.bf16.gmra.mxu0 %v723
  %v3170 = vpop.f32.mrf.mxu0
  %v3171 = vadd.f32 %v3122, %v3170
  %v3172 = vpop.f32.mrf.mxu0
  %v3173 = vadd.f32 %v3124, %v3172
  %3174 = vmatmul.bf16.gmra.mxu0 %v733
  %v3175 = vpop.f32.mrf.mxu0
  %v3176 = vadd.f32 %v3127, %v3175
  %v3177 = vpop.f32.mrf.mxu0
  %v3178 = vadd.f32 %v3129, %v3177
  %3179 = vdwg.mxu0
  %3180 = vmatpush.bf16.msra.mxu0 %v1693
  %3181 = vmatpush.bf16.msra.mxu0 %v1690
  %3182 = vmatpush.bf16.msra.mxu0 %v1687
  %3183 = vmatpush.bf16.msra.mxu0 %v1684
  %3184 = vmatpush.bf16.msra.mxu0 %v1681
  %3185 = vmatpush.bf16.msra.mxu0 %v1678
  %3186 = vmatpush.bf16.msra.mxu0 %v1675
  %3187 = vmatpush.bf16.msra.mxu0 %v1672
  %3188 = vmatmul.bf16.gmra.mxu0 %v664
  %v3189 = vpop.f32.mrf.mxu0
  %v3190 = vadd.f32 %v3141, %v3189
  %v3191 = vpop.f32.mrf.mxu0
  %v3192 = vadd.f32 %v3143, %v3191
  %3193 = vmatmul.bf16.gmra.mxu0 %v674
  %v3194 = vpop.f32.mrf.mxu0
  %v3195 = vadd.f32 %v3146, %v3194
  %v3196 = vpop.f32.mrf.mxu0
  %v3197 = vadd.f32 %v3148, %v3196
  %3198 = vmatmul.bf16.gmra.mxu0 %v684
  %v3199 = vpop.f32.mrf.mxu0
  %v3200 = vadd.f32 %v3151, %v3199
  %v3201 = vpop.f32.mrf.mxu0
  %v3202 = vadd.f32 %v3153, %v3201
  %3203 = vmatmul.bf16.gmra.mxu0 %v694
  %v3204 = vpop.f32.mrf.mxu0
  %v3205 = vadd.f32 %v3156, %v3204
  %v3206 = vpop.f32.mrf.mxu0
  %v3207 = vadd.f32 %v3158, %v3206
  %3208 = vmatmul.bf16.gmra.mxu0 %v704
  %v3209 = vpop.f32.mrf.mxu0
  %v3210 = vadd.f32 %v3161, %v3209
  %v3211 = vpop.f32.mrf.mxu0
  %v3212 = vadd.f32 %v3163, %v3211
  %3213 = vmatmul.bf16.gmra.mxu0 %v714
  %v3214 = vpop.f32.mrf.mxu0
  %v3215 = vadd.f32 %v3166, %v3214
  %v3216 = vpop.f32.mrf.mxu0
  %v3217 = vadd.f32 %v3168, %v3216
  %3218 = vmatmul.bf16.gmra.mxu0 %v724
  %v3219 = vpop.f32.mrf.mxu0
  %v3220 = vadd.f32 %v3171, %v3219
  %v3221 = vpop.f32.mrf.mxu0
  %v3222 = vadd.f32 %v3173, %v3221
  %3223 = vmatmul.bf16.gmra.mxu0 %v734
  %v3224 = vpop.f32.mrf.mxu0
  %v3225 = vadd.f32 %v3176, %v3224
  %v3226 = vpop.f32.mrf.mxu0
  %v3227 = vadd.f32 %v3178, %v3226
  %3228 = vdwg.mxu0
  %3229 = vmatpush.bf16.msra.mxu0 %v1717
  %3230 = vmatpush.bf16.msra.mxu0 %v1714
  %3231 = vmatpush.bf16.msra.mxu0 %v1711
  %3232 = vmatpush.bf16.msra.mxu0 %v1708
  %3233 = vmatpush.bf16.msra.mxu0 %v1705
  %3234 = vmatpush.bf16.msra.mxu0 %v1702
  %3235 = vmatpush.bf16.msra.mxu0 %v1699
  %3236 = vmatpush.bf16.msra.mxu0 %v1696
  %3237 = vmatmul.bf16.gmra.mxu0 %v665
  %v3238 = vpop.f32.mrf.mxu0
  %v3239 = vadd.f32 %v3190, %v3238
  %v3240 = vpop.f32.mrf.mxu0
  %v3241 = vadd.f32 %v3192, %v3240
  %3242 = vmatmul.bf16.gmra.mxu0 %v675
  %v3243 = vpop.f32.mrf.mxu0
  %v3244 = vadd.f32 %v3195, %v3243
  %v3245 = vpop.f32.mrf.mxu0
  %v3246 = vadd.f32 %v3197, %v3245
  %3247 = vmatmul.bf16.gmra.mxu0 %v685
  %v3248 = vpop.f32.mrf.mxu0
  %v3249 = vadd.f32 %v3200, %v3248
  %v3250 = vpop.f32.mrf.mxu0
  %v3251 = vadd.f32 %v3202, %v3250
  %3252 = vmatmul.bf16.gmra.mxu0 %v695
  %v3253 = vpop.f32.mrf.mxu0
  %v3254 = vadd.f32 %v3205, %v3253
  %v3255 = vpop.f32.mrf.mxu0
  %v3256 = vadd.f32 %v3207, %v3255
  %3257 = vmatmul.bf16.gmra.mxu0 %v705
  %v3258 = vpop.f32.mrf.mxu0
  %v3259 = vadd.f32 %v3210, %v3258
  %v3260 = vpop.f32.mrf.mxu0
  %v3261 = vadd.f32 %v3212, %v3260
  %3262 = vmatmul.bf16.gmra.mxu0 %v715
  %v3263 = vpop.f32.mrf.mxu0
  %v3264 = vadd.f32 %v3215, %v3263
  %v3265 = vpop.f32.mrf.mxu0
  %v3266 = vadd.f32 %v3217, %v3265
  %3267 = vmatmul.bf16.gmra.mxu0 %v725
  %v3268 = vpop.f32.mrf.mxu0
  %v3269 = vadd.f32 %v3220, %v3268
  %v3270 = vpop.f32.mrf.mxu0
  %v3271 = vadd.f32 %v3222, %v3270
  %3272 = vmatmul.bf16.gmra.mxu0 %v735
  %v3273 = vpop.f32.mrf.mxu0
  %v3274 = vadd.f32 %v3225, %v3273
  %v3275 = vpop.f32.mrf.mxu0
  %v3276 = vadd.f32 %v3227, %v3275
  %3277 = vdwg.mxu0
  %3278 = vmatpush.bf16.msra.mxu0 %v1741
  %3279 = vmatpush.bf16.msra.mxu0 %v1738
  %3280 = vmatpush.bf16.msra.mxu0 %v1735
  %3281 = vmatpush.bf16.msra.mxu0 %v1732
  %3282 = vmatpush.bf16.msra.mxu0 %v1729
  %3283 = vmatpush.bf16.msra.mxu0 %v1726
  %3284 = vmatpush.bf16.msra.mxu0 %v1723
  %3285 = vmatpush.bf16.msra.mxu0 %v1720
  %3286 = vmatmul.bf16.gmra.mxu0 %v666
  %v3287 = vpop.f32.mrf.mxu0
  %v3288 = vadd.f32 %v3239, %v3287
  %v3289 = vpop.f32.mrf.mxu0
  %v3290 = vadd.f32 %v3241, %v3289
  %3291 = vmatmul.bf16.gmra.mxu0 %v676
  %v3292 = vpop.f32.mrf.mxu0
  %v3293 = vadd.f32 %v3244, %v3292
  %v3294 = vpop.f32.mrf.mxu0
  %v3295 = vadd.f32 %v3246, %v3294
  %3296 = vmatmul.bf16.gmra.mxu0 %v686
  %v3297 = vpop.f32.mrf.mxu0
  %v3298 = vadd.f32 %v3249, %v3297
  %v3299 = vpop.f32.mrf.mxu0
  %v3300 = vadd.f32 %v3251, %v3299
  %3301 = vmatmul.bf16.gmra.mxu0 %v696
  %v3302 = vpop.f32.mrf.mxu0
  %v3303 = vadd.f32 %v3254, %v3302
  %v3304 = vpop.f32.mrf.mxu0
  %v3305 = vadd.f32 %v3256, %v3304
  %3306 = vmatmul.bf16.gmra.mxu0 %v706
  %v3307 = vpop.f32.mrf.mxu0
  %v3308 = vadd.f32 %v3259, %v3307
  %v3309 = vpop.f32.mrf.mxu0
  %v3310 = vadd.f32 %v3261, %v3309
  %3311 = vmatmul.bf16.gmra.mxu0 %v716
  %v3312 = vpop.f32.mrf.mxu0
  %v3313 = vadd.f32 %v3264, %v3312
  %v3314 = vpop.f32.mrf.mxu0
  %v3315 = vadd.f32 %v3266, %v3314
  %3316 = vmatmul.bf16.gmra.mxu0 %v726
  %v3317 = vpop.f32.mrf.mxu0
  %v3318 = vadd.f32 %v3269, %v3317
  %v3319 = vpop.f32.mrf.mxu0
  %v3320 = vadd.f32 %v3271, %v3319
  %3321 = vmatmul.bf16.gmra.mxu0 %v736
  %v3322 = vpop.f32.mrf.mxu0
  %v3323 = vadd.f32 %v3274, %v3322
  %v3324 = vpop.f32.mrf.mxu0
  %v3325 = vadd.f32 %v3276, %v3324
  %3326 = vdwg.mxu0
  %3327 = vmatpush.bf16.msra.mxu0 %v1765
  %3328 = vmatpush.bf16.msra.mxu0 %v1762
  %3329 = vmatpush.bf16.msra.mxu0 %v1759
  %3330 = vmatpush.bf16.msra.mxu0 %v1756
  %3331 = vmatpush.bf16.msra.mxu0 %v1753
  %3332 = vmatpush.bf16.msra.mxu0 %v1750
  %3333 = vmatpush.bf16.msra.mxu0 %v1747
  %3334 = vmatpush.bf16.msra.mxu0 %v1744
  %3335 = vmatmul.bf16.gmra.mxu0 %v667
  %v3336 = vpop.f32.mrf.mxu0
  %v3337 = vadd.f32 %v3288, %v3336
  %v3338 = vpop.f32.mrf.mxu0
  %v3339 = vadd.f32 %v3290, %v3338
  %3340 = vmatmul.bf16.gmra.mxu0 %v677
  %v3341 = vpop.f32.mrf.mxu0
  %v3342 = vadd.f32 %v3293, %v3341
  %v3343 = vpop.f32.mrf.mxu0
  %v3344 = vadd.f32 %v3295, %v3343
  %3345 = vmatmul.bf16.gmra.mxu0 %v687
  %v3346 = vpop.f32.mrf.mxu0
  %v3347 = vadd.f32 %v3298, %v3346
  %v3348 = vpop.f32.mrf.mxu0
  %v3349 = vadd.f32 %v3300, %v3348
  %3350 = vmatmul.bf16.gmra.mxu0 %v697
  %v3351 = vpop.f32.mrf.mxu0
  %v3352 = vadd.f32 %v3303, %v3351
  %v3353 = vpop.f32.mrf.mxu0
  %v3354 = vadd.f32 %v3305, %v3353
  %3355 = vmatmul.bf16.gmra.mxu0 %v707
  %v3356 = vpop.f32.mrf.mxu0
  %v3357 = vadd.f32 %v3308, %v3356
  %v3358 = vpop.f32.mrf.mxu0
  %v3359 = vadd.f32 %v3310, %v3358
  %3360 = vmatmul.bf16.gmra.mxu0 %v717
  %v3361 = vpop.f32.mrf.mxu0
  %v3362 = vadd.f32 %v3313, %v3361
  %v3363 = vpop.f32.mrf.mxu0
  %v3364 = vadd.f32 %v3315, %v3363
  %3365 = vmatmul.bf16.gmra.mxu0 %v727
  %v3366 = vpop.f32.mrf.mxu0
  %v3367 = vadd.f32 %v3318, %v3366
  %v3368 = vpop.f32.mrf.mxu0
  %v3369 = vadd.f32 %v3320, %v3368
  %3370 = vmatmul.bf16.gmra.mxu0 %v737
  %v3371 = vpop.f32.mrf.mxu0
  %v3372 = vadd.f32 %v3323, %v3371
  %v3373 = vpop.f32.mrf.mxu0
  %v3374 = vadd.f32 %v3325, %v3373
  %3375 = vdwg.mxu0
  %3376 = vmatpush.bf16.msra.mxu0 %v1789
  %3377 = vmatpush.bf16.msra.mxu0 %v1786
  %3378 = vmatpush.bf16.msra.mxu0 %v1783
  %3379 = vmatpush.bf16.msra.mxu0 %v1780
  %3380 = vmatpush.bf16.msra.mxu0 %v1777
  %3381 = vmatpush.bf16.msra.mxu0 %v1774
  %3382 = vmatpush.bf16.msra.mxu0 %v1771
  %3383 = vmatpush.bf16.msra.mxu0 %v1768
  %3384 = vmatmul.bf16.gmra.mxu0 %v668
  %v3385 = vpop.f32.mrf.mxu0
  %v3386 = vadd.f32 %v3337, %v3385
  %v3387 = vpop.f32.mrf.mxu0
  %v3388 = vadd.f32 %v3339, %v3387
  %3389 = vmatmul.bf16.gmra.mxu0 %v678
  %v3390 = vpop.f32.mrf.mxu0
  %v3391 = vadd.f32 %v3342, %v3390
  %v3392 = vpop.f32.mrf.mxu0
  %v3393 = vadd.f32 %v3344, %v3392
  %3394 = vmatmul.bf16.gmra.mxu0 %v688
  %v3395 = vpop.f32.mrf.mxu0
  %v3396 = vadd.f32 %v3347, %v3395
  %v3397 = vpop.f32.mrf.mxu0
  %v3398 = vadd.f32 %v3349, %v3397
  %3399 = vmatmul.bf16.gmra.mxu0 %v698
  %v3400 = vpop.f32.mrf.mxu0
  %v3401 = vadd.f32 %v3352, %v3400
  %v3402 = vpop.f32.mrf.mxu0
  %v3403 = vadd.f32 %v3354, %v3402
  %3404 = vmatmul.bf16.gmra.mxu0 %v708
  %v3405 = vpop.f32.mrf.mxu0
  %v3406 = vadd.f32 %v3357, %v3405
  %v3407 = vpop.f32.mrf.mxu0
  %v3408 = vadd.f32 %v3359, %v3407
  %3409 = vmatmul.bf16.gmra.mxu0 %v718
  %v3410 = vpop.f32.mrf.mxu0
  %v3411 = vadd.f32 %v3362, %v3410
  %v3412 = vpop.f32.mrf.mxu0
  %v3413 = vadd.f32 %v3364, %v3412
  %3414 = vmatmul.bf16.gmra.mxu0 %v728
  %v3415 = vpop.f32.mrf.mxu0
  %v3416 = vadd.f32 %v3367, %v3415
  %v3417 = vpop.f32.mrf.mxu0
  %v3418 = vadd.f32 %v3369, %v3417
  %3419 = vmatmul.bf16.gmra.mxu0 %v738
  %v3420 = vpop.f32.mrf.mxu0
  %v3421 = vadd.f32 %v3372, %v3420
  %v3422 = vpop.f32.mrf.mxu0
  %v3423 = vadd.f32 %v3374, %v3422
  %3424 = vdwg.mxu0
  %3425 = vmatpush.bf16.msra.mxu0 %v1813
  %3426 = vmatpush.bf16.msra.mxu0 %v1810
  %3427 = vmatpush.bf16.msra.mxu0 %v1807
  %3428 = vmatpush.bf16.msra.mxu0 %v1804
  %3429 = vmatpush.bf16.msra.mxu0 %v1801
  %3430 = vmatpush.bf16.msra.mxu0 %v1798
  %3431 = vmatpush.bf16.msra.mxu0 %v1795
  %3432 = vmatpush.bf16.msra.mxu0 %v1792
  %3433 = vmatmul.bf16.gmra.mxu0 %v669
  %v3434 = vpop.f32.mrf.mxu0
  %v3435 = vadd.f32 %v3386, %v3434
  %v3436 = vpop.f32.mrf.mxu0
  %v3437 = vadd.f32 %v3388, %v3436
  %3438 = vmatmul.bf16.gmra.mxu0 %v679
  %v3439 = vpop.f32.mrf.mxu0
  %v3440 = vadd.f32 %v3391, %v3439
  %v3441 = vpop.f32.mrf.mxu0
  %v3442 = vadd.f32 %v3393, %v3441
  %3443 = vmatmul.bf16.gmra.mxu0 %v689
  %v3444 = vpop.f32.mrf.mxu0
  %v3445 = vadd.f32 %v3396, %v3444
  %v3446 = vpop.f32.mrf.mxu0
  %v3447 = vadd.f32 %v3398, %v3446
  %3448 = vmatmul.bf16.gmra.mxu0 %v699
  %v3449 = vpop.f32.mrf.mxu0
  %v3450 = vadd.f32 %v3401, %v3449
  %v3451 = vpop.f32.mrf.mxu0
  %v3452 = vadd.f32 %v3403, %v3451
  %3453 = vmatmul.bf16.gmra.mxu0 %v709
  %v3454 = vpop.f32.mrf.mxu0
  %v3455 = vadd.f32 %v3406, %v3454
  %v3456 = vpop.f32.mrf.mxu0
  %v3457 = vadd.f32 %v3408, %v3456
  %3458 = vmatmul.bf16.gmra.mxu0 %v719
  %v3459 = vpop.f32.mrf.mxu0
  %v3460 = vadd.f32 %v3411, %v3459
  %v3461 = vpop.f32.mrf.mxu0
  %v3462 = vadd.f32 %v3413, %v3461
  %3463 = vmatmul.bf16.gmra.mxu0 %v729
  %v3464 = vpop.f32.mrf.mxu0
  %v3465 = vadd.f32 %v3416, %v3464
  %v3466 = vpop.f32.mrf.mxu0
  %v3467 = vadd.f32 %v3418, %v3466
  %3468 = vmatmul.bf16.gmra.mxu0 %v739
  %v3469 = vpop.f32.mrf.mxu0
  %v3470 = vadd.f32 %v3421, %v3469
  %v3471 = vpop.f32.mrf.mxu0
  %v3472 = vadd.f32 %v3423, %v3471
  %3473 = vdwg.mxu0
  %3474 = vmatpush.bf16.msra.mxu0 %v1837
  %3475 = vmatpush.bf16.msra.mxu0 %v1834
  %3476 = vmatpush.bf16.msra.mxu0 %v1831
  %3477 = vmatpush.bf16.msra.mxu0 %v1828
  %3478 = vmatpush.bf16.msra.mxu0 %v1825
  %3479 = vmatpush.bf16.msra.mxu0 %v1822
  %3480 = vmatpush.bf16.msra.mxu0 %v1819
  %3481 = vmatpush.bf16.msra.mxu0 %v1816
  %3482 = vmatmul.bf16.gmra.mxu0 %v670
  %v3483 = vpop.f32.mrf.mxu0
  %v3484 = vadd.f32 %v3435, %v3483
  %v3485 = vpop.f32.mrf.mxu0
  %v3486 = vadd.f32 %v3437, %v3485
  %3487 = vmatmul.bf16.gmra.mxu0 %v680
  %v3488 = vpop.f32.mrf.mxu0
  %v3489 = vadd.f32 %v3440, %v3488
  %v3490 = vpop.f32.mrf.mxu0
  %v3491 = vadd.f32 %v3442, %v3490
  %3492 = vmatmul.bf16.gmra.mxu0 %v690
  %v3493 = vpop.f32.mrf.mxu0
  %v3494 = vadd.f32 %v3445, %v3493
  %v3495 = vpop.f32.mrf.mxu0
  %v3496 = vadd.f32 %v3447, %v3495
  %3497 = vmatmul.bf16.gmra.mxu0 %v700
  %v3498 = vpop.f32.mrf.mxu0
  %v3499 = vadd.f32 %v3450, %v3498
  %v3500 = vpop.f32.mrf.mxu0
  %v3501 = vadd.f32 %v3452, %v3500
  %3502 = vmatmul.bf16.gmra.mxu0 %v710
  %v3503 = vpop.f32.mrf.mxu0
  %v3504 = vadd.f32 %v3455, %v3503
  %v3505 = vpop.f32.mrf.mxu0
  %v3506 = vadd.f32 %v3457, %v3505
  %3507 = vmatmul.bf16.gmra.mxu0 %v720
  %v3508 = vpop.f32.mrf.mxu0
  %v3509 = vadd.f32 %v3460, %v3508
  %v3510 = vpop.f32.mrf.mxu0
  %v3511 = vadd.f32 %v3462, %v3510
  %3512 = vmatmul.bf16.gmra.mxu0 %v730
  %v3513 = vpop.f32.mrf.mxu0
  %v3514 = vadd.f32 %v3465, %v3513
  %v3515 = vpop.f32.mrf.mxu0
  %v3516 = vadd.f32 %v3467, %v3515
  %3517 = vmatmul.bf16.gmra.mxu0 %v740
  %v3518 = vpop.f32.mrf.mxu0
  %v3519 = vadd.f32 %v3470, %v3518
  %v3520 = vpop.f32.mrf.mxu0
  %v3521 = vadd.f32 %v3472, %v3520
  %3522 = vdwg.mxu0
  %3523 = vmatpush.bf16.msra.mxu0 %v1861
  %3524 = vmatpush.bf16.msra.mxu0 %v1858
  %3525 = vmatpush.bf16.msra.mxu0 %v1855
  %3526 = vmatpush.bf16.msra.mxu0 %v1852
  %3527 = vmatpush.bf16.msra.mxu0 %v1849
  %3528 = vmatpush.bf16.msra.mxu0 %v1846
  %3529 = vmatpush.bf16.msra.mxu0 %v1843
  %3530 = vmatpush.bf16.msra.mxu0 %v1840
  %3531 = vmatmul.bf16.gmra.mxu0 %v671
  %v3532 = vpop.f32.mrf.mxu0
  %v3533 = vadd.f32 %v3484, %v3532
  %v3534 = vpop.f32.mrf.mxu0
  %v3535 = vadd.f32 %v3486, %v3534
  %3536 = vmatmul.bf16.gmra.mxu0 %v681
  %v3537 = vpop.f32.mrf.mxu0
  %v3538 = vadd.f32 %v3489, %v3537
  %v3539 = vpop.f32.mrf.mxu0
  %v3540 = vadd.f32 %v3491, %v3539
  %3541 = vmatmul.bf16.gmra.mxu0 %v691
  %v3542 = vpop.f32.mrf.mxu0
  %v3543 = vadd.f32 %v3494, %v3542
  %v3544 = vpop.f32.mrf.mxu0
  %v3545 = vadd.f32 %v3496, %v3544
  %3546 = vmatmul.bf16.gmra.mxu0 %v701
  %v3547 = vpop.f32.mrf.mxu0
  %v3548 = vadd.f32 %v3499, %v3547
  %v3549 = vpop.f32.mrf.mxu0
  %v3550 = vadd.f32 %v3501, %v3549
  %3551 = vmatmul.bf16.gmra.mxu0 %v711
  %v3552 = vpop.f32.mrf.mxu0
  %v3553 = vadd.f32 %v3504, %v3552
  %v3554 = vpop.f32.mrf.mxu0
  %v3555 = vadd.f32 %v3506, %v3554
  %3556 = vmatmul.bf16.gmra.mxu0 %v721
  %v3557 = vpop.f32.mrf.mxu0
  %v3558 = vadd.f32 %v3509, %v3557
  %v3559 = vpop.f32.mrf.mxu0
  %v3560 = vadd.f32 %v3511, %v3559
  %3561 = vmatmul.bf16.gmra.mxu0 %v731
  %v3562 = vpop.f32.mrf.mxu0
  %v3563 = vadd.f32 %v3514, %v3562
  %v3564 = vpop.f32.mrf.mxu0
  %v3565 = vadd.f32 %v3516, %v3564
  %3566 = vmatmul.bf16.gmra.mxu0 %v741
  %v3567 = vpop.f32.mrf.mxu0
  %v3568 = vadd.f32 %v3519, %v3567
  %v3569 = vpop.f32.mrf.mxu0
  %v3570 = vadd.f32 %v3521, %v3569
  %3571 = vdwg.mxu0
  %vm3572 = vcmask 261120
  %3573 = vst.msk [vmem:[#allocation2] sm:$0xff] %vm3572, 0.0
  %vm3574 = vcmask 254976
  %3575 = vst.msk [vmem:[#allocation2 + $0x8] sm:$0x3] %vm3574, 0.0
  %3576 = vst.msk [vmem:[#allocation2 + $0x10] sm:$0xff] %vm3572, 0.0
  %3577 = vst.msk [vmem:[#allocation2 + $0x18] sm:$0x3] %vm3574, 0.0
  %3578 = vst.msk [vmem:[#allocation2 + $0x20] sm:$0xff] %vm3572, 0.0
  %3579 = vst.msk [vmem:[#allocation2 + $0x28] sm:$0x3] %vm3574, 0.0
  %3580 = vst.msk [vmem:[#allocation2 + $0x30] sm:$0xff] %vm3572, 0.0
  %3581 = vst.msk [vmem:[#allocation2 + $0x38] sm:$0x3] %vm3574, 0.0
  %3582 = vst.msk [vmem:[#allocation2 + $0x40] sm:$0xff] %vm3572, 0.0
  %3583 = vst.msk [vmem:[#allocation2 + $0x48] sm:$0x3] %vm3574, 0.0
  %3584 = vst.msk [vmem:[#allocation2 + $0x50] sm:$0xff] %vm3572, 0.0
  %3585 = vst.msk [vmem:[#allocation2 + $0x58] sm:$0x3] %vm3574, 0.0
  %3586 = vst.msk [vmem:[#allocation2 + $0x60] sm:$0xff] %vm3572, 0.0
  %3587 = vst.msk [vmem:[#allocation2 + $0x68] sm:$0x3] %vm3574, 0.0
  %3588 = vst.msk [vmem:[#allocation2 + $0x70] sm:$0xff] %vm3572, 0.0
  %3589 = vst.msk [vmem:[#allocation2 + $0x78] sm:$0x3] %vm3574, 0.0
  %3590 = vst.msk [vmem:[#allocation2 + $0x80] sm:$0xff] %vm3572, 0.0
  %3591 = vst.msk [vmem:[#allocation2 + $0x88] sm:$0x3] %vm3574, 0.0
  %3592 = vst.msk [vmem:[#allocation2 + $0x90] sm:$0xff] %vm3572, 0.0
  %3593 = vst.msk [vmem:[#allocation2 + $0x98] sm:$0x3] %vm3574, 0.0
  %3594 = vst.msk [vmem:[#allocation2 + $0xa0] sm:$0xff] %vm3572, 0.0
  %3595 = vst.msk [vmem:[#allocation2 + $0xa8] sm:$0x3] %vm3574, 0.0
  %3596 = vst.msk [vmem:[#allocation2 + $0xb0] sm:$0xff] %vm3572, 0.0
  %3597 = vst.msk [vmem:[#allocation2 + $0xb8] sm:$0x3] %vm3574, 0.0
  %3598 = vst.msk [vmem:[#allocation2 + $0xc0] sm:$0xff] %vm3572, 0.0
  %3599 = vst.msk [vmem:[#allocation2 + $0xc8] sm:$0x3] %vm3574, 0.0
  %3600 = vst.msk [vmem:[#allocation2 + $0xd0] sm:$0xff] %vm3572, 0.0
  %3601 = vst.msk [vmem:[#allocation2 + $0xd8] sm:$0x3] %vm3574, 0.0
  %3602 = vst.msk [vmem:[#allocation2 + $0xe0] sm:$0xff] %vm3572, 0.0
  %3603 = vst.msk [vmem:[#allocation2 + $0xe8] sm:$0x3] %vm3574, 0.0
  %3604 = vst.msk [vmem:[#allocation2 + $0xf0] sm:$0xff] %vm3572, 0.0
  %3605 = vst.msk [vmem:[#allocation2 + $0xf8] sm:$0x3] %vm3574, 0.0
  %3606 = vst.msk [vmem:[#allocation2 + $0x100] sm:$0xff] %vm3572, 0.0
  %3607 = vst.msk [vmem:[#allocation2 + $0x108] sm:$0x3] %vm3574, 0.0
  %3608 = vst.msk [vmem:[#allocation2 + $0x110] sm:$0xff] %vm3572, 0.0
  %3609 = vst.msk [vmem:[#allocation2 + $0x118] sm:$0x3] %vm3574, 0.0
  %3610 = vst.msk [vmem:[#allocation2 + $0x120] sm:$0xff] %vm3572, 0.0
  %3611 = vst.msk [vmem:[#allocation2 + $0x128] sm:$0x3] %vm3574, 0.0
  %3612 = vst.msk [vmem:[#allocation2 + $0x130] sm:$0xff] %vm3572, 0.0
  %3613 = vst.msk [vmem:[#allocation2 + $0x138] sm:$0x3] %vm3574, 0.0
  %s3614 = scalar_lea.vmem [#allocation2], 32
  %v3615 = vld [vmem:[%s3614 + $0x2] sm:$0xff]
  %v3616 = vld [vmem:[%s3614 + $0x12] sm:$0xff]
  %v3617 = vld [vmem:[%s3614 + $0x22] sm:$0xff]
  %v3618 = vld [vmem:[%s3614 + $0x32] sm:$0xff]
  %v3619 = vld [vmem:[%s3614 + $0x42] sm:$0xff]
  %v3620 = vld [vmem:[%s3614 + $0x52] sm:$0xff]
  %v3621 = vld [vmem:[%s3614 + $0x62] sm:$0xff]
  %v3622 = vld [vmem:[%s3614 + $0x72] sm:$0xff]
  %v3623 = vld [vmem:[%s3614 + $0xa2] sm:$0xff]
  %v3624 = vld [vmem:[%s3614 + $0xb2] sm:$0xff]
  %v3625 = vld [vmem:[%s3614 + $0xc2] sm:$0xff]
  %v3626 = vld [vmem:[%s3614 + $0xd2] sm:$0xff]
  %v3627 = vld [vmem:[%s3614 + $0xe2] sm:$0xff]
  %v3628 = vld [vmem:[%s3614 + $0xf2] sm:$0xff]
  %v3629 = vld [vmem:[%s3614 + $0x102] sm:$0xff]
  %v3630 = vld [vmem:[%s3614 + $0x112] sm:$0xff]
  %v3631 = vadd.f32 %v3615, %v2553
  %v3632 = vadd.f32 %v3616, %v2555
  %v3633 = vadd.f32 %v3617, %v2558
  %v3634 = vadd.f32 %v3618, %v2560
  %v3635 = vadd.f32 %v3619, %v2563
  %v3636 = vadd.f32 %v3620, %v2565
  %v3637 = vadd.f32 %v3621, %v2568
  %v3638 = vadd.f32 %v3622, %v2570
  %v3639 = vadd.f32 %v3623, %v2573
  %v3640 = vadd.f32 %v3624, %v2575
  %v3641 = vadd.f32 %v3625, %v2578
  %v3642 = vadd.f32 %v3626, %v2580
  %v3643 = vadd.f32 %v3627, %v2583
  %v3644 = vadd.f32 %v3628, %v2585
  %v3645 = vadd.f32 %v3629, %v2588
  %v3646 = vadd.f32 %v3630, %v2590
  %3647 = vst.msk [vmem:[%s3614 + $0x2] sm:$0xff] %vm3572, %v3631
  %3648 = vst.msk [vmem:[%s3614 + $0x12] sm:$0xff] %vm3572, %v3632
  %3649 = vst.msk [vmem:[%s3614 + $0x22] sm:$0xff] %vm3572, %v3633
  %3650 = vst.msk [vmem:[%s3614 + $0x32] sm:$0xff] %vm3572, %v3634
  %3651 = vst.msk [vmem:[%s3614 + $0x42] sm:$0xff] %vm3572, %v3635
  %3652 = vst.msk [vmem:[%s3614 + $0x52] sm:$0xff] %vm3572, %v3636
  %3653 = vst.msk [vmem:[%s3614 + $0x62] sm:$0xff] %vm3572, %v3637
  %3654 = vst.msk [vmem:[%s3614 + $0x72] sm:$0xff] %vm3572, %v3638
  %3655 = vst.msk [vmem:[%s3614 + $0xa2] sm:$0xff] %vm3572, %v3639
  %3656 = vst.msk [vmem:[%s3614 + $0xb2] sm:$0xff] %vm3572, %v3640
  %3657 = vst.msk [vmem:[%s3614 + $0xc2] sm:$0xff] %vm3572, %v3641
  %3658 = vst.msk [vmem:[%s3614 + $0xd2] sm:$0xff] %vm3572, %v3642
  %3659 = vst.msk [vmem:[%s3614 + $0xe2] sm:$0xff] %vm3572, %v3643
  %3660 = vst.msk [vmem:[%s3614 + $0xf2] sm:$0xff] %vm3572, %v3644
  %3661 = vst.msk [vmem:[%s3614 + $0x102] sm:$0xff] %vm3572, %v3645
  %3662 = vst.msk [vmem:[%s3614 + $0x112] sm:$0xff] %vm3572, %v3646
  %v3663 = vld [vmem:[%s3614 + $0x1] sm:$0xff]
  %v3664 = vld [vmem:[%s3614 + $0x11] sm:$0xff]
  %v3665 = vld [vmem:[%s3614 + $0x21] sm:$0xff]
  %v3666 = vld [vmem:[%s3614 + $0x31] sm:$0xff]
  %v3667 = vld [vmem:[%s3614 + $0x41] sm:$0xff]
  %v3668 = vld [vmem:[%s3614 + $0x51] sm:$0xff]
  %v3669 = vld [vmem:[%s3614 + $0x61] sm:$0xff]
  %v3670 = vld [vmem:[%s3614 + $0x71] sm:$0xff]
  %v3671 = vld [vmem:[%s3614 + $0xa1] sm:$0xff]
  %v3672 = vld [vmem:[%s3614 + $0xb1] sm:$0xff]
  %v3673 = vld [vmem:[%s3614 + $0xc1] sm:$0xff]
  %v3674 = vld [vmem:[%s3614 + $0xd1] sm:$0xff]
  %v3675 = vld [vmem:[%s3614 + $0xe1] sm:$0xff]
  %v3676 = vld [vmem:[%s3614 + $0xf1] sm:$0xff]
  %v3677 = vld [vmem:[%s3614 + $0x101] sm:$0xff]
  %v3678 = vld [vmem:[%s3614 + $0x111] sm:$0xff]
  %3695 = vrot.lane.b32.xlu0 %v2553, 96
  %v3696 = vpop.permute.xlu0 %3695
  %3697 = vrot.lane.b32.xlu0 %v2555, 96
  %v3698 = vpop.permute.xlu0 %3697
  %3699 = vrot.lane.b32.xlu0 %v2558, 96
  %v3700 = vpop.permute.xlu0 %3699
  %3701 = vrot.lane.b32.xlu0 %v2560, 96
  %v3702 = vpop.permute.xlu0 %3701
  %3703 = vrot.lane.b32.xlu0 %v2563, 96
  %v3704 = vpop.permute.xlu0 %3703
  %3705 = vrot.lane.b32.xlu0 %v2565, 96
  %v3706 = vpop.permute.xlu0 %3705
  %3707 = vrot.lane.b32.xlu0 %v2568, 96
  %v3708 = vpop.permute.xlu0 %3707
  %3709 = vrot.lane.b32.xlu0 %v2570, 96
  %v3710 = vpop.permute.xlu0 %3709
  %3711 = vrot.lane.b32.xlu0 %v2573, 96
  %v3712 = vpop.permute.xlu0 %3711
  %3713 = vrot.lane.b32.xlu0 %v2575, 96
  %v3714 = vpop.permute.xlu0 %3713
  %3715 = vrot.lane.b32.xlu0 %v2578, 96
  %v3716 = vpop.permute.xlu0 %3715
  %3717 = vrot.lane.b32.xlu0 %v2580, 96
  %v3718 = vpop.permute.xlu0 %3717
  %3719 = vrot.lane.b32.xlu0 %v2583, 96
  %v3720 = vpop.permute.xlu0 %3719
  %3721 = vrot.lane.b32.xlu0 %v2585, 96
  %v3722 = vpop.permute.xlu0 %3721
  %3723 = vrot.lane.b32.xlu0 %v2588, 96
  %v3724 = vpop.permute.xlu0 %3723
  %3725 = vrot.lane.b32.xlu0 %v2590, 96
  %v3726 = vpop.permute.xlu0 %3725
  %v3743 = vadd.f32 %v3663, %v3696
  %v3744 = vadd.f32 %v3664, %v3698
  %v3745 = vadd.f32 %v3665, %v3700
  %v3746 = vadd.f32 %v3666, %v3702
  %v3747 = vadd.f32 %v3667, %v3704
  %v3748 = vadd.f32 %v3668, %v3706
  %v3749 = vadd.f32 %v3669, %v3708
  %v3750 = vadd.f32 %v3670, %v3710
  %v3751 = vadd.f32 %v3671, %v3712
  %v3752 = vadd.f32 %v3672, %v3714
  %v3753 = vadd.f32 %v3673, %v3716
  %v3754 = vadd.f32 %v3674, %v3718
  %v3755 = vadd.f32 %v3675, %v3720
  %v3756 = vadd.f32 %v3676, %v3722
  %v3757 = vadd.f32 %v3677, %v3724
  %v3758 = vadd.f32 %v3678, %v3726
  %3759 = vst.msk [vmem:[%s3614 + $0x1] sm:$0xff] %vm3572, %v3743
  %3760 = vst.msk [vmem:[%s3614 + $0x11] sm:$0xff] %vm3572, %v3744
  %3761 = vst.msk [vmem:[%s3614 + $0x21] sm:$0xff] %vm3572, %v3745
  %3762 = vst.msk [vmem:[%s3614 + $0x31] sm:$0xff] %vm3572, %v3746
  %3763 = vst.msk [vmem:[%s3614 + $0x41] sm:$0xff] %vm3572, %v3747
  %3764 = vst.msk [vmem:[%s3614 + $0x51] sm:$0xff] %vm3572, %v3748
  %3765 = vst.msk [vmem:[%s3614 + $0x61] sm:$0xff] %vm3572, %v3749
  %3766 = vst.msk [vmem:[%s3614 + $0x71] sm:$0xff] %vm3572, %v3750
  %3767 = vst.msk [vmem:[%s3614 + $0xa1] sm:$0xff] %vm3572, %v3751
  %3768 = vst.msk [vmem:[%s3614 + $0xb1] sm:$0xff] %vm3572, %v3752
  %3769 = vst.msk [vmem:[%s3614 + $0xc1] sm:$0xff] %vm3572, %v3753
  %3770 = vst.msk [vmem:[%s3614 + $0xd1] sm:$0xff] %vm3572, %v3754
  %3771 = vst.msk [vmem:[%s3614 + $0xe1] sm:$0xff] %vm3572, %v3755
  %3772 = vst.msk [vmem:[%s3614 + $0xf1] sm:$0xff] %vm3572, %v3756
  %3773 = vst.msk [vmem:[%s3614 + $0x101] sm:$0xff] %vm3572, %v3757
  %3774 = vst.msk [vmem:[%s3614 + $0x111] sm:$0xff] %vm3572, %v3758
  %v3775 = vld [vmem:[%s3614] sm:$0xff]
  %v3776 = vld [vmem:[%s3614 + $0x10] sm:$0xff]
  %v3777 = vld [vmem:[%s3614 + $0x20] sm:$0xff]
  %v3778 = vld [vmem:[%s3614 + $0x30] sm:$0xff]
  %v3779 = vld [vmem:[%s3614 + $0x40] sm:$0xff]
  %v3780 = vld [vmem:[%s3614 + $0x50] sm:$0xff]
  %v3781 = vld [vmem:[%s3614 + $0x60] sm:$0xff]
  %v3782 = vld [vmem:[%s3614 + $0x70] sm:$0xff]
  %v3783 = vld [vmem:[%s3614 + $0xa0] sm:$0xff]
  %v3784 = vld [vmem:[%s3614 + $0xb0] sm:$0xff]
  %v3785 = vld [vmem:[%s3614 + $0xc0] sm:$0xff]
  %v3786 = vld [vmem:[%s3614 + $0xd0] sm:$0xff]
  %v3787 = vld [vmem:[%s3614 + $0xe0] sm:$0xff]
  %v3788 = vld [vmem:[%s3614 + $0xf0] sm:$0xff]
  %v3789 = vld [vmem:[%s3614 + $0x100] sm:$0xff]
  %v3790 = vld [vmem:[%s3614 + $0x110] sm:$0xff]
  %3791 = vrot.lane.b32.xlu0 %v2553, 64
  %v3792 = vpop.permute.xlu0 %3791
  %3793 = vrot.lane.b32.xlu0 %v2555, 64
  %v3794 = vpop.permute.xlu0 %3793
  %3795 = vrot.lane.b32.xlu0 %v2558, 64
  %v3796 = vpop.permute.xlu0 %3795
  %3797 = vrot.lane.b32.xlu0 %v2560, 64
  %v3798 = vpop.permute.xlu0 %3797
  %3799 = vrot.lane.b32.xlu0 %v2563, 64
  %v3800 = vpop.permute.xlu0 %3799
  %3801 = vrot.lane.b32.xlu0 %v2565, 64
  %v3802 = vpop.permute.xlu0 %3801
  %3803 = vrot.lane.b32.xlu0 %v2568, 64
  %v3804 = vpop.permute.xlu0 %3803
  %3805 = vrot.lane.b32.xlu0 %v2570, 64
  %v3806 = vpop.permute.xlu0 %3805
  %3807 = vrot.lane.b32.xlu0 %v2573, 64
  %v3808 = vpop.permute.xlu0 %3807
  %3809 = vrot.lane.b32.xlu0 %v2575, 64
  %v3810 = vpop.permute.xlu0 %3809
  %3811 = vrot.lane.b32.xlu0 %v2578, 64
  %v3812 = vpop.permute.xlu0 %3811
  %3813 = vrot.lane.b32.xlu0 %v2580, 64
  %v3814 = vpop.permute.xlu0 %3813
  %3815 = vrot.lane.b32.xlu0 %v2583, 64
  %v3816 = vpop.permute.xlu0 %3815
  %3817 = vrot.lane.b32.xlu0 %v2585, 64
  %v3818 = vpop.permute.xlu0 %3817
  %3819 = vrot.lane.b32.xlu0 %v2588, 64
  %v3820 = vpop.permute.xlu0 %3819
  %3821 = vrot.lane.b32.xlu0 %v2590, 64
  %v3822 = vpop.permute.xlu0 %3821
  %v3839 = vadd.f32 %v3775, %v3792
  %v3840 = vadd.f32 %v3776, %v3794
  %v3841 = vadd.f32 %v3777, %v3796
  %v3842 = vadd.f32 %v3778, %v3798
  %v3843 = vadd.f32 %v3779, %v3800
  %v3844 = vadd.f32 %v3780, %v3802
  %v3845 = vadd.f32 %v3781, %v3804
  %v3846 = vadd.f32 %v3782, %v3806
  %v3847 = vadd.f32 %v3783, %v3808
  %v3848 = vadd.f32 %v3784, %v3810
  %v3849 = vadd.f32 %v3785, %v3812
  %v3850 = vadd.f32 %v3786, %v3814
  %v3851 = vadd.f32 %v3787, %v3816
  %v3852 = vadd.f32 %v3788, %v3818
  %v3853 = vadd.f32 %v3789, %v3820
  %v3854 = vadd.f32 %v3790, %v3822
  %3855 = vst.msk [vmem:[%s3614] sm:$0xff] %vm3572, %v3839
  %3856 = vst.msk [vmem:[%s3614 + $0x10] sm:$0xff] %vm3572, %v3840
  %3857 = vst.msk [vmem:[%s3614 + $0x20] sm:$0xff] %vm3572, %v3841
  %3858 = vst.msk [vmem:[%s3614 + $0x30] sm:$0xff] %vm3572, %v3842
  %3859 = vst.msk [vmem:[%s3614 + $0x40] sm:$0xff] %vm3572, %v3843
  %3860 = vst.msk [vmem:[%s3614 + $0x50] sm:$0xff] %vm3572, %v3844
  %3861 = vst.msk [vmem:[%s3614 + $0x60] sm:$0xff] %vm3572, %v3845
  %3862 = vst.msk [vmem:[%s3614 + $0x70] sm:$0xff] %vm3572, %v3846
  %3863 = vst.msk [vmem:[%s3614 + $0xa0] sm:$0xff] %vm3572, %v3847
  %3864 = vst.msk [vmem:[%s3614 + $0xb0] sm:$0xff] %vm3572, %v3848
  %3865 = vst.msk [vmem:[%s3614 + $0xc0] sm:$0xff] %vm3572, %v3849
  %3866 = vst.msk [vmem:[%s3614 + $0xd0] sm:$0xff] %vm3572, %v3850
  %3867 = vst.msk [vmem:[%s3614 + $0xe0] sm:$0xff] %vm3572, %v3851
  %3868 = vst.msk [vmem:[%s3614 + $0xf0] sm:$0xff] %vm3572, %v3852
  %3869 = vst.msk [vmem:[%s3614 + $0x100] sm:$0xff] %vm3572, %v3853
  %3870 = vst.msk [vmem:[%s3614 + $0x110] sm:$0xff] %vm3572, %v3854
  %s3871 = scalar_lea.vmem [#allocation2], 16
  %v3872 = vld [vmem:[%s3871 + $0x2] sm:$0xff]
  %v3873 = vld [vmem:[%s3871 + $0x12] sm:$0xff]
  %v3874 = vld [vmem:[%s3871 + $0x22] sm:$0xff]
  %v3875 = vld [vmem:[%s3871 + $0x32] sm:$0xff]
  %v3876 = vld [vmem:[%s3871 + $0x42] sm:$0xff]
  %v3877 = vld [vmem:[%s3871 + $0x52] sm:$0xff]
  %v3878 = vld [vmem:[%s3871 + $0x62] sm:$0xff]
  %v3879 = vld [vmem:[%s3871 + $0x72] sm:$0xff]
  %v3880 = vld [vmem:[%s3871 + $0xa2] sm:$0xff]
  %v3881 = vld [vmem:[%s3871 + $0xb2] sm:$0xff]
  %v3882 = vld [vmem:[%s3871 + $0xc2] sm:$0xff]
  %v3883 = vld [vmem:[%s3871 + $0xd2] sm:$0xff]
  %v3884 = vld [vmem:[%s3871 + $0xe2] sm:$0xff]
  %v3885 = vld [vmem:[%s3871 + $0xf2] sm:$0xff]
  %v3886 = vld [vmem:[%s3871 + $0x102] sm:$0xff]
  %v3887 = vld [vmem:[%s3871 + $0x112] sm:$0xff]
  %3888 = vrot.lane.b32.xlu0 %v2553, 32
  %v3889 = vpop.permute.xlu0 %3888
  %3890 = vrot.lane.b32.xlu0 %v2555, 32
  %v3891 = vpop.permute.xlu0 %3890
  %3892 = vrot.lane.b32.xlu0 %v2558, 32
  %v3893 = vpop.permute.xlu0 %3892
  %3894 = vrot.lane.b32.xlu0 %v2560, 32
  %v3895 = vpop.permute.xlu0 %3894
  %3896 = vrot.lane.b32.xlu0 %v2563, 32
  %v3897 = vpop.permute.xlu0 %3896
  %3898 = vrot.lane.b32.xlu0 %v2565, 32
  %v3899 = vpop.permute.xlu0 %3898
  %3900 = vrot.lane.b32.xlu0 %v2568, 32
  %v3901 = vpop.permute.xlu0 %3900
  %3902 = vrot.lane.b32.xlu0 %v2570, 32
  %v3903 = vpop.permute.xlu0 %3902
  %3904 = vrot.lane.b32.xlu0 %v2573, 32
  %v3905 = vpop.permute.xlu0 %3904
  %3906 = vrot.lane.b32.xlu0 %v2575, 32
  %v3907 = vpop.permute.xlu0 %3906
  %3908 = vrot.lane.b32.xlu0 %v2578, 32
  %v3909 = vpop.permute.xlu0 %3908
  %3910 = vrot.lane.b32.xlu0 %v2580, 32
  %v3911 = vpop.permute.xlu0 %3910
  %3912 = vrot.lane.b32.xlu0 %v2583, 32
  %v3913 = vpop.permute.xlu0 %3912
  %3914 = vrot.lane.b32.xlu0 %v2585, 32
  %v3915 = vpop.permute.xlu0 %3914
  %3916 = vrot.lane.b32.xlu0 %v2588, 32
  %v3917 = vpop.permute.xlu0 %3916
  %3918 = vrot.lane.b32.xlu0 %v2590, 32
  %v3919 = vpop.permute.xlu0 %3918
  %v3936 = vadd.f32 %v3872, %v3889
  %v3937 = vadd.f32 %v3873, %v3891
  %v3938 = vadd.f32 %v3874, %v3893
  %v3939 = vadd.f32 %v3875, %v3895
  %v3940 = vadd.f32 %v3876, %v3897
  %v3941 = vadd.f32 %v3877, %v3899
  %v3942 = vadd.f32 %v3878, %v3901
  %v3943 = vadd.f32 %v3879, %v3903
  %v3944 = vadd.f32 %v3880, %v3905
  %v3945 = vadd.f32 %v3881, %v3907
  %v3946 = vadd.f32 %v3882, %v3909
  %v3947 = vadd.f32 %v3883, %v3911
  %v3948 = vadd.f32 %v3884, %v3913
  %v3949 = vadd.f32 %v3885, %v3915
  %v3950 = vadd.f32 %v3886, %v3917
  %v3951 = vadd.f32 %v3887, %v3919
  %3952 = vst.msk [vmem:[%s3871 + $0x2] sm:$0xff] %vm3572, %v3936
  %3953 = vst.msk [vmem:[%s3871 + $0x12] sm:$0xff] %vm3572, %v3937
  %3954 = vst.msk [vmem:[%s3871 + $0x22] sm:$0xff] %vm3572, %v3938
  %3955 = vst.msk [vmem:[%s3871 + $0x32] sm:$0xff] %vm3572, %v3939
  %3956 = vst.msk [vmem:[%s3871 + $0x42] sm:$0xff] %vm3572, %v3940
  %3957 = vst.msk [vmem:[%s3871 + $0x52] sm:$0xff] %vm3572, %v3941
  %3958 = vst.msk [vmem:[%s3871 + $0x62] sm:$0xff] %vm3572, %v3942
  %3959 = vst.msk [vmem:[%s3871 + $0x72] sm:$0xff] %vm3572, %v3943
  %3960 = vst.msk [vmem:[%s3871 + $0xa2] sm:$0xff] %vm3572, %v3944
  %3961 = vst.msk [vmem:[%s3871 + $0xb2] sm:$0xff] %vm3572, %v3945
  %3962 = vst.msk [vmem:[%s3871 + $0xc2] sm:$0xff] %vm3572, %v3946
  %3963 = vst.msk [vmem:[%s3871 + $0xd2] sm:$0xff] %vm3572, %v3947
  %3964 = vst.msk [vmem:[%s3871 + $0xe2] sm:$0xff] %vm3572, %v3948
  %3965 = vst.msk [vmem:[%s3871 + $0xf2] sm:$0xff] %vm3572, %v3949
  %3966 = vst.msk [vmem:[%s3871 + $0x102] sm:$0xff] %vm3572, %v3950
  %3967 = vst.msk [vmem:[%s3871 + $0x112] sm:$0xff] %vm3572, %v3951
  %v3968 = vld [vmem:[%s3871 + $0x1] sm:$0xff]
  %v3969 = vld [vmem:[%s3871 + $0x11] sm:$0xff]
  %v3970 = vld [vmem:[%s3871 + $0x21] sm:$0xff]
  %v3971 = vld [vmem:[%s3871 + $0x31] sm:$0xff]
  %v3972 = vld [vmem:[%s3871 + $0x41] sm:$0xff]
  %v3973 = vld [vmem:[%s3871 + $0x51] sm:$0xff]
  %v3974 = vld [vmem:[%s3871 + $0x61] sm:$0xff]
  %v3975 = vld [vmem:[%s3871 + $0x71] sm:$0xff]
  %v3976 = vld [vmem:[%s3871 + $0xa1] sm:$0xff]
  %v3977 = vld [vmem:[%s3871 + $0xb1] sm:$0xff]
  %v3978 = vld [vmem:[%s3871 + $0xc1] sm:$0xff]
  %v3979 = vld [vmem:[%s3871 + $0xd1] sm:$0xff]
  %v3980 = vld [vmem:[%s3871 + $0xe1] sm:$0xff]
  %v3981 = vld [vmem:[%s3871 + $0xf1] sm:$0xff]
  %v3982 = vld [vmem:[%s3871 + $0x101] sm:$0xff]
  %v3983 = vld [vmem:[%s3871 + $0x111] sm:$0xff]
  %v3984 = vadd.f32 %v3968, %v3043
  %v3985 = vadd.f32 %v3969, %v3045
  %v3986 = vadd.f32 %v3970, %v3048
  %v3987 = vadd.f32 %v3971, %v3050
  %v3988 = vadd.f32 %v3972, %v3053
  %v3989 = vadd.f32 %v3973, %v3055
  %v3990 = vadd.f32 %v3974, %v3058
  %v3991 = vadd.f32 %v3975, %v3060
  %v3992 = vadd.f32 %v3976, %v3063
  %v3993 = vadd.f32 %v3977, %v3065
  %v3994 = vadd.f32 %v3978, %v3068
  %v3995 = vadd.f32 %v3979, %v3070
  %v3996 = vadd.f32 %v3980, %v3073
  %v3997 = vadd.f32 %v3981, %v3075
  %v3998 = vadd.f32 %v3982, %v3078
  %v3999 = vadd.f32 %v3983, %v3080
  %4000 = vst.msk [vmem:[%s3871 + $0x1] sm:$0xff] %vm3572, %v3984
  %4001 = vst.msk [vmem:[%s3871 + $0x11] sm:$0xff] %vm3572, %v3985
  %4002 = vst.msk [vmem:[%s3871 + $0x21] sm:$0xff] %vm3572, %v3986
  %4003 = vst.msk [vmem:[%s3871 + $0x31] sm:$0xff] %vm3572, %v3987
  %4004 = vst.msk [vmem:[%s3871 + $0x41] sm:$0xff] %vm3572, %v3988
  %4005 = vst.msk [vmem:[%s3871 + $0x51] sm:$0xff] %vm3572, %v3989
  %4006 = vst.msk [vmem:[%s3871 + $0x61] sm:$0xff] %vm3572, %v3990
  %4007 = vst.msk [vmem:[%s3871 + $0x71] sm:$0xff] %vm3572, %v3991
  %4008 = vst.msk [vmem:[%s3871 + $0xa1] sm:$0xff] %vm3572, %v3992
  %4009 = vst.msk [vmem:[%s3871 + $0xb1] sm:$0xff] %vm3572, %v3993
  %4010 = vst.msk [vmem:[%s3871 + $0xc1] sm:$0xff] %vm3572, %v3994
  %4011 = vst.msk [vmem:[%s3871 + $0xd1] sm:$0xff] %vm3572, %v3995
  %4012 = vst.msk [vmem:[%s3871 + $0xe1] sm:$0xff] %vm3572, %v3996
  %4013 = vst.msk [vmem:[%s3871 + $0xf1] sm:$0xff] %vm3572, %v3997
  %4014 = vst.msk [vmem:[%s3871 + $0x101] sm:$0xff] %vm3572, %v3998
  %4015 = vst.msk [vmem:[%s3871 + $0x111] sm:$0xff] %vm3572, %v3999
  %v4016 = vld [vmem:[%s3871] sm:$0xff]
  %v4017 = vld [vmem:[%s3871 + $0x10] sm:$0xff]
  %v4018 = vld [vmem:[%s3871 + $0x20] sm:$0xff]
  %v4019 = vld [vmem:[%s3871 + $0x30] sm:$0xff]
  %v4020 = vld [vmem:[%s3871 + $0x40] sm:$0xff]
  %v4021 = vld [vmem:[%s3871 + $0x50] sm:$0xff]
  %v4022 = vld [vmem:[%s3871 + $0x60] sm:$0xff]
  %v4023 = vld [vmem:[%s3871 + $0x70] sm:$0xff]
  %v4024 = vld [vmem:[%s3871 + $0xa0] sm:$0xff]
  %v4025 = vld [vmem:[%s3871 + $0xb0] sm:$0xff]
  %v4026 = vld [vmem:[%s3871 + $0xc0] sm:$0xff]
  %v4027 = vld [vmem:[%s3871 + $0xd0] sm:$0xff]
  %v4028 = vld [vmem:[%s3871 + $0xe0] sm:$0xff]
  %v4029 = vld [vmem:[%s3871 + $0xf0] sm:$0xff]
  %v4030 = vld [vmem:[%s3871 + $0x100] sm:$0xff]
  %v4031 = vld [vmem:[%s3871 + $0x110] sm:$0xff]
  %4048 = vrot.lane.b32.xlu0 %v3043, 96
  %v4049 = vpop.permute.xlu0 %4048
  %4050 = vrot.lane.b32.xlu0 %v3045, 96
  %v4051 = vpop.permute.xlu0 %4050
  %4052 = vrot.lane.b32.xlu0 %v3048, 96
  %v4053 = vpop.permute.xlu0 %4052
  %4054 = vrot.lane.b32.xlu0 %v3050, 96
  %v4055 = vpop.permute.xlu0 %4054
  %4056 = vrot.lane.b32.xlu0 %v3053, 96
  %v4057 = vpop.permute.xlu0 %4056
  %4058 = vrot.lane.b32.xlu0 %v3055, 96
  %v4059 = vpop.permute.xlu0 %4058
  %4060 = vrot.lane.b32.xlu0 %v3058, 96
  %v4061 = vpop.permute.xlu0 %4060
  %4062 = vrot.lane.b32.xlu0 %v3060, 96
  %v4063 = vpop.permute.xlu0 %4062
  %4064 = vrot.lane.b32.xlu0 %v3063, 96
  %v4065 = vpop.permute.xlu0 %4064
  %4066 = vrot.lane.b32.xlu0 %v3065, 96
  %v4067 = vpop.permute.xlu0 %4066
  %4068 = vrot.lane.b32.xlu0 %v3068, 96
  %v4069 = vpop.permute.xlu0 %4068
  %4070 = vrot.lane.b32.xlu0 %v3070, 96
  %v4071 = vpop.permute.xlu0 %4070
  %4072 = vrot.lane.b32.xlu0 %v3073, 96
  %v4073 = vpop.permute.xlu0 %4072
  %4074 = vrot.lane.b32.xlu0 %v3075, 96
  %v4075 = vpop.permute.xlu0 %4074
  %4076 = vrot.lane.b32.xlu0 %v3078, 96
  %v4077 = vpop.permute.xlu0 %4076
  %4078 = vrot.lane.b32.xlu0 %v3080, 96
  %v4079 = vpop.permute.xlu0 %4078
  %v4096 = vadd.f32 %v4016, %v4049
  %v4097 = vadd.f32 %v4017, %v4051
  %v4098 = vadd.f32 %v4018, %v4053
  %v4099 = vadd.f32 %v4019, %v4055
  %v4100 = vadd.f32 %v4020, %v4057
  %v4101 = vadd.f32 %v4021, %v4059
  %v4102 = vadd.f32 %v4022, %v4061
  %v4103 = vadd.f32 %v4023, %v4063
  %v4104 = vadd.f32 %v4024, %v4065
  %v4105 = vadd.f32 %v4025, %v4067
  %v4106 = vadd.f32 %v4026, %v4069
  %v4107 = vadd.f32 %v4027, %v4071
  %v4108 = vadd.f32 %v4028, %v4073
  %v4109 = vadd.f32 %v4029, %v4075
  %v4110 = vadd.f32 %v4030, %v4077
  %v4111 = vadd.f32 %v4031, %v4079
  %4112 = vst.msk [vmem:[%s3871] sm:$0xff] %vm3572, %v4096
  %4113 = vst.msk [vmem:[%s3871 + $0x10] sm:$0xff] %vm3572, %v4097
  %4114 = vst.msk [vmem:[%s3871 + $0x20] sm:$0xff] %vm3572, %v4098
  %4115 = vst.msk [vmem:[%s3871 + $0x30] sm:$0xff] %vm3572, %v4099
  %4116 = vst.msk [vmem:[%s3871 + $0x40] sm:$0xff] %vm3572, %v4100
  %4117 = vst.msk [vmem:[%s3871 + $0x50] sm:$0xff] %vm3572, %v4101
  %4118 = vst.msk [vmem:[%s3871 + $0x60] sm:$0xff] %vm3572, %v4102
  %4119 = vst.msk [vmem:[%s3871 + $0x70] sm:$0xff] %vm3572, %v4103
  %4120 = vst.msk [vmem:[%s3871 + $0xa0] sm:$0xff] %vm3572, %v4104
  %4121 = vst.msk [vmem:[%s3871 + $0xb0] sm:$0xff] %vm3572, %v4105
  %4122 = vst.msk [vmem:[%s3871 + $0xc0] sm:$0xff] %vm3572, %v4106
  %4123 = vst.msk [vmem:[%s3871 + $0xd0] sm:$0xff] %vm3572, %v4107
  %4124 = vst.msk [vmem:[%s3871 + $0xe0] sm:$0xff] %vm3572, %v4108
  %4125 = vst.msk [vmem:[%s3871 + $0xf0] sm:$0xff] %vm3572, %v4109
  %4126 = vst.msk [vmem:[%s3871 + $0x100] sm:$0xff] %vm3572, %v4110
  %4127 = vst.msk [vmem:[%s3871 + $0x110] sm:$0xff] %vm3572, %v4111
  %v4128 = vld [vmem:[#allocation2 + $0x2] sm:$0xff]
  %v4129 = vld [vmem:[#allocation2 + $0x12] sm:$0xff]
  %v4130 = vld [vmem:[#allocation2 + $0x22] sm:$0xff]
  %v4131 = vld [vmem:[#allocation2 + $0x32] sm:$0xff]
  %v4132 = vld [vmem:[#allocation2 + $0x42] sm:$0xff]
  %v4133 = vld [vmem:[#allocation2 + $0x52] sm:$0xff]
  %v4134 = vld [vmem:[#allocation2 + $0x62] sm:$0xff]
  %v4135 = vld [vmem:[#allocation2 + $0x72] sm:$0xff]
  %v4136 = vld [vmem:[#allocation2 + $0xa2] sm:$0xff]
  %v4137 = vld [vmem:[#allocation2 + $0xb2] sm:$0xff]
  %v4138 = vld [vmem:[#allocation2 + $0xc2] sm:$0xff]
  %v4139 = vld [vmem:[#allocation2 + $0xd2] sm:$0xff]
  %v4140 = vld [vmem:[#allocation2 + $0xe2] sm:$0xff]
  %v4141 = vld [vmem:[#allocation2 + $0xf2] sm:$0xff]
  %v4142 = vld [vmem:[#allocation2 + $0x102] sm:$0xff]
  %v4143 = vld [vmem:[#allocation2 + $0x112] sm:$0xff]
  %4144 = vrot.lane.b32.xlu0 %v3043, 64
  %v4145 = vpop.permute.xlu0 %4144
  %4146 = vrot.lane.b32.xlu0 %v3045, 64
  %v4147 = vpop.permute.xlu0 %4146
  %4148 = vrot.lane.b32.xlu0 %v3048, 64
  %v4149 = vpop.permute.xlu0 %4148
  %4150 = vrot.lane.b32.xlu0 %v3050, 64
  %v4151 = vpop.permute.xlu0 %4150
  %4152 = vrot.lane.b32.xlu0 %v3053, 64
  %v4153 = vpop.permute.xlu0 %4152
  %4154 = vrot.lane.b32.xlu0 %v3055, 64
  %v4155 = vpop.permute.xlu0 %4154
  %4156 = vrot.lane.b32.xlu0 %v3058, 64
  %v4157 = vpop.permute.xlu0 %4156
  %4158 = vrot.lane.b32.xlu0 %v3060, 64
  %v4159 = vpop.permute.xlu0 %4158
  %4160 = vrot.lane.b32.xlu0 %v3063, 64
  %v4161 = vpop.permute.xlu0 %4160
  %4162 = vrot.lane.b32.xlu0 %v3065, 64
  %v4163 = vpop.permute.xlu0 %4162
  %4164 = vrot.lane.b32.xlu0 %v3068, 64
  %v4165 = vpop.permute.xlu0 %4164
  %4166 = vrot.lane.b32.xlu0 %v3070, 64
  %v4167 = vpop.permute.xlu0 %4166
  %4168 = vrot.lane.b32.xlu0 %v3073, 64
  %v4169 = vpop.permute.xlu0 %4168
  %4170 = vrot.lane.b32.xlu0 %v3075, 64
  %v4171 = vpop.permute.xlu0 %4170
  %4172 = vrot.lane.b32.xlu0 %v3078, 64
  %v4173 = vpop.permute.xlu0 %4172
  %4174 = vrot.lane.b32.xlu0 %v3080, 64
  %v4175 = vpop.permute.xlu0 %4174
  %v4192 = vadd.f32 %v4128, %v4145
  %v4193 = vadd.f32 %v4129, %v4147
  %v4194 = vadd.f32 %v4130, %v4149
  %v4195 = vadd.f32 %v4131, %v4151
  %v4196 = vadd.f32 %v4132, %v4153
  %v4197 = vadd.f32 %v4133, %v4155
  %v4198 = vadd.f32 %v4134, %v4157
  %v4199 = vadd.f32 %v4135, %v4159
  %v4200 = vadd.f32 %v4136, %v4161
  %v4201 = vadd.f32 %v4137, %v4163
  %v4202 = vadd.f32 %v4138, %v4165
  %v4203 = vadd.f32 %v4139, %v4167
  %v4204 = vadd.f32 %v4140, %v4169
  %v4205 = vadd.f32 %v4141, %v4171
  %v4206 = vadd.f32 %v4142, %v4173
  %v4207 = vadd.f32 %v4143, %v4175
  %4208 = vst.msk [vmem:[#allocation2 + $0x2] sm:$0xff] %vm3572, %v4192
  %4209 = vst.msk [vmem:[#allocation2 + $0x12] sm:$0xff] %vm3572, %v4193
  %4210 = vst.msk [vmem:[#allocation2 + $0x22] sm:$0xff] %vm3572, %v4194
  %4211 = vst.msk [vmem:[#allocation2 + $0x32] sm:$0xff] %vm3572, %v4195
  %4212 = vst.msk [vmem:[#allocation2 + $0x42] sm:$0xff] %vm3572, %v4196
  %4213 = vst.msk [vmem:[#allocation2 + $0x52] sm:$0xff] %vm3572, %v4197
  %4214 = vst.msk [vmem:[#allocation2 + $0x62] sm:$0xff] %vm3572, %v4198
  %4215 = vst.msk [vmem:[#allocation2 + $0x72] sm:$0xff] %vm3572, %v4199
  %4216 = vst.msk [vmem:[#allocation2 + $0xa2] sm:$0xff] %vm3572, %v4200
  %4217 = vst.msk [vmem:[#allocation2 + $0xb2] sm:$0xff] %vm3572, %v4201
  %4218 = vst.msk [vmem:[#allocation2 + $0xc2] sm:$0xff] %vm3572, %v4202
  %4219 = vst.msk [vmem:[#allocation2 + $0xd2] sm:$0xff] %vm3572, %v4203
  %4220 = vst.msk [vmem:[#allocation2 + $0xe2] sm:$0xff] %vm3572, %v4204
  %4221 = vst.msk [vmem:[#allocation2 + $0xf2] sm:$0xff] %vm3572, %v4205
  %4222 = vst.msk [vmem:[#allocation2 + $0x102] sm:$0xff] %vm3572, %v4206
  %4223 = vst.msk [vmem:[#allocation2 + $0x112] sm:$0xff] %vm3572, %v4207
  %v4224 = vld [vmem:[#allocation2 + $0x1] sm:$0xff]
  %v4225 = vld [vmem:[#allocation2 + $0x11] sm:$0xff]
  %v4226 = vld [vmem:[#allocation2 + $0x21] sm:$0xff]
  %v4227 = vld [vmem:[#allocation2 + $0x31] sm:$0xff]
  %v4228 = vld [vmem:[#allocation2 + $0x41] sm:$0xff]
  %v4229 = vld [vmem:[#allocation2 + $0x51] sm:$0xff]
  %v4230 = vld [vmem:[#allocation2 + $0x61] sm:$0xff]
  %v4231 = vld [vmem:[#allocation2 + $0x71] sm:$0xff]
  %v4232 = vld [vmem:[#allocation2 + $0xa1] sm:$0xff]
  %v4233 = vld [vmem:[#allocation2 + $0xb1] sm:$0xff]
  %v4234 = vld [vmem:[#allocation2 + $0xc1] sm:$0xff]
  %v4235 = vld [vmem:[#allocation2 + $0xd1] sm:$0xff]
  %v4236 = vld [vmem:[#allocation2 + $0xe1] sm:$0xff]
  %v4237 = vld [vmem:[#allocation2 + $0xf1] sm:$0xff]
  %v4238 = vld [vmem:[#allocation2 + $0x101] sm:$0xff]
  %v4239 = vld [vmem:[#allocation2 + $0x111] sm:$0xff]
  %4240 = vrot.lane.b32.xlu0 %v3043, 32
  %v4241 = vpop.permute.xlu0 %4240
  %4242 = vrot.lane.b32.xlu0 %v3045, 32
  %v4243 = vpop.permute.xlu0 %4242
  %4244 = vrot.lane.b32.xlu0 %v3048, 32
  %v4245 = vpop.permute.xlu0 %4244
  %4246 = vrot.lane.b32.xlu0 %v3050, 32
  %v4247 = vpop.permute.xlu0 %4246
  %4248 = vrot.lane.b32.xlu0 %v3053, 32
  %v4249 = vpop.permute.xlu0 %4248
  %4250 = vrot.lane.b32.xlu0 %v3055, 32
  %v4251 = vpop.permute.xlu0 %4250
  %4252 = vrot.lane.b32.xlu0 %v3058, 32
  %v4253 = vpop.permute.xlu0 %4252
  %4254 = vrot.lane.b32.xlu0 %v3060, 32
  %v4255 = vpop.permute.xlu0 %4254
  %4256 = vrot.lane.b32.xlu0 %v3063, 32
  %v4257 = vpop.permute.xlu0 %4256
  %4258 = vrot.lane.b32.xlu0 %v3065, 32
  %v4259 = vpop.permute.xlu0 %4258
  %4260 = vrot.lane.b32.xlu0 %v3068, 32
  %v4261 = vpop.permute.xlu0 %4260
  %4262 = vrot.lane.b32.xlu0 %v3070, 32
  %v4263 = vpop.permute.xlu0 %4262
  %4264 = vrot.lane.b32.xlu0 %v3073, 32
  %v4265 = vpop.permute.xlu0 %4264
  %4266 = vrot.lane.b32.xlu0 %v3075, 32
  %v4267 = vpop.permute.xlu0 %4266
  %4268 = vrot.lane.b32.xlu0 %v3078, 32
  %v4269 = vpop.permute.xlu0 %4268
  %4270 = vrot.lane.b32.xlu0 %v3080, 32
  %v4271 = vpop.permute.xlu0 %4270
  %v4288 = vadd.f32 %v4224, %v4241
  %v4289 = vadd.f32 %v4225, %v4243
  %v4290 = vadd.f32 %v4226, %v4245
  %v4291 = vadd.f32 %v4227, %v4247
  %v4292 = vadd.f32 %v4228, %v4249
  %v4293 = vadd.f32 %v4229, %v4251
  %v4294 = vadd.f32 %v4230, %v4253
  %v4295 = vadd.f32 %v4231, %v4255
  %v4296 = vadd.f32 %v4232, %v4257
  %v4297 = vadd.f32 %v4233, %v4259
  %v4298 = vadd.f32 %v4234, %v4261
  %v4299 = vadd.f32 %v4235, %v4263
  %v4300 = vadd.f32 %v4236, %v4265
  %v4301 = vadd.f32 %v4237, %v4267
  %v4302 = vadd.f32 %v4238, %v4269
  %v4303 = vadd.f32 %v4239, %v4271
  %4304 = vst.msk [vmem:[#allocation2 + $0x1] sm:$0xff] %vm3572, %v4288
  %4305 = vst.msk [vmem:[#allocation2 + $0x11] sm:$0xff] %vm3572, %v4289
  %4306 = vst.msk [vmem:[#allocation2 + $0x21] sm:$0xff] %vm3572, %v4290
  %4307 = vst.msk [vmem:[#allocation2 + $0x31] sm:$0xff] %vm3572, %v4291
  %4308 = vst.msk [vmem:[#allocation2 + $0x41] sm:$0xff] %vm3572, %v4292
  %4309 = vst.msk [vmem:[#allocation2 + $0x51] sm:$0xff] %vm3572, %v4293
  %4310 = vst.msk [vmem:[#allocation2 + $0x61] sm:$0xff] %vm3572, %v4294
  %4311 = vst.msk [vmem:[#allocation2 + $0x71] sm:$0xff] %vm3572, %v4295
  %4312 = vst.msk [vmem:[#allocation2 + $0xa1] sm:$0xff] %vm3572, %v4296
  %4313 = vst.msk [vmem:[#allocation2 + $0xb1] sm:$0xff] %vm3572, %v4297
  %4314 = vst.msk [vmem:[#allocation2 + $0xc1] sm:$0xff] %vm3572, %v4298
  %4315 = vst.msk [vmem:[#allocation2 + $0xd1] sm:$0xff] %vm3572, %v4299
  %4316 = vst.msk [vmem:[#allocation2 + $0xe1] sm:$0xff] %vm3572, %v4300
  %4317 = vst.msk [vmem:[#allocation2 + $0xf1] sm:$0xff] %vm3572, %v4301
  %4318 = vst.msk [vmem:[#allocation2 + $0x101] sm:$0xff] %vm3572, %v4302
  %4319 = vst.msk [vmem:[#allocation2 + $0x111] sm:$0xff] %vm3572, %v4303
  %v4320 = vld [vmem:[#allocation2] sm:$0xff]
  %v4321 = vld [vmem:[#allocation2 + $0x10] sm:$0xff]
  %v4322 = vld [vmem:[#allocation2 + $0x20] sm:$0xff]
  %v4323 = vld [vmem:[#allocation2 + $0x30] sm:$0xff]
  %v4324 = vld [vmem:[#allocation2 + $0x40] sm:$0xff]
  %v4325 = vld [vmem:[#allocation2 + $0x50] sm:$0xff]
  %v4326 = vld [vmem:[#allocation2 + $0x60] sm:$0xff]
  %v4327 = vld [vmem:[#allocation2 + $0x70] sm:$0xff]
  %v4328 = vld [vmem:[#allocation2 + $0xa0] sm:$0xff]
  %v4329 = vld [vmem:[#allocation2 + $0xb0] sm:$0xff]
  %v4330 = vld [vmem:[#allocation2 + $0xc0] sm:$0xff]
  %v4331 = vld [vmem:[#allocation2 + $0xd0] sm:$0xff]
  %v4332 = vld [vmem:[#allocation2 + $0xe0] sm:$0xff]
  %v4333 = vld [vmem:[#allocation2 + $0xf0] sm:$0xff]
  %v4334 = vld [vmem:[#allocation2 + $0x100] sm:$0xff]
  %v4335 = vld [vmem:[#allocation2 + $0x110] sm:$0xff]
  %v4336 = vadd.f32 %v4320, %v3533
  %v4337 = vadd.f32 %v4321, %v3535
  %v4338 = vadd.f32 %v4322, %v3538
  %v4339 = vadd.f32 %v4323, %v3540
  %v4340 = vadd.f32 %v4324, %v3543
  %v4341 = vadd.f32 %v4325, %v3545
  %v4342 = vadd.f32 %v4326, %v3548
  %v4343 = vadd.f32 %v4327, %v3550
  %v4344 = vadd.f32 %v4328, %v3553
  %v4345 = vadd.f32 %v4329, %v3555
  %v4346 = vadd.f32 %v4330, %v3558
  %v4347 = vadd.f32 %v4331, %v3560
  %v4348 = vadd.f32 %v4332, %v3563
  %v4349 = vadd.f32 %v4333, %v3565
  %v4350 = vadd.f32 %v4334, %v3568
  %v4351 = vadd.f32 %v4335, %v3570
  %4352 = vst.msk [vmem:[#allocation2] sm:$0xff] %vm3572, %v4336
  %4353 = vst.msk [vmem:[#allocation2 + $0x10] sm:$0xff] %vm3572, %v4337
  %4354 = vst.msk [vmem:[#allocation2 + $0x20] sm:$0xff] %vm3572, %v4338
  %4355 = vst.msk [vmem:[#allocation2 + $0x30] sm:$0xff] %vm3572, %v4339
  %4356 = vst.msk [vmem:[#allocation2 + $0x40] sm:$0xff] %vm3572, %v4340
  %4357 = vst.msk [vmem:[#allocation2 + $0x50] sm:$0xff] %vm3572, %v4341
  %4358 = vst.msk [vmem:[#allocation2 + $0x60] sm:$0xff] %vm3572, %v4342
  %4359 = vst.msk [vmem:[#allocation2 + $0x70] sm:$0xff] %vm3572, %v4343
  %4360 = vst.msk [vmem:[#allocation2 + $0xa0] sm:$0xff] %vm3572, %v4344
  %4361 = vst.msk [vmem:[#allocation2 + $0xb0] sm:$0xff] %vm3572, %v4345
  %4362 = vst.msk [vmem:[#allocation2 + $0xc0] sm:$0xff] %vm3572, %v4346
  %4363 = vst.msk [vmem:[#allocation2 + $0xd0] sm:$0xff] %vm3572, %v4347
  %4364 = vst.msk [vmem:[#allocation2 + $0xe0] sm:$0xff] %vm3572, %v4348
  %4365 = vst.msk [vmem:[#allocation2 + $0xf0] sm:$0xff] %vm3572, %v4349
  %4366 = vst.msk [vmem:[#allocation2 + $0x100] sm:$0xff] %vm3572, %v4350
  %4367 = vst.msk [vmem:[#allocation2 + $0x110] sm:$0xff] %vm3572, %v4351
  %v4368 = vld [vmem:[%s3871 + $0x1] sm:$0xff]
  %v4369 = vld [vmem:[%s3871 + $0x11] sm:$0xff]
  %v4370 = vld [vmem:[%s3871 + $0x21] sm:$0xff]
  %v4371 = vld [vmem:[%s3871 + $0x31] sm:$0xff]
  %v4372 = vld [vmem:[%s3871 + $0x41] sm:$0xff]
  %v4373 = vld [vmem:[%s3871 + $0x51] sm:$0xff]
  %v4374 = vld [vmem:[%s3871 + $0x61] sm:$0xff]
  %v4375 = vld [vmem:[%s3871 + $0x71] sm:$0xff]
  %v4376 = vld [vmem:[%s3871 + $0xa1] sm:$0xff]
  %v4377 = vld [vmem:[%s3871 + $0xb1] sm:$0xff]
  %v4378 = vld [vmem:[%s3871 + $0xc1] sm:$0xff]
  %v4379 = vld [vmem:[%s3871 + $0xd1] sm:$0xff]
  %v4380 = vld [vmem:[%s3871 + $0xe1] sm:$0xff]
  %v4381 = vld [vmem:[%s3871 + $0xf1] sm:$0xff]
  %v4382 = vld [vmem:[%s3871 + $0x101] sm:$0xff]
  %v4383 = vld [vmem:[%s3871 + $0x111] sm:$0xff]
  %v4384 = vld [vmem:[%s2] sm:$0x1]
  %v4386 = vperm.slane %v4384, 0
  %v4388 = vadd.f32 %v4368, %v4386
  %v4389 = vadd.f32 %v4369, %v4386
  %v4390 = vadd.f32 %v4370, %v4386
  %v4391 = vadd.f32 %v4371, %v4386
  %v4392 = vadd.f32 %v4372, %v4386
  %v4393 = vadd.f32 %v4373, %v4386
  %v4394 = vadd.f32 %v4374, %v4386
  %v4395 = vadd.f32 %v4375, %v4386
  %v4396 = vadd.f32 %v4376, %v4386
  %v4397 = vadd.f32 %v4377, %v4386
  %v4398 = vadd.f32 %v4378, %v4386
  %v4399 = vadd.f32 %v4379, %v4386
  %v4400 = vadd.f32 %v4380, %v4386
  %v4401 = vadd.f32 %v4381, %v4386
  %v4402 = vadd.f32 %v4382, %v4386
  %v4403 = vadd.f32 %v4383, %v4386
  %v4404 = vmax.f32 %v4388, 0.0
  %v4405 = vmax.f32 %v4389, 0.0
  %v4406 = vmax.f32 %v4390, 0.0
  %v4407 = vmax.f32 %v4391, 0.0
  %v4408 = vmax.f32 %v4392, 0.0
  %v4409 = vmax.f32 %v4393, 0.0
  %v4410 = vmax.f32 %v4394, 0.0
  %v4411 = vmax.f32 %v4395, 0.0
  %v4412 = vmax.f32 %v4396, 0.0
  %v4413 = vmax.f32 %v4397, 0.0
  %v4414 = vmax.f32 %v4398, 0.0
  %v4415 = vmax.f32 %v4399, 0.0
  %v4416 = vmax.f32 %v4400, 0.0
  %v4417 = vmax.f32 %v4401, 0.0
  %v4418 = vmax.f32 %v4402, 0.0
  %v4419 = vmax.f32 %v4403, 0.0
  %v4420 = vsel %vm3572, %v4404, 0.0
  %v4421 = vsel %vm3572, %v4405, 0.0
  %v4422 = vadd.f32 %v4420, %v4421
  %v4423 = vsel %vm3572, %v4406, 0.0
  %v4424 = vadd.f32 %v4422, %v4423
  %v4425 = vsel %vm3572, %v4407, 0.0
  %v4426 = vadd.f32 %v4424, %v4425
  %v4427 = vsel %vm3572, %v4408, 0.0
  %v4428 = vadd.f32 %v4426, %v4427
  %v4429 = vsel %vm3572, %v4409, 0.0
  %v4430 = vadd.f32 %v4428, %v4429
  %v4431 = vsel %vm3572, %v4410, 0.0
  %v4432 = vadd.f32 %v4430, %v4431
  %v4433 = vsel %vm3572, %v4411, 0.0
  %v4434 = vadd.f32 %v4432, %v4433
  %v4435 = vsel %vm3572, %v4412, 0.0
  %v4436 = vsel %vm3572, %v4413, 0.0
  %v4437 = vadd.f32 %v4435, %v4436
  %v4438 = vsel %vm3572, %v4414, 0.0
  %v4439 = vadd.f32 %v4437, %v4438
  %v4440 = vsel %vm3572, %v4415, 0.0
  %v4441 = vadd.f32 %v4439, %v4440
  %v4442 = vsel %vm3572, %v4416, 0.0
  %v4443 = vadd.f32 %v4441, %v4442
  %v4444 = vsel %vm3572, %v4417, 0.0
  %v4445 = vadd.f32 %v4443, %v4444
  %v4446 = vsel %vm3572, %v4418, 0.0
  %v4447 = vadd.f32 %v4445, %v4446
  %v4448 = vsel %vm3572, %v4419, 0.0
  %v4449 = vadd.f32 %v4447, %v4448
  %v4450 = vsel %vm3572, %v4434, 0.0
  %v4451 = vrot.slane %v4450, 4
  %v4452 = vadd.f32 %v4450, %v4451
  %v4453 = vrot.slane %v4452, 2
  %v4454 = vadd.f32 %v4452, %v4453
  %v4455 = vrot.slane %v4454, 1
  %v4456 = vadd.f32 %v4454, %v4455
  %v4457 = vsel %vm3572, %v4449, 0.0
  %v4458 = vrot.slane %v4457, 4
  %v4459 = vadd.f32 %v4457, %v4458
  %v4460 = vrot.slane %v4459, 2
  %v4461 = vadd.f32 %v4459, %v4460
  %v4462 = vrot.slane %v4461, 1
  %v4463 = vadd.f32 %v4461, %v4462
  %v4464 = vmul.f32 %v4456, 0.015625
  %v4465 = vmul.f32 %v4463, 0.015625
  %v4466 = vld [vmem:[%s3] sm:$0x1]
  %v4468 = vperm.slane %v4466, 0
  %v4470 = vmul.f32 %v4464, %v4468
  %v4471 = vmul.f32 %v4465, %v4468
  %v4474 = vrot.slane %v4471, 7
  %vm4475 = vcmask 1041409
  %v4476 = vsel %vm4475, %v4474, %v4470
  %v4478 = vsel %vm3574, %v4476, 0.0
  %4479 = vadd.xlane.f32.xlu0 %v4478
  %v4480 = vpop.xlane.xlu0 %4479
  %v4481 = vld [vmem:[#allocation3] sm:$0x1]
  %v4483 = vperm.slane %v4481, 0
  %v4485 = vadd.f32 %v4480, %v4483
  %v4486 = vxor.u32 %v4485, 2147483648
  %v4487 = vmul.f32 %v4486, 1.442695
  %v4488 = vpow.pop %v4487
  %v4489 = vadd.f32 %v4488, 1.0
  %v4490 = vrcp.pop %v4489
  %v4491 = vmul.f32 %v4489, %v4490
  %v4492 = vsub.f32 1.0, %v4491
  %v4493 = vmul.f32 %v4490, %v4492
  %v4494 = vadd.f32 %v4490, %v4493
  %vm4495 = vweird.f32 %v4489
  %vm4496 = vweird.f32 %v4490
  %vm4497 = vmor %vm4495, %vm4496
  %v4498 = vsel %vm4497, %v4490, %v4494
  %v4499 = vand.u32 2147483647, %v4489
  %vm4500 = vcmp.eq.f32.partialorder %v4499, 8.507059e+37
  %v4501 = vand.u32 %v4489, 2147483648
  %v4502 = vor.u32 1.1754944e-38, %v4501
  %v4503 = vsel %vm4500, %v4502, %v4498
  %v4504 = vmul.f32 1.0, %v4503
  %v4506 = vrot.slane %v4504, 1
  %vm4508 = vcmask 0
  %4509 = vst.msk [vmem:[%s5] sm:$0x1] %vm4508, %v4504
  %4510 = vst.msk [vmem:[%s5 + $0x1] sm:$0x1] %vm4508, %v4506
  // Predicated region
  $region22: #{spoofnet_head.1} parent=0 // pred_check
    _
  $region23: #{spoofnet_head.1} parent=0 // pred_check_branch
    %4512 = sbr.rel (0) target = $region25
  $region24: #{spoofnet_head.1} parent=0 // pred_region
    _
  $region25: #{spoofnet_head.1} parent=0 // pred_fallthru
    _
  // Predicated region
  $region26: #{spoofnet_head.1} parent=0 // pred_check
    _
  $region27: #{spoofnet_head.1} parent=0 // pred_check_branch
    %4514 = sbr.rel (0) target = $region29
  $region28: #{spoofnet_head.1} parent=0 // pred_region
    _
  $region29: #{spoofnet_head.1} parent=0 // pred_fallthru
    _

</llo_original>
